<compile_context>
chip_gen: v7x
topology: tpu7x:2x2x1
jax: 0.10.0
libtpu: 0.0.40
codegen_flags: <defaults>
</compile_context>

<pallas_src>
import jax
import jax.numpy as jnp
from jax.experimental import pallas as pl
from jax.experimental.pallas import tpu as pltpu

K_PAD = 128            # padded layer-1 contraction dim (also holds gmf + const lanes)
H1, H2, H3 = 1024, 512, 256


def neumf_kernel(x_ref, w1_ref, b1_ref, w2_ref, b2_ref, w3_ref, b3_ref,
                 wfin_ref, wg_ref, out_ref):
    """One batch tile of the fused NeuMF tower.

    x_ref   : (TB, 128) f32  = [mlp_input(33) | gmf_out(nf) | zeros | 1.0]
    w1_ref  : (128, 1024) bf16, rows >= 33 zero so gmf/const lanes don't leak.
    wfin_ref: (1, 256) f32   = w4 @ wf_mlp  (folded: no activation between them)
    wg_ref  : (1, 128) f32   = wf_gmf scattered into the gmf lanes + total
              final bias on the constant-1 lane.
    out_ref : (1, TB) f32    lane-dense output tile.
    """
    x = x_ref[...]                       # f32 copy keeps gmf/bias lanes exact
    xb = x.astype(jnp.bfloat16)          # bf16 feed for the MXU

    # MLP tower: Linear -> GELU x3, bf16 MXU matmuls with f32 accumulation.
    # TODO(synk): nn.GELU defaults to exact erf; tanh approx deviates ~1e-3 but
    #             moves the transcendental onto the EUP (erf has no EUP path).
    # TODO(synk): Dropout(p=0.4) has no effect at inference; omitted (identity).
    h = jnp.dot(xb, w1_ref[...], preferred_element_type=jnp.float32) + b1_ref[...]
    h = jax.nn.gelu(h, approximate=True)
    h = jnp.dot(h.astype(jnp.bfloat16), w2_ref[...],
                preferred_element_type=jnp.float32) + b2_ref[...]
    h = jax.nn.gelu(h, approximate=True)
    h = jnp.dot(h.astype(jnp.bfloat16), w3_ref[...],
                preferred_element_type=jnp.float32) + b3_ref[...]
    h = jax.nn.gelu(h, approximate=True)                       # (TB, 256) f32

    # Final layer on cat([gmf_out, mlp_out]): w4 and final_layer are folded, so
    # the N=1 projections become VPU multiplies + lane reductions (the
    # constant-1 lane of x carries the folded bias via wg).
    proj = (jnp.sum(h * wfin_ref[...], axis=-1)
            + jnp.sum(x * wg_ref[...], axis=-1))               # (TB,)
    # (TB,) -> (1, TB) is a sublane->lane relayout on the XLU slot; it hides
    # under MXU/EUP time (re-check bundle if XLU ever becomes critical).
    out_ref[...] = proj.reshape(1, -1)


def init_params(key, n_users, n_items, n_genders, n_authors, n_factors=8):
    ks = jax.random.split(key, 16)
    u = lambda k, s, lo, hi: jax.random.uniform(k, s, jnp.float32, lo, hi)
    p = {}
    p['user_gmf'] = u(ks[0], (n_users, n_factors), 0.0, 0.05)
    p['item_gmf'] = u(ks[1], (n_items, n_factors), 0.0, 0.05)
    p['user_mlp'] = u(ks[2], (n_users, n_factors), 0.0, 0.05)
    p['item_mlp'] = u(ks[3], (n_items, n_factors), 0.0, 0.05)
    p['item_gender_emb'] = jax.random.normal(ks[4], (n_genders, n_factors), jnp.float32)
    p['item_authors_emb'] = jax.random.normal(ks[5], (n_authors, n_factors), jnp.float32)

    input_dim = n_factors * 4 + 1  # 33

    def linear(kw, kb, fan_in, fan_out):
        bound = 1.0 / jnp.sqrt(fan_in)
        w = u(kw, (fan_in, fan_out), -bound, bound)   # stored [in, out]
        b = u(kb, (1, fan_out), -bound, bound)
        return w, b

    p['w1'], p['b1'] = linear(ks[6], ks[7], input_dim, H1)
    p['w2'], p['b2'] = linear(ks[8], ks[9], H1, H2)
    p['w3'], p['b3'] = linear(ks[10], ks[11], H2, H3)
    p['w4'], p['b4'] = linear(ks[12], ks[13], H3, 32)
    wf, bf = linear(ks[14], ks[15], n_factors + 32, 1)   # [nf+32, 1]
    p['wf_gmf'] = wf[:n_factors, :]                      # [nf, 1]
    p['wf_mlp'] = wf[n_factors:, :]                      # [32, 1]
    p['bf'] = bf                                         # [1, 1]
    return p


def pack_kernel_params(p):
    """Offline packing: K-pad w1, fold w4 into the final projection, bf16 cast.

    Call once; pass the result to neumf_forward (hoisted out of the hot path).
    """
    n_factors = p['user_gmf'].shape[1]
    in_dim = p['w1'].shape[0]                            # 4*nf + 1
    assert in_dim + n_factors < K_PAD                    # gmf lanes + const lane fit

    w1_pad = jnp.zeros((K_PAD, H1), jnp.float32).at[:in_dim, :].set(p['w1'])

    wfin = (p['w4'] @ p['wf_mlp']).T                     # (1, 256) f32
    b_total = (p['b4'] @ p['wf_mlp'] + p['bf'])[0, 0]    # scalar

    wg = jnp.zeros((1, K_PAD), jnp.float32)
    wg = wg.at[0, in_dim:in_dim + n_factors].set(p['wf_gmf'][:, 0])
    wg = wg.at[0, K_PAD - 1].set(b_total)                # bias rides the const-1 lane

    return dict(
        w1=w1_pad.astype(jnp.bfloat16), b1=p['b1'],
        w2=p['w2'].astype(jnp.bfloat16), b2=p['b2'],
        w3=p['w3'].astype(jnp.bfloat16), b3=p['b3'],
        wfin=wfin, wg=wg,
    )


def _batch_tiling(B, tb):
    """Pick a 128-multiple batch tile; >=2 balanced tiles when possible (v7x)."""
    round_up = lambda a, m: (a + m - 1) // m * m
    b128 = round_up(max(B, 1), 128)
    if b128 >= 256:
        TB = min(tb, round_up(pl.cdiv(b128, 2), 128))
    else:
        TB = b128
    B_pad = round_up(b128, TB)
    return TB, B_pad


def neumf_forward(data, params, kp, tb=1024):
    # data: int32 [B, 5] = [item, user, author, gender, ratingsCount]
    users, items = data[:, 1], data[:, 0]
    genders, authors = data[:, 3], data[:, 2]
    ratings = data[:, 4].astype(jnp.float32)

    gmf_out = params['user_gmf'][users] * params['item_gmf'][items]      # [B, nf]
    mlp_input = jnp.concatenate(
        [params['user_mlp'][users], params['item_mlp'][items],
         params['item_gender_emb'][genders], params['item_authors_emb'][authors],
         ratings[:, None]], axis=1)                                      # [B, 4nf+1]

    n_factors = params['user_gmf'].shape[1]
    in_dim = mlp_input.shape[1]
    B = data.shape[0]

    TB, B_pad = _batch_tiling(B, tb)
    num_tiles = B_pad // TB

    # Pack [mlp_input | gmf_out | zeros | 1.0] into one lane-aligned slab so a
    # single DMA feeds both the MLP tower and the GMF/bias projection.
    x = jnp.zeros((B_pad, K_PAD), jnp.float32)
    x = x.at[:B, :in_dim].set(mlp_input)
    x = x.at[:B, in_dim:in_dim + n_factors].set(gmf_out)
    x = x.at[:, K_PAD - 1].set(1.0)

    full = lambda i: (0, 0)                  # weights: resident, DMA'd once
    grid_spec = pltpu.PrefetchScalarGridSpec(
        num_scalar_prefetch=0,
        grid=(num_tiles,),
        in_specs=[
            pl.BlockSpec((TB, K_PAD), lambda i: (i, 0)),   # packed activations
            pl.BlockSpec((K_PAD, H1), full), pl.BlockSpec((1, H1), full),
            pl.BlockSpec((H1, H2), full),    pl.BlockSpec((1, H2), full),
            pl.BlockSpec((H2, H3), full),    pl.BlockSpec((1, H3), full),
            pl.BlockSpec((1, H3), full),                   # wfin
            pl.BlockSpec((1, K_PAD), full),                # wg
        ],
        # Lane-dense, well-formed output: (1, TB) blocks over a (1, B_pad)
        # array (sublane dim == full dim, lane dim % 128 == 0).
        out_specs=pl.BlockSpec((1, TB), lambda i: (0, i)),
    )

    flops = 2 * B_pad * (K_PAD * H1 + H1 * H2 + H2 * H3) + 2 * B_pad * (H3 + K_PAD)
    bytes_accessed = (4 * B_pad * K_PAD                       # activations in
                      + 2 * (K_PAD * H1 + H1 * H2 + H2 * H3)  # bf16 weights
                      + 4 * (H1 + H2 + H3 + H3 + K_PAD)       # biases / wfin / wg
                      + 4 * B_pad)                            # output

    out = pl.pallas_call(
        neumf_kernel,
        out_shape=jax.ShapeDtypeStruct((1, B_pad), jnp.float32),
        grid_spec=grid_spec,
        compiler_params=pltpu.CompilerParams(
            dimension_semantics=("parallel",),
            vmem_limit_bytes=32 * 1024 * 1024),   # headroom even on v7x (64 MiB phys)
        cost_estimate=pl.CostEstimate(
            flops=flops,
            transcendentals=B_pad * (H1 + H2 + H3),   # one tanh per GELU element
            bytes_accessed=bytes_accessed),
    )(x, kp['w1'], kp['b1'], kp['w2'], kp['b2'], kp['w3'], kp['b3'],
      kp['wfin'], kp['wg'])

    return out.reshape(-1)[:B]                                # squeeze(1) -> [B]


def neumf_reference(data, params):
    """Pure-JAX f32 reference matching the PyTorch forward (exact-erf GELU)."""
    users, items = data[:, 1], data[:, 0]
    genders, authors = data[:, 3], data[:, 2]
    ratings = data[:, 4].astype(jnp.float32)
    gmf_out = params['user_gmf'][users] * params['item_gmf'][items]
    mlp_input = jnp.concatenate(
        [params['user_mlp'][users], params['item_mlp'][items],
         params['item_gender_emb'][genders], params['item_authors_emb'][authors],
         ratings[:, None]], axis=1)
    h = jax.nn.gelu(mlp_input @ params['w1'] + params['b1'], approximate=False)
    h = jax.nn.gelu(h @ params['w2'] + params['b2'], approximate=False)
    h = jax.nn.gelu(h @ params['w3'] + params['b3'], approximate=False)
    mlp_out = h @ params['w4'] + params['b4']
    out = gmf_out @ params['wf_gmf'] + mlp_out @ params['wf_mlp'] + params['bf']
    return out[:, 0]


if __name__ == "__main__":
    n_users, n_items, n_genders, n_authors, n_factors = 50, 60, 3, 20, 8

    key = jax.random.PRNGKey(0)
    kparam, kdata = jax.random.split(key)
    params = init_params(kparam, n_users, n_items, n_genders, n_authors, n_factors)
    kp = pack_kernel_params(params)          # pack once, outside the forward

    def make_data(k, B):
        k0, k1, k2, k3, k4 = jax.random.split(k, 5)
        return jnp.stack([
            jax.random.randint(k0, (B,), 0, n_items),    # items   (col 0)
            jax.random.randint(k1, (B,), 0, n_users),    # users   (col 1)
            jax.random.randint(k2, (B,), 0, n_authors),  # authors (col 2)
            jax.random.randint(k3, (B,), 0, n_genders),  # genders (col 3)
            jax.random.randint(k4, (B,), 0, 100),        # ratingsCount (col 4)
        ], axis=1).astype(jnp.int32)                     # [B, 5]

    kd_small, kd_multi = jax.random.split(kdata)
    # B=8 -> single tile; B=384 -> 2 batch tiles (exercises the multi-tile
    # output layout and v7x-style >=2 grid steps).
    for B, kd in ((8, kd_small), (384, kd_multi)):
        data = make_data(kd, B)
        out = neumf_forward(data, params, kp)
        jax.block_until_ready(out)
        assert out.shape == (B,)
        assert bool(jnp.all(jnp.isfinite(out)))

        ref = neumf_reference(data, params)
        max_diff = float(jnp.max(jnp.abs(out - ref)))
        tol = 3e-2 * (1.0 + float(jnp.max(jnp.abs(ref))))  # bf16 MXU + tanh GELU
        assert max_diff < tol, (B, max_diff, tol)

    print("KERNEL_OK")
</pallas_src>

<mosaic_0001>
module attributes {stable_mosaic.version = 11 : i64} {
  func.func @neumf_kernel(%arg0: i32, %arg1: memref<128x128xf32, #tpu.memory_space<vmem>>, %arg2: memref<128x1024xbf16, #tpu.memory_space<vmem>>, %arg3: memref<1x1024xf32, #tpu.memory_space<vmem>>, %arg4: memref<1024x512xbf16, #tpu.memory_space<vmem>>, %arg5: memref<1x512xf32, #tpu.memory_space<vmem>>, %arg6: memref<512x256xbf16, #tpu.memory_space<vmem>>, %arg7: memref<1x256xf32, #tpu.memory_space<vmem>>, %arg8: memref<1x256xf32, #tpu.memory_space<vmem>>, %arg9: memref<1x128xf32, #tpu.memory_space<vmem>>, %arg10: memref<1x128xf32, #tpu.memory_space<vmem>>) attributes {dimension_semantics = [#tpu.dimension_semantics<parallel>], iteration_bounds = array<i64: 1>, scalar_prefetch = 0 : i64, scratch_operands = 0 : i64, tpu.core_type = #tpu.core_type<tc>, window_params = [{transform_indices = @transform_0, window_bounds = array<i64: 128, 128>}, {pipeline_mode = #tpu.pipeline_mode<synchronous>, transform_indices = @transform_1, window_bounds = array<i64: 128, 1024>}, {pipeline_mode = #tpu.pipeline_mode<synchronous>, transform_indices = @transform_2, window_bounds = array<i64: 1, 1024>}, {pipeline_mode = #tpu.pipeline_mode<synchronous>, transform_indices = @transform_3, window_bounds = array<i64: 1024, 512>}, {pipeline_mode = #tpu.pipeline_mode<synchronous>, transform_indices = @transform_4, window_bounds = array<i64: 1, 512>}, {pipeline_mode = #tpu.pipeline_mode<synchronous>, transform_indices = @transform_5, window_bounds = array<i64: 512, 256>}, {pipeline_mode = #tpu.pipeline_mode<synchronous>, transform_indices = @transform_6, window_bounds = array<i64: 1, 256>}, {pipeline_mode = #tpu.pipeline_mode<synchronous>, transform_indices = @transform_7, window_bounds = array<i64: 1, 256>}, {pipeline_mode = #tpu.pipeline_mode<synchronous>, transform_indices = @transform_8, window_bounds = array<i64: 1, 128>}, {transform_indices = @transform_9, window_bounds = array<i64: 1, 128>}]} {
    %c0 = arith.constant 0 : index
    %c0_0 = arith.constant 0 : index
    %0 = vector.load %arg1[%c0, %c0_0] : memref<128x128xf32, #tpu.memory_space<vmem>>, vector<128x128xf32>
    %1 = arith.truncf %0 : vector<128x128xf32> to vector<128x128xbf16>
    %c0_1 = arith.constant 0 : index
    %c0_2 = arith.constant 0 : index
    %2 = vector.load %arg2[%c0_1, %c0_2] : memref<128x1024xbf16, #tpu.memory_space<vmem>>, vector<128x1024xbf16>
    %cst = arith.constant dense<0.000000e+00> : vector<128x1024xf32>
    %3 = tpu.matmul %1, %2, %cst {dimension_numbers = #tpu.dot_dimension_numbers<[1], [0], [0], [1], [0, 0, 1, 1], [], []>} : vector<128x128xbf16>, vector<128x1024xbf16>, vector<128x1024xf32> -> vector<128x1024xf32>
    %c0_3 = arith.constant 0 : index
    %c0_4 = arith.constant 0 : index
    %4 = vector.load %arg3[%c0_3, %c0_4] : memref<1x1024xf32, #tpu.memory_space<vmem>>, vector<1x1024xf32>
    %5 = vector.broadcast %4 : vector<1x1024xf32> to vector<128x1024xf32>
    %6 = arith.addf %3, %5 : vector<128x1024xf32>
    %7 = arith.mulf %6, %6 : vector<128x1024xf32>
    %8 = arith.mulf %6, %7 : vector<128x1024xf32>
    %cst_5 = arith.constant 4.471500e-02 : f32
    %9 = vector.broadcast %cst_5 : f32 to vector<128x1024xf32>
    %10 = arith.mulf %9, %8 : vector<128x1024xf32>
    %11 = arith.addf %6, %10 : vector<128x1024xf32>
    %cst_6 = arith.constant 0.797884583 : f32
    %12 = vector.broadcast %cst_6 : f32 to vector<128x1024xf32>
    %13 = arith.mulf %12, %11 : vector<128x1024xf32>
    %14 = math.tanh %13 : vector<128x1024xf32>
    %cst_7 = arith.constant 1.000000e+00 : f32
    %15 = vector.broadcast %cst_7 : f32 to vector<128x1024xf32>
    %16 = arith.addf %15, %14 : vector<128x1024xf32>
    %cst_8 = arith.constant 5.000000e-01 : f32
    %17 = vector.broadcast %cst_8 : f32 to vector<128x1024xf32>
    %18 = arith.mulf %17, %16 : vector<128x1024xf32>
    %19 = arith.mulf %6, %18 : vector<128x1024xf32>
    %20 = arith.truncf %19 : vector<128x1024xf32> to vector<128x1024xbf16>
    %c0_9 = arith.constant 0 : index
    %c0_10 = arith.constant 0 : index
    %21 = vector.load %arg4[%c0_9, %c0_10] : memref<1024x512xbf16, #tpu.memory_space<vmem>>, vector<1024x512xbf16>
    %cst_11 = arith.constant dense<0.000000e+00> : vector<128x512xf32>
    %22 = tpu.matmul %20, %21, %cst_11 {dimension_numbers = #tpu.dot_dimension_numbers<[1], [0], [0], [1], [0, 0, 1, 1], [], []>} : vector<128x1024xbf16>, vector<1024x512xbf16>, vector<128x512xf32> -> vector<128x512xf32>
    %c0_12 = arith.constant 0 : index
    %c0_13 = arith.constant 0 : index
    %23 = vector.load %arg5[%c0_12, %c0_13] : memref<1x512xf32, #tpu.memory_space<vmem>>, vector<1x512xf32>
    %24 = vector.broadcast %23 : vector<1x512xf32> to vector<128x512xf32>
    %25 = arith.addf %22, %24 : vector<128x512xf32>
    %26 = arith.mulf %25, %25 : vector<128x512xf32>
    %27 = arith.mulf %25, %26 : vector<128x512xf32>
    %cst_14 = arith.constant 4.471500e-02 : f32
    %28 = vector.broadcast %cst_14 : f32 to vector<128x512xf32>
    %29 = arith.mulf %28, %27 : vector<128x512xf32>
    %30 = arith.addf %25, %29 : vector<128x512xf32>
    %cst_15 = arith.constant 0.797884583 : f32
    %31 = vector.broadcast %cst_15 : f32 to vector<128x512xf32>
    %32 = arith.mulf %31, %30 : vector<128x512xf32>
    %33 = math.tanh %32 : vector<128x512xf32>
    %cst_16 = arith.constant 1.000000e+00 : f32
    %34 = vector.broadcast %cst_16 : f32 to vector<128x512xf32>
    %35 = arith.addf %34, %33 : vector<128x512xf32>
    %cst_17 = arith.constant 5.000000e-01 : f32
    %36 = vector.broadcast %cst_17 : f32 to vector<128x512xf32>
    %37 = arith.mulf %36, %35 : vector<128x512xf32>
    %38 = arith.mulf %25, %37 : vector<128x512xf32>
    %39 = arith.truncf %38 : vector<128x512xf32> to vector<128x512xbf16>
    %c0_18 = arith.constant 0 : index
    %c0_19 = arith.constant 0 : index
    %40 = vector.load %arg6[%c0_18, %c0_19] : memref<512x256xbf16, #tpu.memory_space<vmem>>, vector<512x256xbf16>
    %cst_20 = arith.constant dense<0.000000e+00> : vector<128x256xf32>
    %41 = tpu.matmul %39, %40, %cst_20 {dimension_numbers = #tpu.dot_dimension_numbers<[1], [0], [0], [1], [0, 0, 1, 1], [], []>} : vector<128x512xbf16>, vector<512x256xbf16>, vector<128x256xf32> -> vector<128x256xf32>
    %c0_21 = arith.constant 0 : index
    %c0_22 = arith.constant 0 : index
    %42 = vector.load %arg7[%c0_21, %c0_22] : memref<1x256xf32, #tpu.memory_space<vmem>>, vector<1x256xf32>
    %43 = vector.broadcast %42 : vector<1x256xf32> to vector<128x256xf32>
    %44 = arith.addf %41, %43 : vector<128x256xf32>
    %45 = arith.mulf %44, %44 : vector<128x256xf32>
    %46 = arith.mulf %44, %45 : vector<128x256xf32>
    %cst_23 = arith.constant 4.471500e-02 : f32
    %47 = vector.broadcast %cst_23 : f32 to vector<128x256xf32>
    %48 = arith.mulf %47, %46 : vector<128x256xf32>
    %49 = arith.addf %44, %48 : vector<128x256xf32>
    %cst_24 = arith.constant 0.797884583 : f32
    %50 = vector.broadcast %cst_24 : f32 to vector<128x256xf32>
    %51 = arith.mulf %50, %49 : vector<128x256xf32>
    %52 = math.tanh %51 : vector<128x256xf32>
    %cst_25 = arith.constant 1.000000e+00 : f32
    %53 = vector.broadcast %cst_25 : f32 to vector<128x256xf32>
    %54 = arith.addf %53, %52 : vector<128x256xf32>
    %cst_26 = arith.constant 5.000000e-01 : f32
    %55 = vector.broadcast %cst_26 : f32 to vector<128x256xf32>
    %56 = arith.mulf %55, %54 : vector<128x256xf32>
    %57 = arith.mulf %44, %56 : vector<128x256xf32>
    %c0_27 = arith.constant 0 : index
    %c0_28 = arith.constant 0 : index
    %58 = vector.load %arg8[%c0_27, %c0_28] : memref<1x256xf32, #tpu.memory_space<vmem>>, vector<1x256xf32>
    %59 = vector.broadcast %58 : vector<1x256xf32> to vector<128x256xf32>
    %60 = arith.mulf %57, %59 : vector<128x256xf32>
    %cst_29 = arith.constant dense<0.000000e+00> : vector<128xf32>
    %61 = vector.multi_reduction <add>, %60, %cst_29 [1] : vector<128x256xf32> to vector<128xf32>
    %c0_30 = arith.constant 0 : index
    %c0_31 = arith.constant 0 : index
    %62 = vector.load %arg9[%c0_30, %c0_31] : memref<1x128xf32, #tpu.memory_space<vmem>>, vector<1x128xf32>
    %63 = vector.broadcast %62 : vector<1x128xf32> to vector<128x128xf32>
    %64 = arith.mulf %0, %63 : vector<128x128xf32>
    %cst_32 = arith.constant dense<0.000000e+00> : vector<128xf32>
    %65 = vector.multi_reduction <add>, %64, %cst_32 [1] : vector<128x128xf32> to vector<128xf32>
    %66 = arith.addf %61, %65 : vector<128xf32>
    %67 = vector.shape_cast %66 : vector<128xf32> to vector<1x128xf32>
    %c0_33 = arith.constant 0 : index
    %c0_34 = arith.constant 0 : index
    %68 = vector.load %arg10[%c0_33, %c0_34] : memref<1x128xf32, #tpu.memory_space<vmem>>, vector<1x128xf32>
    tpu.vector_store %arg10[%c0_33, %c0_34], %67 {strides = array<i32>} : memref<1x128xf32, #tpu.memory_space<vmem>>, vector<1x128xf32>,
    return
  }
  func.func @transform_0(%arg0: i32) -> (i32, i32) {
    %c0_i32 = arith.constant 0 : i32
    %c0_i32_0 = arith.constant 0 : i32
    return %arg0, %c0_i32 : i32, i32
  }
  func.func @transform_1(%arg0: i32) -> (i32, i32) {
    %c0_i32 = arith.constant 0 : i32
    %c0_i32_0 = arith.constant 0 : i32
    %c0_i32_1 = arith.constant 0 : i32
    return %c0_i32, %c0_i32_0 : i32, i32
  }
  func.func @transform_2(%arg0: i32) -> (i32, i32) {
    %c0_i32 = arith.constant 0 : i32
    %c0_i32_0 = arith.constant 0 : i32
    %c0_i32_1 = arith.constant 0 : i32
    return %c0_i32, %c0_i32_0 : i32, i32
  }
  func.func @transform_3(%arg0: i32) -> (i32, i32) {
    %c0_i32 = arith.constant 0 : i32
    %c0_i32_0 = arith.constant 0 : i32
    %c0_i32_1 = arith.constant 0 : i32
    return %c0_i32, %c0_i32_0 : i32, i32
  }
  func.func @transform_4(%arg0: i32) -> (i32, i32) {
    %c0_i32 = arith.constant 0 : i32
    %c0_i32_0 = arith.constant 0 : i32
    %c0_i32_1 = arith.constant 0 : i32
    return %c0_i32, %c0_i32_0 : i32, i32
  }
  func.func @transform_5(%arg0: i32) -> (i32, i32) {
    %c0_i32 = arith.constant 0 : i32
    %c0_i32_0 = arith.constant 0 : i32
    %c0_i32_1 = arith.constant 0 : i32
    return %c0_i32, %c0_i32_0 : i32, i32
  }
  func.func @transform_6(%arg0: i32) -> (i32, i32) {
    %c0_i32 = arith.constant 0 : i32
    %c0_i32_0 = arith.constant 0 : i32
    %c0_i32_1 = arith.constant 0 : i32
    return %c0_i32, %c0_i32_0 : i32, i32
  }
  func.func @transform_7(%arg0: i32) -> (i32, i32) {
    %c0_i32 = arith.constant 0 : i32
    %c0_i32_0 = arith.constant 0 : i32
    %c0_i32_1 = arith.constant 0 : i32
    return %c0_i32, %c0_i32_0 : i32, i32
  }
  func.func @transform_8(%arg0: i32) -> (i32, i32) {
    %c0_i32 = arith.constant 0 : i32
    %c0_i32_0 = arith.constant 0 : i32
    %c0_i32_1 = arith.constant 0 : i32
    return %c0_i32, %c0_i32_0 : i32, i32
  }
  func.func @transform_9(%arg0: i32) -> (i32, i32) {
    %c0_i32 = arith.constant 0 : i32
    %c0_i32_0 = arith.constant 0 : i32
    return %c0_i32, %arg0 : i32, i32
  }
}

</mosaic_0001>

<llo_original>
// kernel: tpu_custom_call.1
$region0: #{tpu_custom_call.1}
  #allocation0 [shape = 'u32[]', space=smem, size = 0x4, offset = 0x4, fixed_abs, tag = 'smem constant byte address 0x4 - core index']
  #allocation1 [shape = 'u32[144,128]{1,0:T(1,128)}', space=vmem, size = 0x12000, scoped, tag = 'internal scratch']
  %s0 = inlined_call_operand.hbm [shape: f32[128,128], index: 0, kind: input, shape index: {}]
  %s1 = inlined_call_operand.hbm [shape: bf16[128,1024], index: 1, kind: input, shape index: {}]
  %s2 = inlined_call_operand.hbm [shape: f32[1,1024], index: 2, kind: input, shape index: {}]
  %s3 = inlined_call_operand.hbm [shape: bf16[1024,512], index: 3, kind: input, shape index: {}]
  %s4 = inlined_call_operand.vmem [shape: f32[1,512], index: 4, kind: input, shape index: {}]
  %s5 = inlined_call_operand.hbm [shape: bf16[512,256], index: 5, kind: input, shape index: {}]
  %s6 = inlined_call_operand.vmem [shape: f32[1,256], index: 6, kind: input, shape index: {}]
  %s7 = inlined_call_operand.vmem [shape: f32[1,256], index: 7, kind: input, shape index: {}]
  %s8 = inlined_call_operand.vmem [shape: f32[1,128], index: 8, kind: input, shape index: {}]
  %s9 = inlined_call_operand.hbm [shape: f32[1,128], index: 9, kind: output, shape index: {}]
  %s10 = sld [smem:[#allocation0]]
  $region66: #{tpu_custom_call.1} parent=0
    _
  %s12 = ssub.s32 1, %s10
  %s13 = scalar_select 0, %s12, %s10
  $region1: #{tpu_custom_call.1} parent=0
    #allocation2 [shape = 'u8[65536]{0}', space=vmem, size = 0x10000, scoped, tag = 'input window, operand 0, single buffered']
    #allocation3 [shape = 's32[1]{0}', space=sflag, size = 0x4, scoped, tag = 'scoped memory for tpu_custom_call.1']
    #allocation4 [shape = 's32[1]{0}', space=sflag, size = 0x4, scoped, tag = 'scoped memory for tpu_custom_call.1']
    #allocation5 [shape = 'u8[262144]{0}', space=vmem, size = 0x40000, scoped, tag = 'input window, operand 1, single buffered']
    #allocation6 [shape = 's32[1]{0}', space=sflag, size = 0x4, scoped, tag = 'scoped memory for tpu_custom_call.1']
    #allocation7 [shape = 'u8[4096]{0}', space=vmem, size = 0x1000, scoped, tag = 'input window, operand 2, single buffered']
    #allocation8 [shape = 'u8[1048576]{0}', space=vmem, size = 0x100000, scoped, tag = 'input window, operand 3, single buffered']
    #allocation9 [shape = 's32[1]{0}', space=sflag, size = 0x4, scoped, tag = 'scoped memory for tpu_custom_call.1']
    #allocation10 [shape = 'u8[262144]{0}', space=vmem, size = 0x40000, scoped, tag = 'input window, operand 5, single buffered']
    #allocation11 [shape = 'u8[512]{0}', space=vmem, size = 0x400, scoped, tag = 'output window, operand 0, single buffered']
    %14 = vsyncpa [#allocation3], 0
    %15 = vsyncpa [#allocation6], 0
    %16 = vsyncpa [#allocation9], 0
    %17 = vsyncpa [#allocation4], 0
    // Predicated region
    $region2: #{tpu_custom_call.1} parent=1 // pred_check
      _
    $region3: #{tpu_custom_call.1} parent=1 // pred_check_branch
      %19 = sbr.rel (0) target = $region5
    $region4: #{tpu_custom_call.1} parent=1 // pred_region
      %s21 = ssub.s32 2048, 2048
      %22 = vsyncadd [#allocation3], %s21
      %s23 = sshll.u32 [#allocation2], 4
      %s24 = int_to_ptr.vmem [resolvable:$true] %s23
      %29 = dma.hbm_to_vmem [thread:$0]  %s0, 2048, %s24, [#allocation3], 128, 128, 8
    $region5: #{tpu_custom_call.1} parent=1 // pred_fallthru
      _
    // Predicated region
    $region6: #{tpu_custom_call.1} parent=1 // pred_check
      _
    $region7: #{tpu_custom_call.1} parent=1 // pred_check_branch
      %31 = sbr.rel (0) target = $region9
    $region8: #{tpu_custom_call.1} parent=1 // pred_region
      %s33 = ssub.s32 8192, 8192
      %34 = vsyncadd [#allocation6], %s33
      %s35 = sshll.u32 [#allocation5], 4
      %s36 = int_to_ptr.vmem [resolvable:$true] %s35
      %41 = dma.hbm_to_vmem [thread:$0]  %s1, 8192, %s36, [#allocation6], 512, 512, 32
    $region9: #{tpu_custom_call.1} parent=1 // pred_fallthru
      _
    // Predicated region
    $region10: #{tpu_custom_call.1} parent=1 // pred_check
      _
    $region11: #{tpu_custom_call.1} parent=1 // pred_check_branch
      %43 = sbr.rel (0) target = $region13
    $region12: #{tpu_custom_call.1} parent=1 // pred_region
      %s45 = ssub.s32 128, 128
      %46 = vsyncadd [#allocation6], %s45
      %s48 = sshll.u32 [#allocation7], 4
      %s49 = int_to_ptr.vmem [resolvable:$true] %s48
      %51 = dma.hbm_to_vmem [thread:$0]  %s2, 128, %s49, [#allocation6]
    $region13: #{tpu_custom_call.1} parent=1 // pred_fallthru
      _
    // Predicated region
    $region14: #{tpu_custom_call.1} parent=1 // pred_check
      _
    $region15: #{tpu_custom_call.1} parent=1 // pred_check_branch
      %53 = sbr.rel (0) target = $region17
    $region16: #{tpu_custom_call.1} parent=1 // pred_region
      %s55 = ssub.s32 32768, 32768
      %56 = vsyncadd [#allocation9], %s55
      %s57 = sshll.u32 [#allocation8], 4
      %s58 = int_to_ptr.vmem [resolvable:$true] %s57
      %63 = dma.hbm_to_vmem [thread:$0]  %s3, 32768, %s58, [#allocation9], 256, 256, 16
    $region17: #{tpu_custom_call.1} parent=1 // pred_fallthru
      _
    // Predicated region
    $region18: #{tpu_custom_call.1} parent=1 // pred_check
      _
    $region19: #{tpu_custom_call.1} parent=1 // pred_check_branch
      %65 = sbr.rel (0) target = $region21
    $region20: #{tpu_custom_call.1} parent=1 // pred_region
      _
    $region21: #{tpu_custom_call.1} parent=1 // pred_fallthru
      _
    // Predicated region
    $region22: #{tpu_custom_call.1} parent=1 // pred_check
      _
    $region23: #{tpu_custom_call.1} parent=1 // pred_check_branch
      %67 = sbr.rel (0) target = $region25
    $region24: #{tpu_custom_call.1} parent=1 // pred_region
      %s69 = ssub.s32 8192, 8192
      %70 = vsyncadd [#allocation9], %s69
      %s71 = sshll.u32 [#allocation10], 4
      %s72 = int_to_ptr.vmem [resolvable:$true] %s71
      %77 = dma.hbm_to_vmem [thread:$0]  %s5, 8192, %s72, [#allocation9], 128, 128, 8
    $region25: #{tpu_custom_call.1} parent=1 // pred_fallthru
      _
    // Predicated region
    $region26: #{tpu_custom_call.1} parent=1 // pred_check
      _
    $region27: #{tpu_custom_call.1} parent=1 // pred_check_branch
      %79 = sbr.rel (0) target = $region29
    $region28: #{tpu_custom_call.1} parent=1 // pred_region
      _
    $region29: #{tpu_custom_call.1} parent=1 // pred_fallthru
      _
    // Predicated region
    $region30: #{tpu_custom_call.1} parent=1 // pred_check
      _
    $region31: #{tpu_custom_call.1} parent=1 // pred_check_branch
      %81 = sbr.rel (0) target = $region33
    $region32: #{tpu_custom_call.1} parent=1 // pred_region
      _
    $region33: #{tpu_custom_call.1} parent=1 // pred_fallthru
      _
    // Predicated region
    $region34: #{tpu_custom_call.1} parent=1 // pred_check
      _
    $region35: #{tpu_custom_call.1} parent=1 // pred_check_branch
      %83 = sbr.rel (0) target = $region37
    $region36: #{tpu_custom_call.1} parent=1 // pred_region
      _
    $region37: #{tpu_custom_call.1} parent=1 // pred_fallthru
      _
    // Predicated region
    $region38: #{tpu_custom_call.1} parent=1 // pred_check
      _
    $region39: #{tpu_custom_call.1} parent=1 // pred_check_branch
      %85 = sbr.rel (0) target = $region41
    $region40: #{tpu_custom_call.1} parent=1 // pred_region
      %86 = dma.done [#allocation3], 2048
    $region41: #{tpu_custom_call.1} parent=1 // pred_fallthru
      _
    // Predicated region
    $region42: #{tpu_custom_call.1} parent=1 // pred_check
      _
    $region43: #{tpu_custom_call.1} parent=1 // pred_check_branch
      %88 = sbr.rel (0) target = $region45
    $region44: #{tpu_custom_call.1} parent=1 // pred_region
      %89 = dma.done [#allocation6], 8192
    $region45: #{tpu_custom_call.1} parent=1 // pred_fallthru
      _
    // Predicated region
    $region46: #{tpu_custom_call.1} parent=1 // pred_check
      _
    $region47: #{tpu_custom_call.1} parent=1 // pred_check_branch
      %91 = sbr.rel (0) target = $region49
    $region48: #{tpu_custom_call.1} parent=1 // pred_region
      %92 = dma.done [#allocation6], 128
    $region49: #{tpu_custom_call.1} parent=1 // pred_fallthru
      _
    // Predicated region
    $region50: #{tpu_custom_call.1} parent=1 // pred_check
      _
    $region51: #{tpu_custom_call.1} parent=1 // pred_check_branch
      %94 = sbr.rel (0) target = $region53
    $region52: #{tpu_custom_call.1} parent=1 // pred_region
      %95 = dma.done [#allocation9], 32768
    $region53: #{tpu_custom_call.1} parent=1 // pred_fallthru
      _
    // Predicated region
    $region54: #{tpu_custom_call.1} parent=1 // pred_check
      _
    $region55: #{tpu_custom_call.1} parent=1 // pred_check_branch
      %97 = sbr.rel (0) target = $region57
    $region56: #{tpu_custom_call.1} parent=1 // pred_region
      %98 = dma.done [#allocation9], 8192
    $region57: #{tpu_custom_call.1} parent=1 // pred_fallthru
      _
    %v100 = vld [vmem:[#allocation2] sm:$0xff]
    %v101 = vld [vmem:[#allocation2 + $0x8] sm:$0xff]
    %v102 = vld [vmem:[#allocation2 + $0x10] sm:$0xff]
    %v103 = vld [vmem:[#allocation2 + $0x18] sm:$0xff]
    %v104 = vld [vmem:[#allocation2 + $0x20] sm:$0xff]
    %v105 = vld [vmem:[#allocation2 + $0x28] sm:$0xff]
    %v106 = vld [vmem:[#allocation2 + $0x30] sm:$0xff]
    %v107 = vld [vmem:[#allocation2 + $0x38] sm:$0xff]
    %v108 = vld [vmem:[#allocation2 + $0x40] sm:$0xff]
    %v109 = vld [vmem:[#allocation2 + $0x48] sm:$0xff]
    %v110 = vld [vmem:[#allocation2 + $0x50] sm:$0xff]
    %v111 = vld [vmem:[#allocation2 + $0x58] sm:$0xff]
    %v112 = vld [vmem:[#allocation2 + $0x60] sm:$0xff]
    %v113 = vld [vmem:[#allocation2 + $0x68] sm:$0xff]
    %v114 = vld [vmem:[#allocation2 + $0x70] sm:$0xff]
    %v115 = vld [vmem:[#allocation2 + $0x78] sm:$0xff]
    %v116 = vpack.c.bf16 %v101, %v100
    %v117 = vpack.c.bf16 %v103, %v102
    %v118 = vpack.c.bf16 %v105, %v104
    %v119 = vpack.c.bf16 %v107, %v106
    %v120 = vpack.c.bf16 %v109, %v108
    %v121 = vpack.c.bf16 %v111, %v110
    %v122 = vpack.c.bf16 %v113, %v112
    %v123 = vpack.c.bf16 %v115, %v114
    %v124 = vld [vmem:[#allocation5] sm:$0xff]
    %v125 = vld [vmem:[#allocation5 + $0x8] sm:$0xff]
    %v126 = vld [vmem:[#allocation5 + $0x10] sm:$0xff]
    %v127 = vld [vmem:[#allocation5 + $0x18] sm:$0xff]
    %v128 = vld [vmem:[#allocation5 + $0x20] sm:$0xff]
    %v129 = vld [vmem:[#allocation5 + $0x28] sm:$0xff]
    %v130 = vld [vmem:[#allocation5 + $0x30] sm:$0xff]
    %v131 = vld [vmem:[#allocation5 + $0x38] sm:$0xff]
    %v132 = vld [vmem:[#allocation5 + $0x40] sm:$0xff]
    %v133 = vld [vmem:[#allocation5 + $0x48] sm:$0xff]
    %v134 = vld [vmem:[#allocation5 + $0x50] sm:$0xff]
    %v135 = vld [vmem:[#allocation5 + $0x58] sm:$0xff]
    %v136 = vld [vmem:[#allocation5 + $0x60] sm:$0xff]
    %v137 = vld [vmem:[#allocation5 + $0x68] sm:$0xff]
    %v138 = vld [vmem:[#allocation5 + $0x70] sm:$0xff]
    %v139 = vld [vmem:[#allocation5 + $0x78] sm:$0xff]
    %v140 = vld [vmem:[#allocation5 + $0x80] sm:$0xff]
    %v141 = vld [vmem:[#allocation5 + $0x88] sm:$0xff]
    %v142 = vld [vmem:[#allocation5 + $0x90] sm:$0xff]
    %v143 = vld [vmem:[#allocation5 + $0x98] sm:$0xff]
    %v144 = vld [vmem:[#allocation5 + $0xa0] sm:$0xff]
    %v145 = vld [vmem:[#allocation5 + $0xa8] sm:$0xff]
    %v146 = vld [vmem:[#allocation5 + $0xb0] sm:$0xff]
    %v147 = vld [vmem:[#allocation5 + $0xb8] sm:$0xff]
    %v148 = vld [vmem:[#allocation5 + $0xc0] sm:$0xff]
    %v149 = vld [vmem:[#allocation5 + $0xc8] sm:$0xff]
    %v150 = vld [vmem:[#allocation5 + $0xd0] sm:$0xff]
    %v151 = vld [vmem:[#allocation5 + $0xd8] sm:$0xff]
    %v152 = vld [vmem:[#allocation5 + $0xe0] sm:$0xff]
    %v153 = vld [vmem:[#allocation5 + $0xe8] sm:$0xff]
    %v154 = vld [vmem:[#allocation5 + $0xf0] sm:$0xff]
    %v155 = vld [vmem:[#allocation5 + $0xf8] sm:$0xff]
    %v156 = vld [vmem:[#allocation5 + $0x100] sm:$0xff]
    %v157 = vld [vmem:[#allocation5 + $0x108] sm:$0xff]
    %v158 = vld [vmem:[#allocation5 + $0x110] sm:$0xff]
    %v159 = vld [vmem:[#allocation5 + $0x118] sm:$0xff]
    %v160 = vld [vmem:[#allocation5 + $0x120] sm:$0xff]
    %v161 = vld [vmem:[#allocation5 + $0x128] sm:$0xff]
    %v162 = vld [vmem:[#allocation5 + $0x130] sm:$0xff]
    %v163 = vld [vmem:[#allocation5 + $0x138] sm:$0xff]
    %v164 = vld [vmem:[#allocation5 + $0x140] sm:$0xff]
    %v165 = vld [vmem:[#allocation5 + $0x148] sm:$0xff]
    %v166 = vld [vmem:[#allocation5 + $0x150] sm:$0xff]
    %v167 = vld [vmem:[#allocation5 + $0x158] sm:$0xff]
    %v168 = vld [vmem:[#allocation5 + $0x160] sm:$0xff]
    %v169 = vld [vmem:[#allocation5 + $0x168] sm:$0xff]
    %v170 = vld [vmem:[#allocation5 + $0x170] sm:$0xff]
    %v171 = vld [vmem:[#allocation5 + $0x178] sm:$0xff]
    %v172 = vld [vmem:[#allocation5 + $0x180] sm:$0xff]
    %v173 = vld [vmem:[#allocation5 + $0x188] sm:$0xff]
    %v174 = vld [vmem:[#allocation5 + $0x190] sm:$0xff]
    %v175 = vld [vmem:[#allocation5 + $0x198] sm:$0xff]
    %v176 = vld [vmem:[#allocation5 + $0x1a0] sm:$0xff]
    %v177 = vld [vmem:[#allocation5 + $0x1a8] sm:$0xff]
    %v178 = vld [vmem:[#allocation5 + $0x1b0] sm:$0xff]
    %v179 = vld [vmem:[#allocation5 + $0x1b8] sm:$0xff]
    %v180 = vld [vmem:[#allocation5 + $0x1c0] sm:$0xff]
    %v181 = vld [vmem:[#allocation5 + $0x1c8] sm:$0xff]
    %v182 = vld [vmem:[#allocation5 + $0x1d0] sm:$0xff]
    %v183 = vld [vmem:[#allocation5 + $0x1d8] sm:$0xff]
    %v184 = vld [vmem:[#allocation5 + $0x1e0] sm:$0xff]
    %v185 = vld [vmem:[#allocation5 + $0x1e8] sm:$0xff]
    %v186 = vld [vmem:[#allocation5 + $0x1f0] sm:$0xff]
    %v187 = vld [vmem:[#allocation5 + $0x1f8] sm:$0xff]
    %v188 = vld [vmem:[#allocation7] sm:$0xff]
    %v190 = vlaneseq
    %v191 = vshrl.u32 %v190, 7
    %v192 = vsub.s32 0, %v191
    %v193 = vrot.slane %v188, %v192
    %v194 = vlaneseq
    %v195 = vshrl.u32 %v194, 7
    %v196 = vsub.s32 1, %v195
    %v197 = vrot.slane %v188, %v196
    %v198 = vlaneseq
    %v199 = vshrl.u32 %v198, 7
    %v200 = vsub.s32 2, %v199
    %v201 = vrot.slane %v188, %v200
    %v202 = vlaneseq
    %v203 = vshrl.u32 %v202, 7
    %v204 = vsub.s32 3, %v203
    %v205 = vrot.slane %v188, %v204
    %v206 = vlaneseq
    %v207 = vshrl.u32 %v206, 7
    %v208 = vsub.s32 4, %v207
    %v209 = vrot.slane %v188, %v208
    %v210 = vlaneseq
    %v211 = vshrl.u32 %v210, 7
    %v212 = vsub.s32 5, %v211
    %v213 = vrot.slane %v188, %v212
    %v214 = vlaneseq
    %v215 = vshrl.u32 %v214, 7
    %v216 = vsub.s32 6, %v215
    %v217 = vrot.slane %v188, %v216
    %v218 = vlaneseq
    %v219 = vshrl.u32 %v218, 7
    %v220 = vsub.s32 7, %v219
    %v221 = vrot.slane %v188, %v220
    %v294 = vunpack.c.l.b16 %v124
    %v295 = vunpack.c.h.b16 %v124
    %v296 = vunpack.c.l.b16 %v125
    %v297 = vunpack.c.h.b16 %v125
    %v298 = vunpack.c.l.b16 %v126
    %v299 = vunpack.c.h.b16 %v126
    %v300 = vunpack.c.l.b16 %v127
    %v301 = vunpack.c.h.b16 %v127
    %v302 = vunpack.c.l.b16 %v128
    %v303 = vunpack.c.h.b16 %v128
    %v304 = vunpack.c.l.b16 %v129
    %v305 = vunpack.c.h.b16 %v129
    %v306 = vunpack.c.l.b16 %v130
    %v307 = vunpack.c.h.b16 %v130
    %v308 = vunpack.c.l.b16 %v131
    %v309 = vunpack.c.h.b16 %v131
    %v310 = vunpack.c.l.b16 %v132
    %v311 = vunpack.c.h.b16 %v132
    %v312 = vunpack.c.l.b16 %v133
    %v313 = vunpack.c.h.b16 %v133
    %v314 = vunpack.c.l.b16 %v134
    %v315 = vunpack.c.h.b16 %v134
    %v316 = vunpack.c.l.b16 %v135
    %v317 = vunpack.c.h.b16 %v135
    %v318 = vunpack.c.l.b16 %v136
    %v319 = vunpack.c.h.b16 %v136
    %v320 = vunpack.c.l.b16 %v137
    %v321 = vunpack.c.h.b16 %v137
    %v322 = vunpack.c.l.b16 %v138
    %v323 = vunpack.c.h.b16 %v138
    %v324 = vunpack.c.l.b16 %v139
    %v325 = vunpack.c.h.b16 %v139
    %v326 = vunpack.c.l.b16 %v140
    %v327 = vunpack.c.h.b16 %v140
    %v328 = vunpack.c.l.b16 %v141
    %v329 = vunpack.c.h.b16 %v141
    %v330 = vunpack.c.l.b16 %v142
    %v331 = vunpack.c.h.b16 %v142
    %v332 = vunpack.c.l.b16 %v143
    %v333 = vunpack.c.h.b16 %v143
    %v334 = vunpack.c.l.b16 %v144
    %v335 = vunpack.c.h.b16 %v144
    %v336 = vunpack.c.l.b16 %v145
    %v337 = vunpack.c.h.b16 %v145
    %v338 = vunpack.c.l.b16 %v146
    %v339 = vunpack.c.h.b16 %v146
    %v340 = vunpack.c.l.b16 %v147
    %v341 = vunpack.c.h.b16 %v147
    %v342 = vunpack.c.l.b16 %v148
    %v343 = vunpack.c.h.b16 %v148
    %v344 = vunpack.c.l.b16 %v149
    %v345 = vunpack.c.h.b16 %v149
    %v346 = vunpack.c.l.b16 %v150
    %v347 = vunpack.c.h.b16 %v150
    %v348 = vunpack.c.l.b16 %v151
    %v349 = vunpack.c.h.b16 %v151
    %v350 = vunpack.c.l.b16 %v152
    %v351 = vunpack.c.h.b16 %v152
    %v352 = vunpack.c.l.b16 %v153
    %v353 = vunpack.c.h.b16 %v153
    %v354 = vunpack.c.l.b16 %v154
    %v355 = vunpack.c.h.b16 %v154
    %v356 = vunpack.c.l.b16 %v155
    %v357 = vunpack.c.h.b16 %v155
    %v358 = vunpack.c.l.b16 %v156
    %v359 = vunpack.c.h.b16 %v156
    %v360 = vunpack.c.l.b16 %v157
    %v361 = vunpack.c.h.b16 %v157
    %v362 = vunpack.c.l.b16 %v158
    %v363 = vunpack.c.h.b16 %v158
    %v364 = vunpack.c.l.b16 %v159
    %v365 = vunpack.c.h.b16 %v159
    %v366 = vunpack.c.l.b16 %v160
    %v367 = vunpack.c.h.b16 %v160
    %v368 = vunpack.c.l.b16 %v161
    %v369 = vunpack.c.h.b16 %v161
    %v370 = vunpack.c.l.b16 %v162
    %v371 = vunpack.c.h.b16 %v162
    %v372 = vunpack.c.l.b16 %v163
    %v373 = vunpack.c.h.b16 %v163
    %v374 = vunpack.c.l.b16 %v164
    %v375 = vunpack.c.h.b16 %v164
    %v376 = vunpack.c.l.b16 %v165
    %v377 = vunpack.c.h.b16 %v165
    %v378 = vunpack.c.l.b16 %v166
    %v379 = vunpack.c.h.b16 %v166
    %v380 = vunpack.c.l.b16 %v167
    %v381 = vunpack.c.h.b16 %v167
    %v382 = vunpack.c.l.b16 %v168
    %v383 = vunpack.c.h.b16 %v168
    %v384 = vunpack.c.l.b16 %v169
    %v385 = vunpack.c.h.b16 %v169
    %v386 = vunpack.c.l.b16 %v170
    %v387 = vunpack.c.h.b16 %v170
    %v388 = vunpack.c.l.b16 %v171
    %v389 = vunpack.c.h.b16 %v171
    %v390 = vunpack.c.l.b16 %v172
    %v391 = vunpack.c.h.b16 %v172
    %v392 = vunpack.c.l.b16 %v173
    %v393 = vunpack.c.h.b16 %v173
    %v394 = vunpack.c.l.b16 %v174
    %v395 = vunpack.c.h.b16 %v174
    %v396 = vunpack.c.l.b16 %v175
    %v397 = vunpack.c.h.b16 %v175
    %v398 = vunpack.c.l.b16 %v176
    %v399 = vunpack.c.h.b16 %v176
    %v400 = vunpack.c.l.b16 %v177
    %v401 = vunpack.c.h.b16 %v177
    %v402 = vunpack.c.l.b16 %v178
    %v403 = vunpack.c.h.b16 %v178
    %v404 = vunpack.c.l.b16 %v179
    %v405 = vunpack.c.h.b16 %v179
    %v406 = vunpack.c.l.b16 %v180
    %v407 = vunpack.c.h.b16 %v180
    %v408 = vunpack.c.l.b16 %v181
    %v409 = vunpack.c.h.b16 %v181
    %v410 = vunpack.c.l.b16 %v182
    %v411 = vunpack.c.h.b16 %v182
    %v412 = vunpack.c.l.b16 %v183
    %v413 = vunpack.c.h.b16 %v183
    %v414 = vunpack.c.l.b16 %v184
    %v415 = vunpack.c.h.b16 %v184
    %v416 = vunpack.c.l.b16 %v185
    %v417 = vunpack.c.h.b16 %v185
    %v418 = vunpack.c.l.b16 %v186
    %v419 = vunpack.c.h.b16 %v186
    %v420 = vunpack.c.l.b16 %v187
    %v421 = vunpack.c.h.b16 %v187
    %v422 = vpack.c.b16 %v302, %v294
    %v423 = vpack.c.b16 %v303, %v295
    %v424 = vpack.c.b16 %v304, %v296
    %v425 = vpack.c.b16 %v305, %v297
    %v426 = vpack.c.b16 %v306, %v298
    %v427 = vpack.c.b16 %v307, %v299
    %v428 = vpack.c.b16 %v308, %v300
    %v429 = vpack.c.b16 %v309, %v301
    %v430 = vpack.c.b16 %v318, %v310
    %v431 = vpack.c.b16 %v319, %v311
    %v432 = vpack.c.b16 %v320, %v312
    %v433 = vpack.c.b16 %v321, %v313
    %v434 = vpack.c.b16 %v322, %v314
    %v435 = vpack.c.b16 %v323, %v315
    %v436 = vpack.c.b16 %v324, %v316
    %v437 = vpack.c.b16 %v325, %v317
    %v438 = vpack.c.b16 %v334, %v326
    %v439 = vpack.c.b16 %v335, %v327
    %v440 = vpack.c.b16 %v336, %v328
    %v441 = vpack.c.b16 %v337, %v329
    %v442 = vpack.c.b16 %v338, %v330
    %v443 = vpack.c.b16 %v339, %v331
    %v444 = vpack.c.b16 %v340, %v332
    %v445 = vpack.c.b16 %v341, %v333
    %v446 = vpack.c.b16 %v350, %v342
    %v447 = vpack.c.b16 %v351, %v343
    %v448 = vpack.c.b16 %v352, %v344
    %v449 = vpack.c.b16 %v353, %v345
    %v450 = vpack.c.b16 %v354, %v346
    %v451 = vpack.c.b16 %v355, %v347
    %v452 = vpack.c.b16 %v356, %v348
    %v453 = vpack.c.b16 %v357, %v349
    %v454 = vpack.c.b16 %v366, %v358
    %v455 = vpack.c.b16 %v367, %v359
    %v456 = vpack.c.b16 %v368, %v360
    %v457 = vpack.c.b16 %v369, %v361
    %v458 = vpack.c.b16 %v370, %v362
    %v459 = vpack.c.b16 %v371, %v363
    %v460 = vpack.c.b16 %v372, %v364
    %v461 = vpack.c.b16 %v373, %v365
    %v462 = vpack.c.b16 %v382, %v374
    %v463 = vpack.c.b16 %v383, %v375
    %v464 = vpack.c.b16 %v384, %v376
    %v465 = vpack.c.b16 %v385, %v377
    %v466 = vpack.c.b16 %v386, %v378
    %v467 = vpack.c.b16 %v387, %v379
    %v468 = vpack.c.b16 %v388, %v380
    %v469 = vpack.c.b16 %v389, %v381
    %v470 = vpack.c.b16 %v398, %v390
    %v471 = vpack.c.b16 %v399, %v391
    %v472 = vpack.c.b16 %v400, %v392
    %v473 = vpack.c.b16 %v401, %v393
    %v474 = vpack.c.b16 %v402, %v394
    %v475 = vpack.c.b16 %v403, %v395
    %v476 = vpack.c.b16 %v404, %v396
    %v477 = vpack.c.b16 %v405, %v397
    %v478 = vpack.c.b16 %v414, %v406
    %v479 = vpack.c.b16 %v415, %v407
    %v480 = vpack.c.b16 %v416, %v408
    %v481 = vpack.c.b16 %v417, %v409
    %v482 = vpack.c.b16 %v418, %v410
    %v483 = vpack.c.b16 %v419, %v411
    %v484 = vpack.c.b16 %v420, %v412
    %v485 = vpack.c.b16 %v421, %v413
    %550 = vmatprep.subr.bf16.mxu0 %v423
    %551 = vmatpush1.bf16.msra.mxu0 %v422
    %552 = vmatprep.subr.bf16.mxu0 %v431
    %553 = vmatpush1.bf16.msra.mxu0 %v430
    %554 = vmatprep.subr.bf16.mxu0 %v439
    %555 = vmatpush1.bf16.msra.mxu0 %v438
    %556 = vmatprep.subr.bf16.mxu0 %v447
    %557 = vmatpush1.bf16.msra.mxu0 %v446
    %558 = vmatprep.subr.bf16.mxu0 %v455
    %559 = vmatpush1.bf16.msra.mxu0 %v454
    %560 = vmatprep.subr.bf16.mxu0 %v463
    %561 = vmatpush1.bf16.msra.mxu0 %v462
    %562 = vmatprep.subr.bf16.mxu0 %v471
    %563 = vmatpush1.bf16.msra.mxu0 %v470
    %564 = vmatprep.subr.bf16.mxu0 %v479
    %565 = vmatpush1.bf16.msra.mxu0 %v478
    %566 = vmatprep.subr.bf16.mxu0 0
    %567 = vmatpush1.bf16.msra.mxu0 0
    %568 = vmatprep.subr.bf16.mxu0 0
    %569 = vmatpush1.bf16.msra.mxu0 0
    %570 = vmatprep.subr.bf16.mxu0 0
    %571 = vmatpush1.bf16.msra.mxu0 0
    %572 = vmatprep.subr.bf16.mxu0 0
    %573 = vmatpush1.bf16.msra.mxu0 0
    %574 = vmatprep.subr.bf16.mxu0 0
    %575 = vmatpush1.bf16.msra.mxu0 0
    %576 = vmatprep.subr.bf16.mxu0 0
    %577 = vmatpush1.bf16.msra.mxu0 0
    %578 = vmatprep.subr.bf16.mxu0 0
    %579 = vmatpush1.bf16.msra.mxu0 0
    %580 = vmatprep.subr.bf16.mxu0 0
    %581 = vmatpush1.bf16.msra.mxu0 0
    %582 = vmatprep.mubr.bf16.mxu0 0
    %583 = vmatmul.mubr.bf16.gmra.mrb[0].mxu0 %v116
    %v584 = vpop.f32.mrb[0].mxu0
    %v585 = vadd.f32 %v193, %v584
    %v586 = vpop.f32.mrb[0].mxu0
    %v587 = vadd.f32 %v197, %v586
    %v588 = vpop.f32.mrb[0].mxu0
    %v589 = vadd.f32 %v193, %v588
    %v590 = vpop.f32.mrb[0].mxu0
    %v591 = vadd.f32 %v197, %v590
    %592 = vmatprep.mubr.bf16.mxu0 0
    %593 = vmatmul.mubr.bf16.gmra.mrb[0].mxu0 %v117
    %v594 = vpop.f32.mrb[0].mxu0
    %v595 = vadd.f32 %v193, %v594
    %v596 = vpop.f32.mrb[0].mxu0
    %v597 = vadd.f32 %v197, %v596
    %v598 = vpop.f32.mrb[0].mxu0
    %v599 = vadd.f32 %v193, %v598
    %v600 = vpop.f32.mrb[0].mxu0
    %v601 = vadd.f32 %v197, %v600
    %602 = vmatprep.mubr.bf16.mxu0 0
    %603 = vmatmul.mubr.bf16.gmra.mrb[0].mxu0 %v118
    %v604 = vpop.f32.mrb[0].mxu0
    %v605 = vadd.f32 %v193, %v604
    %v606 = vpop.f32.mrb[0].mxu0
    %v607 = vadd.f32 %v197, %v606
    %v608 = vpop.f32.mrb[0].mxu0
    %v609 = vadd.f32 %v193, %v608
    %v610 = vpop.f32.mrb[0].mxu0
    %v611 = vadd.f32 %v197, %v610
    %612 = vmatprep.mubr.bf16.mxu0 0
    %613 = vmatmul.mubr.bf16.gmra.mrb[0].mxu0 %v119
    %v614 = vpop.f32.mrb[0].mxu0
    %v615 = vadd.f32 %v193, %v614
    %v616 = vpop.f32.mrb[0].mxu0
    %v617 = vadd.f32 %v197, %v616
    %v618 = vpop.f32.mrb[0].mxu0
    %v619 = vadd.f32 %v193, %v618
    %v620 = vpop.f32.mrb[0].mxu0
    %v621 = vadd.f32 %v197, %v620
    %622 = vmatprep.mubr.bf16.mxu0 0
    %623 = vmatmul.mubr.bf16.gmra.mrb[0].mxu0 %v120
    %v624 = vpop.f32.mrb[0].mxu0
    %v625 = vadd.f32 %v193, %v624
    %v626 = vpop.f32.mrb[0].mxu0
    %v627 = vadd.f32 %v197, %v626
    %v628 = vpop.f32.mrb[0].mxu0
    %v629 = vadd.f32 %v193, %v628
    %v630 = vpop.f32.mrb[0].mxu0
    %v631 = vadd.f32 %v197, %v630
    %632 = vmatprep.mubr.bf16.mxu0 0
    %633 = vmatmul.mubr.bf16.gmra.mrb[0].mxu0 %v121
    %v634 = vpop.f32.mrb[0].mxu0
    %v635 = vadd.f32 %v193, %v634
    %v636 = vpop.f32.mrb[0].mxu0
    %v637 = vadd.f32 %v197, %v636
    %v638 = vpop.f32.mrb[0].mxu0
    %v639 = vadd.f32 %v193, %v638
    %v640 = vpop.f32.mrb[0].mxu0
    %v641 = vadd.f32 %v197, %v640
    %642 = vmatprep.mubr.bf16.mxu0 0
    %643 = vmatmul.mubr.bf16.gmra.mrb[0].mxu0 %v122
    %v644 = vpop.f32.mrb[0].mxu0
    %v645 = vadd.f32 %v193, %v644
    %v646 = vpop.f32.mrb[0].mxu0
    %v647 = vadd.f32 %v197, %v646
    %v648 = vpop.f32.mrb[0].mxu0
    %v649 = vadd.f32 %v193, %v648
    %v650 = vpop.f32.mrb[0].mxu0
    %v651 = vadd.f32 %v197, %v650
    %652 = vmatprep.mubr.bf16.mxu0 0
    %653 = vmatmul.mubr.bf16.gmra.mrb[0].mxu0 %v123
    %v654 = vpop.f32.mrb[0].mxu0
    %v655 = vadd.f32 %v193, %v654
    %v656 = vpop.f32.mrb[0].mxu0
    %v657 = vadd.f32 %v197, %v656
    %v658 = vpop.f32.mrb[0].mxu0
    %v659 = vadd.f32 %v193, %v658
    %v660 = vpop.f32.mrb[0].mxu0
    %v661 = vadd.f32 %v197, %v660
    %662 = vdwg.mxu0
    %663 = vmatprep.subr.bf16.mxu0 %v425
    %664 = vmatpush1.bf16.msra.mxu0 %v424
    %665 = vmatprep.subr.bf16.mxu0 %v433
    %666 = vmatpush1.bf16.msra.mxu0 %v432
    %667 = vmatprep.subr.bf16.mxu0 %v441
    %668 = vmatpush1.bf16.msra.mxu0 %v440
    %669 = vmatprep.subr.bf16.mxu0 %v449
    %670 = vmatpush1.bf16.msra.mxu0 %v448
    %671 = vmatprep.subr.bf16.mxu0 %v457
    %672 = vmatpush1.bf16.msra.mxu0 %v456
    %673 = vmatprep.subr.bf16.mxu0 %v465
    %674 = vmatpush1.bf16.msra.mxu0 %v464
    %675 = vmatprep.subr.bf16.mxu0 %v473
    %676 = vmatpush1.bf16.msra.mxu0 %v472
    %677 = vmatprep.subr.bf16.mxu0 %v481
    %678 = vmatpush1.bf16.msra.mxu0 %v480
    %679 = vmatprep.subr.bf16.mxu0 0
    %680 = vmatpush1.bf16.msra.mxu0 0
    %681 = vmatprep.subr.bf16.mxu0 0
    %682 = vmatpush1.bf16.msra.mxu0 0
    %683 = vmatprep.subr.bf16.mxu0 0
    %684 = vmatpush1.bf16.msra.mxu0 0
    %685 = vmatprep.subr.bf16.mxu0 0
    %686 = vmatpush1.bf16.msra.mxu0 0
    %687 = vmatprep.subr.bf16.mxu0 0
    %688 = vmatpush1.bf16.msra.mxu0 0
    %689 = vmatprep.subr.bf16.mxu0 0
    %690 = vmatpush1.bf16.msra.mxu0 0
    %691 = vmatprep.subr.bf16.mxu0 0
    %692 = vmatpush1.bf16.msra.mxu0 0
    %693 = vmatprep.subr.bf16.mxu0 0
    %694 = vmatpush1.bf16.msra.mxu0 0
    %695 = vmatprep.mubr.bf16.mxu0 0
    %696 = vmatmul.mubr.bf16.gmra.mrb[0].mxu0 %v116
    %v697 = vpop.f32.mrb[0].mxu0
    %v698 = vadd.f32 %v201, %v697
    %v699 = vpop.f32.mrb[0].mxu0
    %v700 = vadd.f32 %v205, %v699
    %v701 = vpop.f32.mrb[0].mxu0
    %v702 = vadd.f32 %v201, %v701
    %v703 = vpop.f32.mrb[0].mxu0
    %v704 = vadd.f32 %v205, %v703
    %705 = vmatprep.mubr.bf16.mxu0 0
    %706 = vmatmul.mubr.bf16.gmra.mrb[0].mxu0 %v117
    %v707 = vpop.f32.mrb[0].mxu0
    %v708 = vadd.f32 %v201, %v707
    %v709 = vpop.f32.mrb[0].mxu0
    %v710 = vadd.f32 %v205, %v709
    %v711 = vpop.f32.mrb[0].mxu0
    %v712 = vadd.f32 %v201, %v711
    %v713 = vpop.f32.mrb[0].mxu0
    %v714 = vadd.f32 %v205, %v713
    %715 = vmatprep.mubr.bf16.mxu0 0
    %716 = vmatmul.mubr.bf16.gmra.mrb[0].mxu0 %v118
    %v717 = vpop.f32.mrb[0].mxu0
    %v718 = vadd.f32 %v201, %v717
    %v719 = vpop.f32.mrb[0].mxu0
    %v720 = vadd.f32 %v205, %v719
    %v721 = vpop.f32.mrb[0].mxu0
    %v722 = vadd.f32 %v201, %v721
    %v723 = vpop.f32.mrb[0].mxu0
    %v724 = vadd.f32 %v205, %v723
    %725 = vmatprep.mubr.bf16.mxu0 0
    %726 = vmatmul.mubr.bf16.gmra.mrb[0].mxu0 %v119
    %v727 = vpop.f32.mrb[0].mxu0
    %v728 = vadd.f32 %v201, %v727
    %v729 = vpop.f32.mrb[0].mxu0
    %v730 = vadd.f32 %v205, %v729
    %v731 = vpop.f32.mrb[0].mxu0
    %v732 = vadd.f32 %v201, %v731
    %v733 = vpop.f32.mrb[0].mxu0
    %v734 = vadd.f32 %v205, %v733
    %735 = vmatprep.mubr.bf16.mxu0 0
    %736 = vmatmul.mubr.bf16.gmra.mrb[0].mxu0 %v120
    %v737 = vpop.f32.mrb[0].mxu0
    %v738 = vadd.f32 %v201, %v737
    %v739 = vpop.f32.mrb[0].mxu0
    %v740 = vadd.f32 %v205, %v739
    %v741 = vpop.f32.mrb[0].mxu0
    %v742 = vadd.f32 %v201, %v741
    %v743 = vpop.f32.mrb[0].mxu0
    %v744 = vadd.f32 %v205, %v743
    %745 = vmatprep.mubr.bf16.mxu0 0
    %746 = vmatmul.mubr.bf16.gmra.mrb[0].mxu0 %v121
    %v747 = vpop.f32.mrb[0].mxu0
    %v748 = vadd.f32 %v201, %v747
    %v749 = vpop.f32.mrb[0].mxu0
    %v750 = vadd.f32 %v205, %v749
    %v751 = vpop.f32.mrb[0].mxu0
    %v752 = vadd.f32 %v201, %v751
    %v753 = vpop.f32.mrb[0].mxu0
    %v754 = vadd.f32 %v205, %v753
    %755 = vmatprep.mubr.bf16.mxu0 0
    %756 = vmatmul.mubr.bf16.gmra.mrb[0].mxu0 %v122
    %v757 = vpop.f32.mrb[0].mxu0
    %v758 = vadd.f32 %v201, %v757
    %v759 = vpop.f32.mrb[0].mxu0
    %v760 = vadd.f32 %v205, %v759
    %v761 = vpop.f32.mrb[0].mxu0
    %v762 = vadd.f32 %v201, %v761
    %v763 = vpop.f32.mrb[0].mxu0
    %v764 = vadd.f32 %v205, %v763
    %765 = vmatprep.mubr.bf16.mxu0 0
    %766 = vmatmul.mubr.bf16.gmra.mrb[0].mxu0 %v123
    %v767 = vpop.f32.mrb[0].mxu0
    %v768 = vadd.f32 %v201, %v767
    %v769 = vpop.f32.mrb[0].mxu0
    %v770 = vadd.f32 %v205, %v769
    %v771 = vpop.f32.mrb[0].mxu0
    %v772 = vadd.f32 %v201, %v771
    %v773 = vpop.f32.mrb[0].mxu0
    %v774 = vadd.f32 %v205, %v773
    %775 = vdwg.mxu0
    %776 = vmatprep.subr.bf16.mxu0 %v427
    %777 = vmatpush1.bf16.msra.mxu0 %v426
    %778 = vmatprep.subr.bf16.mxu0 %v435
    %779 = vmatpush1.bf16.msra.mxu0 %v434
    %780 = vmatprep.subr.bf16.mxu0 %v443
    %781 = vmatpush1.bf16.msra.mxu0 %v442
    %782 = vmatprep.subr.bf16.mxu0 %v451
    %783 = vmatpush1.bf16.msra.mxu0 %v450
    %784 = vmatprep.subr.bf16.mxu0 %v459
    %785 = vmatpush1.bf16.msra.mxu0 %v458
    %786 = vmatprep.subr.bf16.mxu0 %v467
    %787 = vmatpush1.bf16.msra.mxu0 %v466
    %788 = vmatprep.subr.bf16.mxu0 %v475
    %789 = vmatpush1.bf16.msra.mxu0 %v474
    %790 = vmatprep.subr.bf16.mxu0 %v483
    %791 = vmatpush1.bf16.msra.mxu0 %v482
    %792 = vmatprep.subr.bf16.mxu0 0
    %793 = vmatpush1.bf16.msra.mxu0 0
    %794 = vmatprep.subr.bf16.mxu0 0
    %795 = vmatpush1.bf16.msra.mxu0 0
    %796 = vmatprep.subr.bf16.mxu0 0
    %797 = vmatpush1.bf16.msra.mxu0 0
    %798 = vmatprep.subr.bf16.mxu0 0
    %799 = vmatpush1.bf16.msra.mxu0 0
    %800 = vmatprep.subr.bf16.mxu0 0
    %801 = vmatpush1.bf16.msra.mxu0 0
    %802 = vmatprep.subr.bf16.mxu0 0
    %803 = vmatpush1.bf16.msra.mxu0 0
    %804 = vmatprep.subr.bf16.mxu0 0
    %805 = vmatpush1.bf16.msra.mxu0 0
    %806 = vmatprep.subr.bf16.mxu0 0
    %807 = vmatpush1.bf16.msra.mxu0 0
    %808 = vmatprep.mubr.bf16.mxu0 0
    %809 = vmatmul.mubr.bf16.gmra.mrb[0].mxu0 %v116
    %v810 = vpop.f32.mrb[0].mxu0
    %v811 = vadd.f32 %v209, %v810
    %v812 = vpop.f32.mrb[0].mxu0
    %v813 = vadd.f32 %v213, %v812
    %v814 = vpop.f32.mrb[0].mxu0
    %v815 = vadd.f32 %v209, %v814
    %v816 = vpop.f32.mrb[0].mxu0
    %v817 = vadd.f32 %v213, %v816
    %818 = vmatprep.mubr.bf16.mxu0 0
    %819 = vmatmul.mubr.bf16.gmra.mrb[0].mxu0 %v117
    %v820 = vpop.f32.mrb[0].mxu0
    %v821 = vadd.f32 %v209, %v820
    %v822 = vpop.f32.mrb[0].mxu0
    %v823 = vadd.f32 %v213, %v822
    %v824 = vpop.f32.mrb[0].mxu0
    %v825 = vadd.f32 %v209, %v824
    %v826 = vpop.f32.mrb[0].mxu0
    %v827 = vadd.f32 %v213, %v826
    %828 = vmatprep.mubr.bf16.mxu0 0
    %829 = vmatmul.mubr.bf16.gmra.mrb[0].mxu0 %v118
    %v830 = vpop.f32.mrb[0].mxu0
    %v831 = vadd.f32 %v209, %v830
    %v832 = vpop.f32.mrb[0].mxu0
    %v833 = vadd.f32 %v213, %v832
    %v834 = vpop.f32.mrb[0].mxu0
    %v835 = vadd.f32 %v209, %v834
    %v836 = vpop.f32.mrb[0].mxu0
    %v837 = vadd.f32 %v213, %v836
    %838 = vmatprep.mubr.bf16.mxu0 0
    %839 = vmatmul.mubr.bf16.gmra.mrb[0].mxu0 %v119
    %v840 = vpop.f32.mrb[0].mxu0
    %v841 = vadd.f32 %v209, %v840
    %v842 = vpop.f32.mrb[0].mxu0
    %v843 = vadd.f32 %v213, %v842
    %v844 = vpop.f32.mrb[0].mxu0
    %v845 = vadd.f32 %v209, %v844
    %v846 = vpop.f32.mrb[0].mxu0
    %v847 = vadd.f32 %v213, %v846
    %848 = vmatprep.mubr.bf16.mxu0 0
    %849 = vmatmul.mubr.bf16.gmra.mrb[0].mxu0 %v120
    %v850 = vpop.f32.mrb[0].mxu0
    %v851 = vadd.f32 %v209, %v850
    %v852 = vpop.f32.mrb[0].mxu0
    %v853 = vadd.f32 %v213, %v852
    %v854 = vpop.f32.mrb[0].mxu0
    %v855 = vadd.f32 %v209, %v854
    %v856 = vpop.f32.mrb[0].mxu0
    %v857 = vadd.f32 %v213, %v856
    %858 = vmatprep.mubr.bf16.mxu0 0
    %859 = vmatmul.mubr.bf16.gmra.mrb[0].mxu0 %v121
    %v860 = vpop.f32.mrb[0].mxu0
    %v861 = vadd.f32 %v209, %v860
    %v862 = vpop.f32.mrb[0].mxu0
    %v863 = vadd.f32 %v213, %v862
    %v864 = vpop.f32.mrb[0].mxu0
    %v865 = vadd.f32 %v209, %v864
    %v866 = vpop.f32.mrb[0].mxu0
    %v867 = vadd.f32 %v213, %v866
    %868 = vmatprep.mubr.bf16.mxu0 0
    %869 = vmatmul.mubr.bf16.gmra.mrb[0].mxu0 %v122
    %v870 = vpop.f32.mrb[0].mxu0
    %v871 = vadd.f32 %v209, %v870
    %v872 = vpop.f32.mrb[0].mxu0
    %v873 = vadd.f32 %v213, %v872
    %v874 = vpop.f32.mrb[0].mxu0
    %v875 = vadd.f32 %v209, %v874
    %v876 = vpop.f32.mrb[0].mxu0
    %v877 = vadd.f32 %v213, %v876
    %878 = vmatprep.mubr.bf16.mxu0 0
    %879 = vmatmul.mubr.bf16.gmra.mrb[0].mxu0 %v123
    %v880 = vpop.f32.mrb[0].mxu0
    %v881 = vadd.f32 %v209, %v880
    %v882 = vpop.f32.mrb[0].mxu0
    %v883 = vadd.f32 %v213, %v882
    %v884 = vpop.f32.mrb[0].mxu0
    %v885 = vadd.f32 %v209, %v884
    %v886 = vpop.f32.mrb[0].mxu0
    %v887 = vadd.f32 %v213, %v886
    %888 = vdwg.mxu0
    %889 = vmatprep.subr.bf16.mxu0 %v429
    %890 = vmatpush1.bf16.msra.mxu0 %v428
    %891 = vmatprep.subr.bf16.mxu0 %v437
    %892 = vmatpush1.bf16.msra.mxu0 %v436
    %893 = vmatprep.subr.bf16.mxu0 %v445
    %894 = vmatpush1.bf16.msra.mxu0 %v444
    %895 = vmatprep.subr.bf16.mxu0 %v453
    %896 = vmatpush1.bf16.msra.mxu0 %v452
    %897 = vmatprep.subr.bf16.mxu0 %v461
    %898 = vmatpush1.bf16.msra.mxu0 %v460
    %899 = vmatprep.subr.bf16.mxu0 %v469
    %900 = vmatpush1.bf16.msra.mxu0 %v468
    %901 = vmatprep.subr.bf16.mxu0 %v477
    %902 = vmatpush1.bf16.msra.mxu0 %v476
    %903 = vmatprep.subr.bf16.mxu0 %v485
    %904 = vmatpush1.bf16.msra.mxu0 %v484
    %905 = vmatprep.subr.bf16.mxu0 0
    %906 = vmatpush1.bf16.msra.mxu0 0
    %907 = vmatprep.subr.bf16.mxu0 0
    %908 = vmatpush1.bf16.msra.mxu0 0
    %909 = vmatprep.subr.bf16.mxu0 0
    %910 = vmatpush1.bf16.msra.mxu0 0
    %911 = vmatprep.subr.bf16.mxu0 0
    %912 = vmatpush1.bf16.msra.mxu0 0
    %913 = vmatprep.subr.bf16.mxu0 0
    %914 = vmatpush1.bf16.msra.mxu0 0
    %915 = vmatprep.subr.bf16.mxu0 0
    %916 = vmatpush1.bf16.msra.mxu0 0
    %917 = vmatprep.subr.bf16.mxu0 0
    %918 = vmatpush1.bf16.msra.mxu0 0
    %919 = vmatprep.subr.bf16.mxu0 0
    %920 = vmatpush1.bf16.msra.mxu0 0
    %921 = vmatprep.mubr.bf16.mxu0 0
    %922 = vmatmul.mubr.bf16.gmra.mrb[0].mxu0 %v116
    %v923 = vpop.f32.mrb[0].mxu0
    %v924 = vadd.f32 %v217, %v923
    %v925 = vpop.f32.mrb[0].mxu0
    %v926 = vadd.f32 %v221, %v925
    %v927 = vpop.f32.mrb[0].mxu0
    %v928 = vadd.f32 %v217, %v927
    %v929 = vpop.f32.mrb[0].mxu0
    %v930 = vadd.f32 %v221, %v929
    %931 = vmatprep.mubr.bf16.mxu0 0
    %932 = vmatmul.mubr.bf16.gmra.mrb[0].mxu0 %v117
    %v933 = vpop.f32.mrb[0].mxu0
    %v934 = vadd.f32 %v217, %v933
    %v935 = vpop.f32.mrb[0].mxu0
    %v936 = vadd.f32 %v221, %v935
    %v937 = vpop.f32.mrb[0].mxu0
    %v938 = vadd.f32 %v217, %v937
    %v939 = vpop.f32.mrb[0].mxu0
    %v940 = vadd.f32 %v221, %v939
    %941 = vmatprep.mubr.bf16.mxu0 0
    %942 = vmatmul.mubr.bf16.gmra.mrb[0].mxu0 %v118
    %v943 = vpop.f32.mrb[0].mxu0
    %v944 = vadd.f32 %v217, %v943
    %v945 = vpop.f32.mrb[0].mxu0
    %v946 = vadd.f32 %v221, %v945
    %v947 = vpop.f32.mrb[0].mxu0
    %v948 = vadd.f32 %v217, %v947
    %v949 = vpop.f32.mrb[0].mxu0
    %v950 = vadd.f32 %v221, %v949
    %951 = vmatprep.mubr.bf16.mxu0 0
    %952 = vmatmul.mubr.bf16.gmra.mrb[0].mxu0 %v119
    %v953 = vpop.f32.mrb[0].mxu0
    %v954 = vadd.f32 %v217, %v953
    %v955 = vpop.f32.mrb[0].mxu0
    %v956 = vadd.f32 %v221, %v955
    %v957 = vpop.f32.mrb[0].mxu0
    %v958 = vadd.f32 %v217, %v957
    %v959 = vpop.f32.mrb[0].mxu0
    %v960 = vadd.f32 %v221, %v959
    %961 = vmatprep.mubr.bf16.mxu0 0
    %962 = vmatmul.mubr.bf16.gmra.mrb[0].mxu0 %v120
    %v963 = vpop.f32.mrb[0].mxu0
    %v964 = vadd.f32 %v217, %v963
    %v965 = vpop.f32.mrb[0].mxu0
    %v966 = vadd.f32 %v221, %v965
    %v967 = vpop.f32.mrb[0].mxu0
    %v968 = vadd.f32 %v217, %v967
    %v969 = vpop.f32.mrb[0].mxu0
    %v970 = vadd.f32 %v221, %v969
    %971 = vmatprep.mubr.bf16.mxu0 0
    %972 = vmatmul.mubr.bf16.gmra.mrb[0].mxu0 %v121
    %v973 = vpop.f32.mrb[0].mxu0
    %v974 = vadd.f32 %v217, %v973
    %v975 = vpop.f32.mrb[0].mxu0
    %v976 = vadd.f32 %v221, %v975
    %v977 = vpop.f32.mrb[0].mxu0
    %v978 = vadd.f32 %v217, %v977
    %v979 = vpop.f32.mrb[0].mxu0
    %v980 = vadd.f32 %v221, %v979
    %981 = vmatprep.mubr.bf16.mxu0 0
    %982 = vmatmul.mubr.bf16.gmra.mrb[0].mxu0 %v122
    %v983 = vpop.f32.mrb[0].mxu0
    %v984 = vadd.f32 %v217, %v983
    %v985 = vpop.f32.mrb[0].mxu0
    %v986 = vadd.f32 %v221, %v985
    %v987 = vpop.f32.mrb[0].mxu0
    %v988 = vadd.f32 %v217, %v987
    %v989 = vpop.f32.mrb[0].mxu0
    %v990 = vadd.f32 %v221, %v989
    %991 = vmatprep.mubr.bf16.mxu0 0
    %992 = vmatmul.mubr.bf16.gmra.mrb[0].mxu0 %v123
    %v993 = vpop.f32.mrb[0].mxu0
    %v994 = vadd.f32 %v217, %v993
    %v995 = vpop.f32.mrb[0].mxu0
    %v996 = vadd.f32 %v221, %v995
    %v997 = vpop.f32.mrb[0].mxu0
    %v998 = vadd.f32 %v217, %v997
    %v999 = vpop.f32.mrb[0].mxu0
    %v1000 = vadd.f32 %v221, %v999
    %1001 = vdwg.mxu0
    %v1002 = vmul.f32 %v585, %v585
    %v1003 = vmul.f32 %v587, %v587
    %v1004 = vmul.f32 %v698, %v698
    %v1005 = vmul.f32 %v700, %v700
    %v1006 = vmul.f32 %v811, %v811
    %v1007 = vmul.f32 %v813, %v813
    %v1008 = vmul.f32 %v924, %v924
    %v1009 = vmul.f32 %v926, %v926
    %v1010 = vmul.f32 %v589, %v589
    %v1011 = vmul.f32 %v591, %v591
    %v1012 = vmul.f32 %v702, %v702
    %v1013 = vmul.f32 %v704, %v704
    %v1014 = vmul.f32 %v815, %v815
    %v1015 = vmul.f32 %v817, %v817
    %v1016 = vmul.f32 %v928, %v928
    %v1017 = vmul.f32 %v930, %v930
    %v1018 = vmul.f32 %v595, %v595
    %v1019 = vmul.f32 %v597, %v597
    %v1020 = vmul.f32 %v708, %v708
    %v1021 = vmul.f32 %v710, %v710
    %v1022 = vmul.f32 %v821, %v821
    %v1023 = vmul.f32 %v823, %v823
    %v1024 = vmul.f32 %v934, %v934
    %v1025 = vmul.f32 %v936, %v936
    %v1026 = vmul.f32 %v599, %v599
    %v1027 = vmul.f32 %v601, %v601
    %v1028 = vmul.f32 %v712, %v712
    %v1029 = vmul.f32 %v714, %v714
    %v1030 = vmul.f32 %v825, %v825
    %v1031 = vmul.f32 %v827, %v827
    %v1032 = vmul.f32 %v938, %v938
    %v1033 = vmul.f32 %v940, %v940
    %v1034 = vmul.f32 %v605, %v605
    %v1035 = vmul.f32 %v607, %v607
    %v1036 = vmul.f32 %v718, %v718
    %v1037 = vmul.f32 %v720, %v720
    %v1038 = vmul.f32 %v831, %v831
    %v1039 = vmul.f32 %v833, %v833
    %v1040 = vmul.f32 %v944, %v944
    %v1041 = vmul.f32 %v946, %v946
    %v1042 = vmul.f32 %v609, %v609
    %v1043 = vmul.f32 %v611, %v611
    %v1044 = vmul.f32 %v722, %v722
    %v1045 = vmul.f32 %v724, %v724
    %v1046 = vmul.f32 %v835, %v835
    %v1047 = vmul.f32 %v837, %v837
    %v1048 = vmul.f32 %v948, %v948
    %v1049 = vmul.f32 %v950, %v950
    %v1050 = vmul.f32 %v615, %v615
    %v1051 = vmul.f32 %v617, %v617
    %v1052 = vmul.f32 %v728, %v728
    %v1053 = vmul.f32 %v730, %v730
    %v1054 = vmul.f32 %v841, %v841
    %v1055 = vmul.f32 %v843, %v843
    %v1056 = vmul.f32 %v954, %v954
    %v1057 = vmul.f32 %v956, %v956
    %v1058 = vmul.f32 %v619, %v619
    %v1059 = vmul.f32 %v621, %v621
    %v1060 = vmul.f32 %v732, %v732
    %v1061 = vmul.f32 %v734, %v734
    %v1062 = vmul.f32 %v845, %v845
    %v1063 = vmul.f32 %v847, %v847
    %v1064 = vmul.f32 %v958, %v958
    %v1065 = vmul.f32 %v960, %v960
    %v1066 = vmul.f32 %v625, %v625
    %v1067 = vmul.f32 %v627, %v627
    %v1068 = vmul.f32 %v738, %v738
    %v1069 = vmul.f32 %v740, %v740
    %v1070 = vmul.f32 %v851, %v851
    %v1071 = vmul.f32 %v853, %v853
    %v1072 = vmul.f32 %v964, %v964
    %v1073 = vmul.f32 %v966, %v966
    %v1074 = vmul.f32 %v629, %v629
    %v1075 = vmul.f32 %v631, %v631
    %v1076 = vmul.f32 %v742, %v742
    %v1077 = vmul.f32 %v744, %v744
    %v1078 = vmul.f32 %v855, %v855
    %v1079 = vmul.f32 %v857, %v857
    %v1080 = vmul.f32 %v968, %v968
    %v1081 = vmul.f32 %v970, %v970
    %v1082 = vmul.f32 %v635, %v635
    %v1083 = vmul.f32 %v637, %v637
    %v1084 = vmul.f32 %v748, %v748
    %v1085 = vmul.f32 %v750, %v750
    %v1086 = vmul.f32 %v861, %v861
    %v1087 = vmul.f32 %v863, %v863
    %v1088 = vmul.f32 %v974, %v974
    %v1089 = vmul.f32 %v976, %v976
    %v1090 = vmul.f32 %v639, %v639
    %v1091 = vmul.f32 %v641, %v641
    %v1092 = vmul.f32 %v752, %v752
    %v1093 = vmul.f32 %v754, %v754
    %v1094 = vmul.f32 %v865, %v865
    %v1095 = vmul.f32 %v867, %v867
    %v1096 = vmul.f32 %v978, %v978
    %v1097 = vmul.f32 %v980, %v980
    %v1098 = vmul.f32 %v645, %v645
    %v1099 = vmul.f32 %v647, %v647
    %v1100 = vmul.f32 %v758, %v758
    %v1101 = vmul.f32 %v760, %v760
    %v1102 = vmul.f32 %v871, %v871
    %v1103 = vmul.f32 %v873, %v873
    %v1104 = vmul.f32 %v984, %v984
    %v1105 = vmul.f32 %v986, %v986
    %v1106 = vmul.f32 %v649, %v649
    %v1107 = vmul.f32 %v651, %v651
    %v1108 = vmul.f32 %v762, %v762
    %v1109 = vmul.f32 %v764, %v764
    %v1110 = vmul.f32 %v875, %v875
    %v1111 = vmul.f32 %v877, %v877
    %v1112 = vmul.f32 %v988, %v988
    %v1113 = vmul.f32 %v990, %v990
    %v1114 = vmul.f32 %v655, %v655
    %v1115 = vmul.f32 %v657, %v657
    %v1116 = vmul.f32 %v768, %v768
    %v1117 = vmul.f32 %v770, %v770
    %v1118 = vmul.f32 %v881, %v881
    %v1119 = vmul.f32 %v883, %v883
    %v1120 = vmul.f32 %v994, %v994
    %v1121 = vmul.f32 %v996, %v996
    %v1122 = vmul.f32 %v659, %v659
    %v1123 = vmul.f32 %v661, %v661
    %v1124 = vmul.f32 %v772, %v772
    %v1125 = vmul.f32 %v774, %v774
    %v1126 = vmul.f32 %v885, %v885
    %v1127 = vmul.f32 %v887, %v887
    %v1128 = vmul.f32 %v998, %v998
    %v1129 = vmul.f32 %v1000, %v1000
    %v1130 = vmul.f32 %v585, %v1002
    %v1131 = vmul.f32 %v587, %v1003
    %v1132 = vmul.f32 %v698, %v1004
    %v1133 = vmul.f32 %v700, %v1005
    %v1134 = vmul.f32 %v811, %v1006
    %v1135 = vmul.f32 %v813, %v1007
    %v1136 = vmul.f32 %v924, %v1008
    %v1137 = vmul.f32 %v926, %v1009
    %v1138 = vmul.f32 %v589, %v1010
    %v1139 = vmul.f32 %v591, %v1011
    %v1140 = vmul.f32 %v702, %v1012
    %v1141 = vmul.f32 %v704, %v1013
    %v1142 = vmul.f32 %v815, %v1014
    %v1143 = vmul.f32 %v817, %v1015
    %v1144 = vmul.f32 %v928, %v1016
    %v1145 = vmul.f32 %v930, %v1017
    %v1146 = vmul.f32 %v595, %v1018
    %v1147 = vmul.f32 %v597, %v1019
    %v1148 = vmul.f32 %v708, %v1020
    %v1149 = vmul.f32 %v710, %v1021
    %v1150 = vmul.f32 %v821, %v1022
    %v1151 = vmul.f32 %v823, %v1023
    %v1152 = vmul.f32 %v934, %v1024
    %v1153 = vmul.f32 %v936, %v1025
    %v1154 = vmul.f32 %v599, %v1026
    %v1155 = vmul.f32 %v601, %v1027
    %v1156 = vmul.f32 %v712, %v1028
    %v1157 = vmul.f32 %v714, %v1029
    %v1158 = vmul.f32 %v825, %v1030
    %v1159 = vmul.f32 %v827, %v1031
    %v1160 = vmul.f32 %v938, %v1032
    %v1161 = vmul.f32 %v940, %v1033
    %v1162 = vmul.f32 %v605, %v1034
    %v1163 = vmul.f32 %v607, %v1035
    %v1164 = vmul.f32 %v718, %v1036
    %v1165 = vmul.f32 %v720, %v1037
    %v1166 = vmul.f32 %v831, %v1038
    %v1167 = vmul.f32 %v833, %v1039
    %v1168 = vmul.f32 %v944, %v1040
    %v1169 = vmul.f32 %v946, %v1041
    %v1170 = vmul.f32 %v609, %v1042
    %v1171 = vmul.f32 %v611, %v1043
    %v1172 = vmul.f32 %v722, %v1044
    %v1173 = vmul.f32 %v724, %v1045
    %v1174 = vmul.f32 %v835, %v1046
    %v1175 = vmul.f32 %v837, %v1047
    %v1176 = vmul.f32 %v948, %v1048
    %v1177 = vmul.f32 %v950, %v1049
    %v1178 = vmul.f32 %v615, %v1050
    %v1179 = vmul.f32 %v617, %v1051
    %v1180 = vmul.f32 %v728, %v1052
    %v1181 = vmul.f32 %v730, %v1053
    %v1182 = vmul.f32 %v841, %v1054
    %v1183 = vmul.f32 %v843, %v1055
    %v1184 = vmul.f32 %v954, %v1056
    %v1185 = vmul.f32 %v956, %v1057
    %v1186 = vmul.f32 %v619, %v1058
    %v1187 = vmul.f32 %v621, %v1059
    %v1188 = vmul.f32 %v732, %v1060
    %v1189 = vmul.f32 %v734, %v1061
    %v1190 = vmul.f32 %v845, %v1062
    %v1191 = vmul.f32 %v847, %v1063
    %v1192 = vmul.f32 %v958, %v1064
    %v1193 = vmul.f32 %v960, %v1065
    %v1194 = vmul.f32 %v625, %v1066
    %v1195 = vmul.f32 %v627, %v1067
    %v1196 = vmul.f32 %v738, %v1068
    %v1197 = vmul.f32 %v740, %v1069
    %v1198 = vmul.f32 %v851, %v1070
    %v1199 = vmul.f32 %v853, %v1071
    %v1200 = vmul.f32 %v964, %v1072
    %v1201 = vmul.f32 %v966, %v1073
    %v1202 = vmul.f32 %v629, %v1074
    %v1203 = vmul.f32 %v631, %v1075
    %v1204 = vmul.f32 %v742, %v1076
    %v1205 = vmul.f32 %v744, %v1077
    %v1206 = vmul.f32 %v855, %v1078
    %v1207 = vmul.f32 %v857, %v1079
    %v1208 = vmul.f32 %v968, %v1080
    %v1209 = vmul.f32 %v970, %v1081
    %v1210 = vmul.f32 %v635, %v1082
    %v1211 = vmul.f32 %v637, %v1083
    %v1212 = vmul.f32 %v748, %v1084
    %v1213 = vmul.f32 %v750, %v1085
    %v1214 = vmul.f32 %v861, %v1086
    %v1215 = vmul.f32 %v863, %v1087
    %v1216 = vmul.f32 %v974, %v1088
    %v1217 = vmul.f32 %v976, %v1089
    %v1218 = vmul.f32 %v639, %v1090
    %v1219 = vmul.f32 %v641, %v1091
    %v1220 = vmul.f32 %v752, %v1092
    %v1221 = vmul.f32 %v754, %v1093
    %v1222 = vmul.f32 %v865, %v1094
    %v1223 = vmul.f32 %v867, %v1095
    %v1224 = vmul.f32 %v978, %v1096
    %v1225 = vmul.f32 %v980, %v1097
    %v1226 = vmul.f32 %v645, %v1098
    %v1227 = vmul.f32 %v647, %v1099
    %v1228 = vmul.f32 %v758, %v1100
    %v1229 = vmul.f32 %v760, %v1101
    %v1230 = vmul.f32 %v871, %v1102
    %v1231 = vmul.f32 %v873, %v1103
    %v1232 = vmul.f32 %v984, %v1104
    %v1233 = vmul.f32 %v986, %v1105
    %v1234 = vmul.f32 %v649, %v1106
    %v1235 = vmul.f32 %v651, %v1107
    %v1236 = vmul.f32 %v762, %v1108
    %v1237 = vmul.f32 %v764, %v1109
    %v1238 = vmul.f32 %v875, %v1110
    %v1239 = vmul.f32 %v877, %v1111
    %v1240 = vmul.f32 %v988, %v1112
    %v1241 = vmul.f32 %v990, %v1113
    %v1242 = vmul.f32 %v655, %v1114
    %v1243 = vmul.f32 %v657, %v1115
    %v1244 = vmul.f32 %v768, %v1116
    %v1245 = vmul.f32 %v770, %v1117
    %v1246 = vmul.f32 %v881, %v1118
    %v1247 = vmul.f32 %v883, %v1119
    %v1248 = vmul.f32 %v994, %v1120
    %v1249 = vmul.f32 %v996, %v1121
    %v1250 = vmul.f32 %v659, %v1122
    %v1251 = vmul.f32 %v661, %v1123
    %v1252 = vmul.f32 %v772, %v1124
    %v1253 = vmul.f32 %v774, %v1125
    %v1254 = vmul.f32 %v885, %v1126
    %v1255 = vmul.f32 %v887, %v1127
    %v1256 = vmul.f32 %v998, %v1128
    %v1257 = vmul.f32 %v1000, %v1129
    %v1258 = vmul.f32 %v1130, 0.044715
    %v1259 = vmul.f32 %v1131, 0.044715
    %v1260 = vmul.f32 %v1132, 0.044715
    %v1261 = vmul.f32 %v1133, 0.044715
    %v1262 = vmul.f32 %v1134, 0.044715
    %v1263 = vmul.f32 %v1135, 0.044715
    %v1264 = vmul.f32 %v1136, 0.044715
    %v1265 = vmul.f32 %v1137, 0.044715
    %v1266 = vmul.f32 %v1138, 0.044715
    %v1267 = vmul.f32 %v1139, 0.044715
    %v1268 = vmul.f32 %v1140, 0.044715
    %v1269 = vmul.f32 %v1141, 0.044715
    %v1270 = vmul.f32 %v1142, 0.044715
    %v1271 = vmul.f32 %v1143, 0.044715
    %v1272 = vmul.f32 %v1144, 0.044715
    %v1273 = vmul.f32 %v1145, 0.044715
    %v1274 = vmul.f32 %v1146, 0.044715
    %v1275 = vmul.f32 %v1147, 0.044715
    %v1276 = vmul.f32 %v1148, 0.044715
    %v1277 = vmul.f32 %v1149, 0.044715
    %v1278 = vmul.f32 %v1150, 0.044715
    %v1279 = vmul.f32 %v1151, 0.044715
    %v1280 = vmul.f32 %v1152, 0.044715
    %v1281 = vmul.f32 %v1153, 0.044715
    %v1282 = vmul.f32 %v1154, 0.044715
    %v1283 = vmul.f32 %v1155, 0.044715
    %v1284 = vmul.f32 %v1156, 0.044715
    %v1285 = vmul.f32 %v1157, 0.044715
    %v1286 = vmul.f32 %v1158, 0.044715
    %v1287 = vmul.f32 %v1159, 0.044715
    %v1288 = vmul.f32 %v1160, 0.044715
    %v1289 = vmul.f32 %v1161, 0.044715
    %v1290 = vmul.f32 %v1162, 0.044715
    %v1291 = vmul.f32 %v1163, 0.044715
    %v1292 = vmul.f32 %v1164, 0.044715
    %v1293 = vmul.f32 %v1165, 0.044715
    %v1294 = vmul.f32 %v1166, 0.044715
    %v1295 = vmul.f32 %v1167, 0.044715
    %v1296 = vmul.f32 %v1168, 0.044715
    %v1297 = vmul.f32 %v1169, 0.044715
    %v1298 = vmul.f32 %v1170, 0.044715
    %v1299 = vmul.f32 %v1171, 0.044715
    %v1300 = vmul.f32 %v1172, 0.044715
    %v1301 = vmul.f32 %v1173, 0.044715
    %v1302 = vmul.f32 %v1174, 0.044715
    %v1303 = vmul.f32 %v1175, 0.044715
    %v1304 = vmul.f32 %v1176, 0.044715
    %v1305 = vmul.f32 %v1177, 0.044715
    %v1306 = vmul.f32 %v1178, 0.044715
    %v1307 = vmul.f32 %v1179, 0.044715
    %v1308 = vmul.f32 %v1180, 0.044715
    %v1309 = vmul.f32 %v1181, 0.044715
    %v1310 = vmul.f32 %v1182, 0.044715
    %v1311 = vmul.f32 %v1183, 0.044715
    %v1312 = vmul.f32 %v1184, 0.044715
    %v1313 = vmul.f32 %v1185, 0.044715
    %v1314 = vmul.f32 %v1186, 0.044715
    %v1315 = vmul.f32 %v1187, 0.044715
    %v1316 = vmul.f32 %v1188, 0.044715
    %v1317 = vmul.f32 %v1189, 0.044715
    %v1318 = vmul.f32 %v1190, 0.044715
    %v1319 = vmul.f32 %v1191, 0.044715
    %v1320 = vmul.f32 %v1192, 0.044715
    %v1321 = vmul.f32 %v1193, 0.044715
    %v1322 = vmul.f32 %v1194, 0.044715
    %v1323 = vmul.f32 %v1195, 0.044715
    %v1324 = vmul.f32 %v1196, 0.044715
    %v1325 = vmul.f32 %v1197, 0.044715
    %v1326 = vmul.f32 %v1198, 0.044715
    %v1327 = vmul.f32 %v1199, 0.044715
    %v1328 = vmul.f32 %v1200, 0.044715
    %v1329 = vmul.f32 %v1201, 0.044715
    %v1330 = vmul.f32 %v1202, 0.044715
    %v1331 = vmul.f32 %v1203, 0.044715
    %v1332 = vmul.f32 %v1204, 0.044715
    %v1333 = vmul.f32 %v1205, 0.044715
    %v1334 = vmul.f32 %v1206, 0.044715
    %v1335 = vmul.f32 %v1207, 0.044715
    %v1336 = vmul.f32 %v1208, 0.044715
    %v1337 = vmul.f32 %v1209, 0.044715
    %v1338 = vmul.f32 %v1210, 0.044715
    %v1339 = vmul.f32 %v1211, 0.044715
    %v1340 = vmul.f32 %v1212, 0.044715
    %v1341 = vmul.f32 %v1213, 0.044715
    %v1342 = vmul.f32 %v1214, 0.044715
    %v1343 = vmul.f32 %v1215, 0.044715
    %v1344 = vmul.f32 %v1216, 0.044715
    %v1345 = vmul.f32 %v1217, 0.044715
    %v1346 = vmul.f32 %v1218, 0.044715
    %v1347 = vmul.f32 %v1219, 0.044715
    %v1348 = vmul.f32 %v1220, 0.044715
    %v1349 = vmul.f32 %v1221, 0.044715
    %v1350 = vmul.f32 %v1222, 0.044715
    %v1351 = vmul.f32 %v1223, 0.044715
    %v1352 = vmul.f32 %v1224, 0.044715
    %v1353 = vmul.f32 %v1225, 0.044715
    %v1354 = vmul.f32 %v1226, 0.044715
    %v1355 = vmul.f32 %v1227, 0.044715
    %v1356 = vmul.f32 %v1228, 0.044715
    %v1357 = vmul.f32 %v1229, 0.044715
    %v1358 = vmul.f32 %v1230, 0.044715
    %v1359 = vmul.f32 %v1231, 0.044715
    %v1360 = vmul.f32 %v1232, 0.044715
    %v1361 = vmul.f32 %v1233, 0.044715
    %v1362 = vmul.f32 %v1234, 0.044715
    %v1363 = vmul.f32 %v1235, 0.044715
    %v1364 = vmul.f32 %v1236, 0.044715
    %v1365 = vmul.f32 %v1237, 0.044715
    %v1366 = vmul.f32 %v1238, 0.044715
    %v1367 = vmul.f32 %v1239, 0.044715
    %v1368 = vmul.f32 %v1240, 0.044715
    %v1369 = vmul.f32 %v1241, 0.044715
    %v1370 = vmul.f32 %v1242, 0.044715
    %v1371 = vmul.f32 %v1243, 0.044715
    %v1372 = vmul.f32 %v1244, 0.044715
    %v1373 = vmul.f32 %v1245, 0.044715
    %v1374 = vmul.f32 %v1246, 0.044715
    %v1375 = vmul.f32 %v1247, 0.044715
    %v1376 = vmul.f32 %v1248, 0.044715
    %v1377 = vmul.f32 %v1249, 0.044715
    %v1378 = vmul.f32 %v1250, 0.044715
    %v1379 = vmul.f32 %v1251, 0.044715
    %v1380 = vmul.f32 %v1252, 0.044715
    %v1381 = vmul.f32 %v1253, 0.044715
    %v1382 = vmul.f32 %v1254, 0.044715
    %v1383 = vmul.f32 %v1255, 0.044715
    %v1384 = vmul.f32 %v1256, 0.044715
    %v1385 = vmul.f32 %v1257, 0.044715
    %v1386 = vadd.f32 %v585, %v1258
    %v1387 = vadd.f32 %v587, %v1259
    %v1388 = vadd.f32 %v698, %v1260
    %v1389 = vadd.f32 %v700, %v1261
    %v1390 = vadd.f32 %v811, %v1262
    %v1391 = vadd.f32 %v813, %v1263
    %v1392 = vadd.f32 %v924, %v1264
    %v1393 = vadd.f32 %v926, %v1265
    %v1394 = vadd.f32 %v589, %v1266
    %v1395 = vadd.f32 %v591, %v1267
    %v1396 = vadd.f32 %v702, %v1268
    %v1397 = vadd.f32 %v704, %v1269
    %v1398 = vadd.f32 %v815, %v1270
    %v1399 = vadd.f32 %v817, %v1271
    %v1400 = vadd.f32 %v928, %v1272
    %v1401 = vadd.f32 %v930, %v1273
    %v1402 = vadd.f32 %v595, %v1274
    %v1403 = vadd.f32 %v597, %v1275
    %v1404 = vadd.f32 %v708, %v1276
    %v1405 = vadd.f32 %v710, %v1277
    %v1406 = vadd.f32 %v821, %v1278
    %v1407 = vadd.f32 %v823, %v1279
    %v1408 = vadd.f32 %v934, %v1280
    %v1409 = vadd.f32 %v936, %v1281
    %v1410 = vadd.f32 %v599, %v1282
    %v1411 = vadd.f32 %v601, %v1283
    %v1412 = vadd.f32 %v712, %v1284
    %v1413 = vadd.f32 %v714, %v1285
    %v1414 = vadd.f32 %v825, %v1286
    %v1415 = vadd.f32 %v827, %v1287
    %v1416 = vadd.f32 %v938, %v1288
    %v1417 = vadd.f32 %v940, %v1289
    %v1418 = vadd.f32 %v605, %v1290
    %v1419 = vadd.f32 %v607, %v1291
    %v1420 = vadd.f32 %v718, %v1292
    %v1421 = vadd.f32 %v720, %v1293
    %v1422 = vadd.f32 %v831, %v1294
    %v1423 = vadd.f32 %v833, %v1295
    %v1424 = vadd.f32 %v944, %v1296
    %v1425 = vadd.f32 %v946, %v1297
    %v1426 = vadd.f32 %v609, %v1298
    %v1427 = vadd.f32 %v611, %v1299
    %v1428 = vadd.f32 %v722, %v1300
    %v1429 = vadd.f32 %v724, %v1301
    %v1430 = vadd.f32 %v835, %v1302
    %v1431 = vadd.f32 %v837, %v1303
    %v1432 = vadd.f32 %v948, %v1304
    %v1433 = vadd.f32 %v950, %v1305
    %v1434 = vadd.f32 %v615, %v1306
    %v1435 = vadd.f32 %v617, %v1307
    %v1436 = vadd.f32 %v728, %v1308
    %v1437 = vadd.f32 %v730, %v1309
    %v1438 = vadd.f32 %v841, %v1310
    %v1439 = vadd.f32 %v843, %v1311
    %v1440 = vadd.f32 %v954, %v1312
    %v1441 = vadd.f32 %v956, %v1313
    %v1442 = vadd.f32 %v619, %v1314
    %v1443 = vadd.f32 %v621, %v1315
    %v1444 = vadd.f32 %v732, %v1316
    %v1445 = vadd.f32 %v734, %v1317
    %v1446 = vadd.f32 %v845, %v1318
    %v1447 = vadd.f32 %v847, %v1319
    %v1448 = vadd.f32 %v958, %v1320
    %v1449 = vadd.f32 %v960, %v1321
    %v1450 = vadd.f32 %v625, %v1322
    %v1451 = vadd.f32 %v627, %v1323
    %v1452 = vadd.f32 %v738, %v1324
    %v1453 = vadd.f32 %v740, %v1325
    %v1454 = vadd.f32 %v851, %v1326
    %v1455 = vadd.f32 %v853, %v1327
    %v1456 = vadd.f32 %v964, %v1328
    %v1457 = vadd.f32 %v966, %v1329
    %v1458 = vadd.f32 %v629, %v1330
    %v1459 = vadd.f32 %v631, %v1331
    %v1460 = vadd.f32 %v742, %v1332
    %v1461 = vadd.f32 %v744, %v1333
    %v1462 = vadd.f32 %v855, %v1334
    %v1463 = vadd.f32 %v857, %v1335
    %v1464 = vadd.f32 %v968, %v1336
    %v1465 = vadd.f32 %v970, %v1337
    %v1466 = vadd.f32 %v635, %v1338
    %v1467 = vadd.f32 %v637, %v1339
    %v1468 = vadd.f32 %v748, %v1340
    %v1469 = vadd.f32 %v750, %v1341
    %v1470 = vadd.f32 %v861, %v1342
    %v1471 = vadd.f32 %v863, %v1343
    %v1472 = vadd.f32 %v974, %v1344
    %v1473 = vadd.f32 %v976, %v1345
    %v1474 = vadd.f32 %v639, %v1346
    %v1475 = vadd.f32 %v641, %v1347
    %v1476 = vadd.f32 %v752, %v1348
    %v1477 = vadd.f32 %v754, %v1349
    %v1478 = vadd.f32 %v865, %v1350
    %v1479 = vadd.f32 %v867, %v1351
    %v1480 = vadd.f32 %v978, %v1352
    %v1481 = vadd.f32 %v980, %v1353
    %v1482 = vadd.f32 %v645, %v1354
    %v1483 = vadd.f32 %v647, %v1355
    %v1484 = vadd.f32 %v758, %v1356
    %v1485 = vadd.f32 %v760, %v1357
    %v1486 = vadd.f32 %v871, %v1358
    %v1487 = vadd.f32 %v873, %v1359
    %v1488 = vadd.f32 %v984, %v1360
    %v1489 = vadd.f32 %v986, %v1361
    %v1490 = vadd.f32 %v649, %v1362
    %v1491 = vadd.f32 %v651, %v1363
    %v1492 = vadd.f32 %v762, %v1364
    %v1493 = vadd.f32 %v764, %v1365
    %v1494 = vadd.f32 %v875, %v1366
    %v1495 = vadd.f32 %v877, %v1367
    %v1496 = vadd.f32 %v988, %v1368
    %v1497 = vadd.f32 %v990, %v1369
    %v1498 = vadd.f32 %v655, %v1370
    %v1499 = vadd.f32 %v657, %v1371
    %v1500 = vadd.f32 %v768, %v1372
    %v1501 = vadd.f32 %v770, %v1373
    %v1502 = vadd.f32 %v881, %v1374
    %v1503 = vadd.f32 %v883, %v1375
    %v1504 = vadd.f32 %v994, %v1376
    %v1505 = vadd.f32 %v996, %v1377
    %v1506 = vadd.f32 %v659, %v1378
    %v1507 = vadd.f32 %v661, %v1379
    %v1508 = vadd.f32 %v772, %v1380
    %v1509 = vadd.f32 %v774, %v1381
    %v1510 = vadd.f32 %v885, %v1382
    %v1511 = vadd.f32 %v887, %v1383
    %v1512 = vadd.f32 %v998, %v1384
    %v1513 = vadd.f32 %v1000, %v1385
    %v1514 = vmul.f32 %v1386, 0.7978846
    %v1515 = vmul.f32 %v1387, 0.7978846
    %v1516 = vmul.f32 %v1388, 0.7978846
    %v1517 = vmul.f32 %v1389, 0.7978846
    %v1518 = vmul.f32 %v1390, 0.7978846
    %v1519 = vmul.f32 %v1391, 0.7978846
    %v1520 = vmul.f32 %v1392, 0.7978846
    %v1521 = vmul.f32 %v1393, 0.7978846
    %v1522 = vmul.f32 %v1394, 0.7978846
    %v1523 = vmul.f32 %v1395, 0.7978846
    %v1524 = vmul.f32 %v1396, 0.7978846
    %v1525 = vmul.f32 %v1397, 0.7978846
    %v1526 = vmul.f32 %v1398, 0.7978846
    %v1527 = vmul.f32 %v1399, 0.7978846
    %v1528 = vmul.f32 %v1400, 0.7978846
    %v1529 = vmul.f32 %v1401, 0.7978846
    %v1530 = vmul.f32 %v1402, 0.7978846
    %v1531 = vmul.f32 %v1403, 0.7978846
    %v1532 = vmul.f32 %v1404, 0.7978846
    %v1533 = vmul.f32 %v1405, 0.7978846
    %v1534 = vmul.f32 %v1406, 0.7978846
    %v1535 = vmul.f32 %v1407, 0.7978846
    %v1536 = vmul.f32 %v1408, 0.7978846
    %v1537 = vmul.f32 %v1409, 0.7978846
    %v1538 = vmul.f32 %v1410, 0.7978846
    %v1539 = vmul.f32 %v1411, 0.7978846
    %v1540 = vmul.f32 %v1412, 0.7978846
    %v1541 = vmul.f32 %v1413, 0.7978846
    %v1542 = vmul.f32 %v1414, 0.7978846
    %v1543 = vmul.f32 %v1415, 0.7978846
    %v1544 = vmul.f32 %v1416, 0.7978846
    %v1545 = vmul.f32 %v1417, 0.7978846
    %v1546 = vmul.f32 %v1418, 0.7978846
    %v1547 = vmul.f32 %v1419, 0.7978846
    %v1548 = vmul.f32 %v1420, 0.7978846
    %v1549 = vmul.f32 %v1421, 0.7978846
    %v1550 = vmul.f32 %v1422, 0.7978846
    %v1551 = vmul.f32 %v1423, 0.7978846
    %v1552 = vmul.f32 %v1424, 0.7978846
    %v1553 = vmul.f32 %v1425, 0.7978846
    %v1554 = vmul.f32 %v1426, 0.7978846
    %v1555 = vmul.f32 %v1427, 0.7978846
    %v1556 = vmul.f32 %v1428, 0.7978846
    %v1557 = vmul.f32 %v1429, 0.7978846
    %v1558 = vmul.f32 %v1430, 0.7978846
    %v1559 = vmul.f32 %v1431, 0.7978846
    %v1560 = vmul.f32 %v1432, 0.7978846
    %v1561 = vmul.f32 %v1433, 0.7978846
    %v1562 = vmul.f32 %v1434, 0.7978846
    %v1563 = vmul.f32 %v1435, 0.7978846
    %v1564 = vmul.f32 %v1436, 0.7978846
    %v1565 = vmul.f32 %v1437, 0.7978846
    %v1566 = vmul.f32 %v1438, 0.7978846
    %v1567 = vmul.f32 %v1439, 0.7978846
    %v1568 = vmul.f32 %v1440, 0.7978846
    %v1569 = vmul.f32 %v1441, 0.7978846
    %v1570 = vmul.f32 %v1442, 0.7978846
    %v1571 = vmul.f32 %v1443, 0.7978846
    %v1572 = vmul.f32 %v1444, 0.7978846
    %v1573 = vmul.f32 %v1445, 0.7978846
    %v1574 = vmul.f32 %v1446, 0.7978846
    %v1575 = vmul.f32 %v1447, 0.7978846
    %v1576 = vmul.f32 %v1448, 0.7978846
    %v1577 = vmul.f32 %v1449, 0.7978846
    %v1578 = vmul.f32 %v1450, 0.7978846
    %v1579 = vmul.f32 %v1451, 0.7978846
    %v1580 = vmul.f32 %v1452, 0.7978846
    %v1581 = vmul.f32 %v1453, 0.7978846
    %v1582 = vmul.f32 %v1454, 0.7978846
    %v1583 = vmul.f32 %v1455, 0.7978846
    %v1584 = vmul.f32 %v1456, 0.7978846
    %v1585 = vmul.f32 %v1457, 0.7978846
    %v1586 = vmul.f32 %v1458, 0.7978846
    %v1587 = vmul.f32 %v1459, 0.7978846
    %v1588 = vmul.f32 %v1460, 0.7978846
    %v1589 = vmul.f32 %v1461, 0.7978846
    %v1590 = vmul.f32 %v1462, 0.7978846
    %v1591 = vmul.f32 %v1463, 0.7978846
    %v1592 = vmul.f32 %v1464, 0.7978846
    %v1593 = vmul.f32 %v1465, 0.7978846
    %v1594 = vmul.f32 %v1466, 0.7978846
    %v1595 = vmul.f32 %v1467, 0.7978846
    %v1596 = vmul.f32 %v1468, 0.7978846
    %v1597 = vmul.f32 %v1469, 0.7978846
    %v1598 = vmul.f32 %v1470, 0.7978846
    %v1599 = vmul.f32 %v1471, 0.7978846
    %v1600 = vmul.f32 %v1472, 0.7978846
    %v1601 = vmul.f32 %v1473, 0.7978846
    %v1602 = vmul.f32 %v1474, 0.7978846
    %v1603 = vmul.f32 %v1475, 0.7978846
    %v1604 = vmul.f32 %v1476, 0.7978846
    %v1605 = vmul.f32 %v1477, 0.7978846
    %v1606 = vmul.f32 %v1478, 0.7978846
    %v1607 = vmul.f32 %v1479, 0.7978846
    %v1608 = vmul.f32 %v1480, 0.7978846
    %v1609 = vmul.f32 %v1481, 0.7978846
    %v1610 = vmul.f32 %v1482, 0.7978846
    %v1611 = vmul.f32 %v1483, 0.7978846
    %v1612 = vmul.f32 %v1484, 0.7978846
    %v1613 = vmul.f32 %v1485, 0.7978846
    %v1614 = vmul.f32 %v1486, 0.7978846
    %v1615 = vmul.f32 %v1487, 0.7978846
    %v1616 = vmul.f32 %v1488, 0.7978846
    %v1617 = vmul.f32 %v1489, 0.7978846
    %v1618 = vmul.f32 %v1490, 0.7978846
    %v1619 = vmul.f32 %v1491, 0.7978846
    %v1620 = vmul.f32 %v1492, 0.7978846
    %v1621 = vmul.f32 %v1493, 0.7978846
    %v1622 = vmul.f32 %v1494, 0.7978846
    %v1623 = vmul.f32 %v1495, 0.7978846
    %v1624 = vmul.f32 %v1496, 0.7978846
    %v1625 = vmul.f32 %v1497, 0.7978846
    %v1626 = vmul.f32 %v1498, 0.7978846
    %v1627 = vmul.f32 %v1499, 0.7978846
    %v1628 = vmul.f32 %v1500, 0.7978846
    %v1629 = vmul.f32 %v1501, 0.7978846
    %v1630 = vmul.f32 %v1502, 0.7978846
    %v1631 = vmul.f32 %v1503, 0.7978846
    %v1632 = vmul.f32 %v1504, 0.7978846
    %v1633 = vmul.f32 %v1505, 0.7978846
    %v1634 = vmul.f32 %v1506, 0.7978846
    %v1635 = vmul.f32 %v1507, 0.7978846
    %v1636 = vmul.f32 %v1508, 0.7978846
    %v1637 = vmul.f32 %v1509, 0.7978846
    %v1638 = vmul.f32 %v1510, 0.7978846
    %v1639 = vmul.f32 %v1511, 0.7978846
    %v1640 = vmul.f32 %v1512, 0.7978846
    %v1641 = vmul.f32 %v1513, 0.7978846
    %v1642 = vtanh.pop %v1514
    %v1643 = vtanh.pop %v1515
    %v1644 = vtanh.pop %v1516
    %v1645 = vtanh.pop %v1517
    %v1646 = vtanh.pop %v1518
    %v1647 = vtanh.pop %v1519
    %v1648 = vtanh.pop %v1520
    %v1649 = vtanh.pop %v1521
    %v1650 = vtanh.pop %v1522
    %v1651 = vtanh.pop %v1523
    %v1652 = vtanh.pop %v1524
    %v1653 = vtanh.pop %v1525
    %v1654 = vtanh.pop %v1526
    %v1655 = vtanh.pop %v1527
    %v1656 = vtanh.pop %v1528
    %v1657 = vtanh.pop %v1529
    %v1658 = vtanh.pop %v1530
    %v1659 = vtanh.pop %v1531
    %v1660 = vtanh.pop %v1532
    %v1661 = vtanh.pop %v1533
    %v1662 = vtanh.pop %v1534
    %v1663 = vtanh.pop %v1535
    %v1664 = vtanh.pop %v1536
    %v1665 = vtanh.pop %v1537
    %v1666 = vtanh.pop %v1538
    %v1667 = vtanh.pop %v1539
    %v1668 = vtanh.pop %v1540
    %v1669 = vtanh.pop %v1541
    %v1670 = vtanh.pop %v1542
    %v1671 = vtanh.pop %v1543
    %v1672 = vtanh.pop %v1544
    %v1673 = vtanh.pop %v1545
    %v1674 = vtanh.pop %v1546
    %v1675 = vtanh.pop %v1547
    %v1676 = vtanh.pop %v1548
    %v1677 = vtanh.pop %v1549
    %v1678 = vtanh.pop %v1550
    %v1679 = vtanh.pop %v1551
    %v1680 = vtanh.pop %v1552
    %v1681 = vtanh.pop %v1553
    %v1682 = vtanh.pop %v1554
    %v1683 = vtanh.pop %v1555
    %v1684 = vtanh.pop %v1556
    %v1685 = vtanh.pop %v1557
    %v1686 = vtanh.pop %v1558
    %v1687 = vtanh.pop %v1559
    %v1688 = vtanh.pop %v1560
    %v1689 = vtanh.pop %v1561
    %v1690 = vtanh.pop %v1562
    %v1691 = vtanh.pop %v1563
    %v1692 = vtanh.pop %v1564
    %v1693 = vtanh.pop %v1565
    %v1694 = vtanh.pop %v1566
    %v1695 = vtanh.pop %v1567
    %v1696 = vtanh.pop %v1568
    %v1697 = vtanh.pop %v1569
    %v1698 = vtanh.pop %v1570
    %v1699 = vtanh.pop %v1571
    %v1700 = vtanh.pop %v1572
    %v1701 = vtanh.pop %v1573
    %v1702 = vtanh.pop %v1574
    %v1703 = vtanh.pop %v1575
    %v1704 = vtanh.pop %v1576
    %v1705 = vtanh.pop %v1577
    %v1706 = vtanh.pop %v1578
    %v1707 = vtanh.pop %v1579
    %v1708 = vtanh.pop %v1580
    %v1709 = vtanh.pop %v1581
    %v1710 = vtanh.pop %v1582
    %v1711 = vtanh.pop %v1583
    %v1712 = vtanh.pop %v1584
    %v1713 = vtanh.pop %v1585
    %v1714 = vtanh.pop %v1586
    %v1715 = vtanh.pop %v1587
    %v1716 = vtanh.pop %v1588
    %v1717 = vtanh.pop %v1589
    %v1718 = vtanh.pop %v1590
    %v1719 = vtanh.pop %v1591
    %v1720 = vtanh.pop %v1592
    %v1721 = vtanh.pop %v1593
    %v1722 = vtanh.pop %v1594
    %v1723 = vtanh.pop %v1595
    %v1724 = vtanh.pop %v1596
    %v1725 = vtanh.pop %v1597
    %v1726 = vtanh.pop %v1598
    %v1727 = vtanh.pop %v1599
    %v1728 = vtanh.pop %v1600
    %v1729 = vtanh.pop %v1601
    %v1730 = vtanh.pop %v1602
    %v1731 = vtanh.pop %v1603
    %v1732 = vtanh.pop %v1604
    %v1733 = vtanh.pop %v1605
    %v1734 = vtanh.pop %v1606
    %v1735 = vtanh.pop %v1607
    %v1736 = vtanh.pop %v1608
    %v1737 = vtanh.pop %v1609
    %v1738 = vtanh.pop %v1610
    %v1739 = vtanh.pop %v1611
    %v1740 = vtanh.pop %v1612
    %v1741 = vtanh.pop %v1613
    %v1742 = vtanh.pop %v1614
    %v1743 = vtanh.pop %v1615
    %v1744 = vtanh.pop %v1616
    %v1745 = vtanh.pop %v1617
    %v1746 = vtanh.pop %v1618
    %v1747 = vtanh.pop %v1619
    %v1748 = vtanh.pop %v1620
    %v1749 = vtanh.pop %v1621
    %v1750 = vtanh.pop %v1622
    %v1751 = vtanh.pop %v1623
    %v1752 = vtanh.pop %v1624
    %v1753 = vtanh.pop %v1625
    %v1754 = vtanh.pop %v1626
    %v1755 = vtanh.pop %v1627
    %v1756 = vtanh.pop %v1628
    %v1757 = vtanh.pop %v1629
    %v1758 = vtanh.pop %v1630
    %v1759 = vtanh.pop %v1631
    %v1760 = vtanh.pop %v1632
    %v1761 = vtanh.pop %v1633
    %v1762 = vtanh.pop %v1634
    %v1763 = vtanh.pop %v1635
    %v1764 = vtanh.pop %v1636
    %v1765 = vtanh.pop %v1637
    %v1766 = vtanh.pop %v1638
    %v1767 = vtanh.pop %v1639
    %v1768 = vtanh.pop %v1640
    %v1769 = vtanh.pop %v1641
    %v1770 = vadd.f32 %v1642, 1.0
    %v1771 = vadd.f32 %v1643, 1.0
    %v1772 = vadd.f32 %v1644, 1.0
    %v1773 = vadd.f32 %v1645, 1.0
    %v1774 = vadd.f32 %v1646, 1.0
    %v1775 = vadd.f32 %v1647, 1.0
    %v1776 = vadd.f32 %v1648, 1.0
    %v1777 = vadd.f32 %v1649, 1.0
    %v1778 = vadd.f32 %v1650, 1.0
    %v1779 = vadd.f32 %v1651, 1.0
    %v1780 = vadd.f32 %v1652, 1.0
    %v1781 = vadd.f32 %v1653, 1.0
    %v1782 = vadd.f32 %v1654, 1.0
    %v1783 = vadd.f32 %v1655, 1.0
    %v1784 = vadd.f32 %v1656, 1.0
    %v1785 = vadd.f32 %v1657, 1.0
    %v1786 = vadd.f32 %v1658, 1.0
    %v1787 = vadd.f32 %v1659, 1.0
    %v1788 = vadd.f32 %v1660, 1.0
    %v1789 = vadd.f32 %v1661, 1.0
    %v1790 = vadd.f32 %v1662, 1.0
    %v1791 = vadd.f32 %v1663, 1.0
    %v1792 = vadd.f32 %v1664, 1.0
    %v1793 = vadd.f32 %v1665, 1.0
    %v1794 = vadd.f32 %v1666, 1.0
    %v1795 = vadd.f32 %v1667, 1.0
    %v1796 = vadd.f32 %v1668, 1.0
    %v1797 = vadd.f32 %v1669, 1.0
    %v1798 = vadd.f32 %v1670, 1.0
    %v1799 = vadd.f32 %v1671, 1.0
    %v1800 = vadd.f32 %v1672, 1.0
    %v1801 = vadd.f32 %v1673, 1.0
    %v1802 = vadd.f32 %v1674, 1.0
    %v1803 = vadd.f32 %v1675, 1.0
    %v1804 = vadd.f32 %v1676, 1.0
    %v1805 = vadd.f32 %v1677, 1.0
    %v1806 = vadd.f32 %v1678, 1.0
    %v1807 = vadd.f32 %v1679, 1.0
    %v1808 = vadd.f32 %v1680, 1.0
    %v1809 = vadd.f32 %v1681, 1.0
    %v1810 = vadd.f32 %v1682, 1.0
    %v1811 = vadd.f32 %v1683, 1.0
    %v1812 = vadd.f32 %v1684, 1.0
    %v1813 = vadd.f32 %v1685, 1.0
    %v1814 = vadd.f32 %v1686, 1.0
    %v1815 = vadd.f32 %v1687, 1.0
    %v1816 = vadd.f32 %v1688, 1.0
    %v1817 = vadd.f32 %v1689, 1.0
    %v1818 = vadd.f32 %v1690, 1.0
    %v1819 = vadd.f32 %v1691, 1.0
    %v1820 = vadd.f32 %v1692, 1.0
    %v1821 = vadd.f32 %v1693, 1.0
    %v1822 = vadd.f32 %v1694, 1.0
    %v1823 = vadd.f32 %v1695, 1.0
    %v1824 = vadd.f32 %v1696, 1.0
    %v1825 = vadd.f32 %v1697, 1.0
    %v1826 = vadd.f32 %v1698, 1.0
    %v1827 = vadd.f32 %v1699, 1.0
    %v1828 = vadd.f32 %v1700, 1.0
    %v1829 = vadd.f32 %v1701, 1.0
    %v1830 = vadd.f32 %v1702, 1.0
    %v1831 = vadd.f32 %v1703, 1.0
    %v1832 = vadd.f32 %v1704, 1.0
    %v1833 = vadd.f32 %v1705, 1.0
    %v1834 = vadd.f32 %v1706, 1.0
    %v1835 = vadd.f32 %v1707, 1.0
    %v1836 = vadd.f32 %v1708, 1.0
    %v1837 = vadd.f32 %v1709, 1.0
    %v1838 = vadd.f32 %v1710, 1.0
    %v1839 = vadd.f32 %v1711, 1.0
    %v1840 = vadd.f32 %v1712, 1.0
    %v1841 = vadd.f32 %v1713, 1.0
    %v1842 = vadd.f32 %v1714, 1.0
    %v1843 = vadd.f32 %v1715, 1.0
    %v1844 = vadd.f32 %v1716, 1.0
    %v1845 = vadd.f32 %v1717, 1.0
    %v1846 = vadd.f32 %v1718, 1.0
    %v1847 = vadd.f32 %v1719, 1.0
    %v1848 = vadd.f32 %v1720, 1.0
    %v1849 = vadd.f32 %v1721, 1.0
    %v1850 = vadd.f32 %v1722, 1.0
    %v1851 = vadd.f32 %v1723, 1.0
    %v1852 = vadd.f32 %v1724, 1.0
    %v1853 = vadd.f32 %v1725, 1.0
    %v1854 = vadd.f32 %v1726, 1.0
    %v1855 = vadd.f32 %v1727, 1.0
    %v1856 = vadd.f32 %v1728, 1.0
    %v1857 = vadd.f32 %v1729, 1.0
    %v1858 = vadd.f32 %v1730, 1.0
    %v1859 = vadd.f32 %v1731, 1.0
    %v1860 = vadd.f32 %v1732, 1.0
    %v1861 = vadd.f32 %v1733, 1.0
    %v1862 = vadd.f32 %v1734, 1.0
    %v1863 = vadd.f32 %v1735, 1.0
    %v1864 = vadd.f32 %v1736, 1.0
    %v1865 = vadd.f32 %v1737, 1.0
    %v1866 = vadd.f32 %v1738, 1.0
    %v1867 = vadd.f32 %v1739, 1.0
    %v1868 = vadd.f32 %v1740, 1.0
    %v1869 = vadd.f32 %v1741, 1.0
    %v1870 = vadd.f32 %v1742, 1.0
    %v1871 = vadd.f32 %v1743, 1.0
    %v1872 = vadd.f32 %v1744, 1.0
    %v1873 = vadd.f32 %v1745, 1.0
    %v1874 = vadd.f32 %v1746, 1.0
    %v1875 = vadd.f32 %v1747, 1.0
    %v1876 = vadd.f32 %v1748, 1.0
    %v1877 = vadd.f32 %v1749, 1.0
    %v1878 = vadd.f32 %v1750, 1.0
    %v1879 = vadd.f32 %v1751, 1.0
    %v1880 = vadd.f32 %v1752, 1.0
    %v1881 = vadd.f32 %v1753, 1.0
    %v1882 = vadd.f32 %v1754, 1.0
    %v1883 = vadd.f32 %v1755, 1.0
    %v1884 = vadd.f32 %v1756, 1.0
    %v1885 = vadd.f32 %v1757, 1.0
    %v1886 = vadd.f32 %v1758, 1.0
    %v1887 = vadd.f32 %v1759, 1.0
    %v1888 = vadd.f32 %v1760, 1.0
    %v1889 = vadd.f32 %v1761, 1.0
    %v1890 = vadd.f32 %v1762, 1.0
    %v1891 = vadd.f32 %v1763, 1.0
    %v1892 = vadd.f32 %v1764, 1.0
    %v1893 = vadd.f32 %v1765, 1.0
    %v1894 = vadd.f32 %v1766, 1.0
    %v1895 = vadd.f32 %v1767, 1.0
    %v1896 = vadd.f32 %v1768, 1.0
    %v1897 = vadd.f32 %v1769, 1.0
    %v1898 = vmul.f32 %v1770, 0.5
    %v1899 = vmul.f32 %v1771, 0.5
    %v1900 = vmul.f32 %v1772, 0.5
    %v1901 = vmul.f32 %v1773, 0.5
    %v1902 = vmul.f32 %v1774, 0.5
    %v1903 = vmul.f32 %v1775, 0.5
    %v1904 = vmul.f32 %v1776, 0.5
    %v1905 = vmul.f32 %v1777, 0.5
    %v1906 = vmul.f32 %v1778, 0.5
    %v1907 = vmul.f32 %v1779, 0.5
    %v1908 = vmul.f32 %v1780, 0.5
    %v1909 = vmul.f32 %v1781, 0.5
    %v1910 = vmul.f32 %v1782, 0.5
    %v1911 = vmul.f32 %v1783, 0.5
    %v1912 = vmul.f32 %v1784, 0.5
    %v1913 = vmul.f32 %v1785, 0.5
    %v1914 = vmul.f32 %v1786, 0.5
    %v1915 = vmul.f32 %v1787, 0.5
    %v1916 = vmul.f32 %v1788, 0.5
    %v1917 = vmul.f32 %v1789, 0.5
    %v1918 = vmul.f32 %v1790, 0.5
    %v1919 = vmul.f32 %v1791, 0.5
    %v1920 = vmul.f32 %v1792, 0.5
    %v1921 = vmul.f32 %v1793, 0.5
    %v1922 = vmul.f32 %v1794, 0.5
    %v1923 = vmul.f32 %v1795, 0.5
    %v1924 = vmul.f32 %v1796, 0.5
    %v1925 = vmul.f32 %v1797, 0.5
    %v1926 = vmul.f32 %v1798, 0.5
    %v1927 = vmul.f32 %v1799, 0.5
    %v1928 = vmul.f32 %v1800, 0.5
    %v1929 = vmul.f32 %v1801, 0.5
    %v1930 = vmul.f32 %v1802, 0.5
    %v1931 = vmul.f32 %v1803, 0.5
    %v1932 = vmul.f32 %v1804, 0.5
    %v1933 = vmul.f32 %v1805, 0.5
    %v1934 = vmul.f32 %v1806, 0.5
    %v1935 = vmul.f32 %v1807, 0.5
    %v1936 = vmul.f32 %v1808, 0.5
    %v1937 = vmul.f32 %v1809, 0.5
    %v1938 = vmul.f32 %v1810, 0.5
    %v1939 = vmul.f32 %v1811, 0.5
    %v1940 = vmul.f32 %v1812, 0.5
    %v1941 = vmul.f32 %v1813, 0.5
    %v1942 = vmul.f32 %v1814, 0.5
    %v1943 = vmul.f32 %v1815, 0.5
    %v1944 = vmul.f32 %v1816, 0.5
    %v1945 = vmul.f32 %v1817, 0.5
    %v1946 = vmul.f32 %v1818, 0.5
    %v1947 = vmul.f32 %v1819, 0.5
    %v1948 = vmul.f32 %v1820, 0.5
    %v1949 = vmul.f32 %v1821, 0.5
    %v1950 = vmul.f32 %v1822, 0.5
    %v1951 = vmul.f32 %v1823, 0.5
    %v1952 = vmul.f32 %v1824, 0.5
    %v1953 = vmul.f32 %v1825, 0.5
    %v1954 = vmul.f32 %v1826, 0.5
    %v1955 = vmul.f32 %v1827, 0.5
    %v1956 = vmul.f32 %v1828, 0.5
    %v1957 = vmul.f32 %v1829, 0.5
    %v1958 = vmul.f32 %v1830, 0.5
    %v1959 = vmul.f32 %v1831, 0.5
    %v1960 = vmul.f32 %v1832, 0.5
    %v1961 = vmul.f32 %v1833, 0.5
    %v1962 = vmul.f32 %v1834, 0.5
    %v1963 = vmul.f32 %v1835, 0.5
    %v1964 = vmul.f32 %v1836, 0.5
    %v1965 = vmul.f32 %v1837, 0.5
    %v1966 = vmul.f32 %v1838, 0.5
    %v1967 = vmul.f32 %v1839, 0.5
    %v1968 = vmul.f32 %v1840, 0.5
    %v1969 = vmul.f32 %v1841, 0.5
    %v1970 = vmul.f32 %v1842, 0.5
    %v1971 = vmul.f32 %v1843, 0.5
    %v1972 = vmul.f32 %v1844, 0.5
    %v1973 = vmul.f32 %v1845, 0.5
    %v1974 = vmul.f32 %v1846, 0.5
    %v1975 = vmul.f32 %v1847, 0.5
    %v1976 = vmul.f32 %v1848, 0.5
    %v1977 = vmul.f32 %v1849, 0.5
    %v1978 = vmul.f32 %v1850, 0.5
    %v1979 = vmul.f32 %v1851, 0.5
    %v1980 = vmul.f32 %v1852, 0.5
    %v1981 = vmul.f32 %v1853, 0.5
    %v1982 = vmul.f32 %v1854, 0.5
    %v1983 = vmul.f32 %v1855, 0.5
    %v1984 = vmul.f32 %v1856, 0.5
    %v1985 = vmul.f32 %v1857, 0.5
    %v1986 = vmul.f32 %v1858, 0.5
    %v1987 = vmul.f32 %v1859, 0.5
    %v1988 = vmul.f32 %v1860, 0.5
    %v1989 = vmul.f32 %v1861, 0.5
    %v1990 = vmul.f32 %v1862, 0.5
    %v1991 = vmul.f32 %v1863, 0.5
    %v1992 = vmul.f32 %v1864, 0.5
    %v1993 = vmul.f32 %v1865, 0.5
    %v1994 = vmul.f32 %v1866, 0.5
    %v1995 = vmul.f32 %v1867, 0.5
    %v1996 = vmul.f32 %v1868, 0.5
    %v1997 = vmul.f32 %v1869, 0.5
    %v1998 = vmul.f32 %v1870, 0.5
    %v1999 = vmul.f32 %v1871, 0.5
    %v2000 = vmul.f32 %v1872, 0.5
    %v2001 = vmul.f32 %v1873, 0.5
    %v2002 = vmul.f32 %v1874, 0.5
    %v2003 = vmul.f32 %v1875, 0.5
    %v2004 = vmul.f32 %v1876, 0.5
    %v2005 = vmul.f32 %v1877, 0.5
    %v2006 = vmul.f32 %v1878, 0.5
    %v2007 = vmul.f32 %v1879, 0.5
    %v2008 = vmul.f32 %v1880, 0.5
    %v2009 = vmul.f32 %v1881, 0.5
    %v2010 = vmul.f32 %v1882, 0.5
    %v2011 = vmul.f32 %v1883, 0.5
    %v2012 = vmul.f32 %v1884, 0.5
    %v2013 = vmul.f32 %v1885, 0.5
    %v2014 = vmul.f32 %v1886, 0.5
    %v2015 = vmul.f32 %v1887, 0.5
    %v2016 = vmul.f32 %v1888, 0.5
    %v2017 = vmul.f32 %v1889, 0.5
    %v2018 = vmul.f32 %v1890, 0.5
    %v2019 = vmul.f32 %v1891, 0.5
    %v2020 = vmul.f32 %v1892, 0.5
    %v2021 = vmul.f32 %v1893, 0.5
    %v2022 = vmul.f32 %v1894, 0.5
    %v2023 = vmul.f32 %v1895, 0.5
    %v2024 = vmul.f32 %v1896, 0.5
    %v2025 = vmul.f32 %v1897, 0.5
    %v2026 = vmul.f32 %v585, %v1898
    %v2027 = vmul.f32 %v587, %v1899
    %v2028 = vmul.f32 %v698, %v1900
    %v2029 = vmul.f32 %v700, %v1901
    %v2030 = vmul.f32 %v811, %v1902
    %v2031 = vmul.f32 %v813, %v1903
    %v2032 = vmul.f32 %v924, %v1904
    %v2033 = vmul.f32 %v926, %v1905
    %v2034 = vmul.f32 %v589, %v1906
    %v2035 = vmul.f32 %v591, %v1907
    %v2036 = vmul.f32 %v702, %v1908
    %v2037 = vmul.f32 %v704, %v1909
    %v2038 = vmul.f32 %v815, %v1910
    %v2039 = vmul.f32 %v817, %v1911
    %v2040 = vmul.f32 %v928, %v1912
    %v2041 = vmul.f32 %v930, %v1913
    %v2042 = vmul.f32 %v595, %v1914
    %v2043 = vmul.f32 %v597, %v1915
    %v2044 = vmul.f32 %v708, %v1916
    %v2045 = vmul.f32 %v710, %v1917
    %v2046 = vmul.f32 %v821, %v1918
    %v2047 = vmul.f32 %v823, %v1919
    %v2048 = vmul.f32 %v934, %v1920
    %v2049 = vmul.f32 %v936, %v1921
    %v2050 = vmul.f32 %v599, %v1922
    %v2051 = vmul.f32 %v601, %v1923
    %v2052 = vmul.f32 %v712, %v1924
    %v2053 = vmul.f32 %v714, %v1925
    %v2054 = vmul.f32 %v825, %v1926
    %v2055 = vmul.f32 %v827, %v1927
    %v2056 = vmul.f32 %v938, %v1928
    %v2057 = vmul.f32 %v940, %v1929
    %v2058 = vmul.f32 %v605, %v1930
    %v2059 = vmul.f32 %v607, %v1931
    %v2060 = vmul.f32 %v718, %v1932
    %v2061 = vmul.f32 %v720, %v1933
    %v2062 = vmul.f32 %v831, %v1934
    %v2063 = vmul.f32 %v833, %v1935
    %v2064 = vmul.f32 %v944, %v1936
    %v2065 = vmul.f32 %v946, %v1937
    %v2066 = vmul.f32 %v609, %v1938
    %v2067 = vmul.f32 %v611, %v1939
    %v2068 = vmul.f32 %v722, %v1940
    %v2069 = vmul.f32 %v724, %v1941
    %v2070 = vmul.f32 %v835, %v1942
    %v2071 = vmul.f32 %v837, %v1943
    %v2072 = vmul.f32 %v948, %v1944
    %v2073 = vmul.f32 %v950, %v1945
    %v2074 = vmul.f32 %v615, %v1946
    %v2075 = vmul.f32 %v617, %v1947
    %v2076 = vmul.f32 %v728, %v1948
    %v2077 = vmul.f32 %v730, %v1949
    %v2078 = vmul.f32 %v841, %v1950
    %v2079 = vmul.f32 %v843, %v1951
    %v2080 = vmul.f32 %v954, %v1952
    %v2081 = vmul.f32 %v956, %v1953
    %v2082 = vmul.f32 %v619, %v1954
    %v2083 = vmul.f32 %v621, %v1955
    %v2084 = vmul.f32 %v732, %v1956
    %v2085 = vmul.f32 %v734, %v1957
    %v2086 = vmul.f32 %v845, %v1958
    %v2087 = vmul.f32 %v847, %v1959
    %v2088 = vmul.f32 %v958, %v1960
    %v2089 = vmul.f32 %v960, %v1961
    %v2090 = vmul.f32 %v625, %v1962
    %v2091 = vmul.f32 %v627, %v1963
    %v2092 = vmul.f32 %v738, %v1964
    %v2093 = vmul.f32 %v740, %v1965
    %v2094 = vmul.f32 %v851, %v1966
    %v2095 = vmul.f32 %v853, %v1967
    %v2096 = vmul.f32 %v964, %v1968
    %v2097 = vmul.f32 %v966, %v1969
    %v2098 = vmul.f32 %v629, %v1970
    %v2099 = vmul.f32 %v631, %v1971
    %v2100 = vmul.f32 %v742, %v1972
    %v2101 = vmul.f32 %v744, %v1973
    %v2102 = vmul.f32 %v855, %v1974
    %v2103 = vmul.f32 %v857, %v1975
    %v2104 = vmul.f32 %v968, %v1976
    %v2105 = vmul.f32 %v970, %v1977
    %v2106 = vmul.f32 %v635, %v1978
    %v2107 = vmul.f32 %v637, %v1979
    %v2108 = vmul.f32 %v748, %v1980
    %v2109 = vmul.f32 %v750, %v1981
    %v2110 = vmul.f32 %v861, %v1982
    %v2111 = vmul.f32 %v863, %v1983
    %v2112 = vmul.f32 %v974, %v1984
    %v2113 = vmul.f32 %v976, %v1985
    %v2114 = vmul.f32 %v639, %v1986
    %v2115 = vmul.f32 %v641, %v1987
    %v2116 = vmul.f32 %v752, %v1988
    %v2117 = vmul.f32 %v754, %v1989
    %v2118 = vmul.f32 %v865, %v1990
    %v2119 = vmul.f32 %v867, %v1991
    %v2120 = vmul.f32 %v978, %v1992
    %v2121 = vmul.f32 %v980, %v1993
    %v2122 = vmul.f32 %v645, %v1994
    %v2123 = vmul.f32 %v647, %v1995
    %v2124 = vmul.f32 %v758, %v1996
    %v2125 = vmul.f32 %v760, %v1997
    %v2126 = vmul.f32 %v871, %v1998
    %v2127 = vmul.f32 %v873, %v1999
    %v2128 = vmul.f32 %v984, %v2000
    %v2129 = vmul.f32 %v986, %v2001
    %v2130 = vmul.f32 %v649, %v2002
    %v2131 = vmul.f32 %v651, %v2003
    %v2132 = vmul.f32 %v762, %v2004
    %v2133 = vmul.f32 %v764, %v2005
    %v2134 = vmul.f32 %v875, %v2006
    %v2135 = vmul.f32 %v877, %v2007
    %v2136 = vmul.f32 %v988, %v2008
    %v2137 = vmul.f32 %v990, %v2009
    %v2138 = vmul.f32 %v655, %v2010
    %v2139 = vmul.f32 %v657, %v2011
    %v2140 = vmul.f32 %v768, %v2012
    %v2141 = vmul.f32 %v770, %v2013
    %v2142 = vmul.f32 %v881, %v2014
    %v2143 = vmul.f32 %v883, %v2015
    %v2144 = vmul.f32 %v994, %v2016
    %v2145 = vmul.f32 %v996, %v2017
    %v2146 = vmul.f32 %v659, %v2018
    %v2147 = vmul.f32 %v661, %v2019
    %v2148 = vmul.f32 %v772, %v2020
    %v2149 = vmul.f32 %v774, %v2021
    %v2150 = vmul.f32 %v885, %v2022
    %v2151 = vmul.f32 %v887, %v2023
    %v2152 = vmul.f32 %v998, %v2024
    %v2153 = vmul.f32 %v1000, %v2025
    %v2154 = vpack.c.bf16 %v2034, %v2026
    %v2155 = vpack.c.bf16 %v2035, %v2027
    %v2156 = vpack.c.bf16 %v2036, %v2028
    %v2157 = vpack.c.bf16 %v2037, %v2029
    %v2158 = vpack.c.bf16 %v2038, %v2030
    %v2159 = vpack.c.bf16 %v2039, %v2031
    %v2160 = vpack.c.bf16 %v2040, %v2032
    %v2161 = vpack.c.bf16 %v2041, %v2033
    %v2162 = vpack.c.bf16 %v2050, %v2042
    %v2163 = vpack.c.bf16 %v2051, %v2043
    %v2164 = vpack.c.bf16 %v2052, %v2044
    %v2165 = vpack.c.bf16 %v2053, %v2045
    %v2166 = vpack.c.bf16 %v2054, %v2046
    %v2167 = vpack.c.bf16 %v2055, %v2047
    %v2168 = vpack.c.bf16 %v2056, %v2048
    %v2169 = vpack.c.bf16 %v2057, %v2049
    %v2170 = vpack.c.bf16 %v2066, %v2058
    %v2171 = vpack.c.bf16 %v2067, %v2059
    %v2172 = vpack.c.bf16 %v2068, %v2060
    %v2173 = vpack.c.bf16 %v2069, %v2061
    %v2174 = vpack.c.bf16 %v2070, %v2062
    %v2175 = vpack.c.bf16 %v2071, %v2063
    %v2176 = vpack.c.bf16 %v2072, %v2064
    %v2177 = vpack.c.bf16 %v2073, %v2065
    %v2178 = vpack.c.bf16 %v2082, %v2074
    %v2179 = vpack.c.bf16 %v2083, %v2075
    %v2180 = vpack.c.bf16 %v2084, %v2076
    %v2181 = vpack.c.bf16 %v2085, %v2077
    %v2182 = vpack.c.bf16 %v2086, %v2078
    %v2183 = vpack.c.bf16 %v2087, %v2079
    %v2184 = vpack.c.bf16 %v2088, %v2080
    %v2185 = vpack.c.bf16 %v2089, %v2081
    %v2186 = vpack.c.bf16 %v2098, %v2090
    %v2187 = vpack.c.bf16 %v2099, %v2091
    %v2188 = vpack.c.bf16 %v2100, %v2092
    %v2189 = vpack.c.bf16 %v2101, %v2093
    %v2190 = vpack.c.bf16 %v2102, %v2094
    %v2191 = vpack.c.bf16 %v2103, %v2095
    %v2192 = vpack.c.bf16 %v2104, %v2096
    %v2193 = vpack.c.bf16 %v2105, %v2097
    %v2194 = vpack.c.bf16 %v2114, %v2106
    %v2195 = vpack.c.bf16 %v2115, %v2107
    %v2196 = vpack.c.bf16 %v2116, %v2108
    %v2197 = vpack.c.bf16 %v2117, %v2109
    %v2198 = vpack.c.bf16 %v2118, %v2110
    %v2199 = vpack.c.bf16 %v2119, %v2111
    %v2200 = vpack.c.bf16 %v2120, %v2112
    %v2201 = vpack.c.bf16 %v2121, %v2113
    %v2202 = vpack.c.bf16 %v2130, %v2122
    %v2203 = vpack.c.bf16 %v2131, %v2123
    %v2204 = vpack.c.bf16 %v2132, %v2124
    %v2205 = vpack.c.bf16 %v2133, %v2125
    %v2206 = vpack.c.bf16 %v2134, %v2126
    %v2207 = vpack.c.bf16 %v2135, %v2127
    %v2208 = vpack.c.bf16 %v2136, %v2128
    %v2209 = vpack.c.bf16 %v2137, %v2129
    %v2210 = vpack.c.bf16 %v2146, %v2138
    %v2211 = vpack.c.bf16 %v2147, %v2139
    %v2212 = vpack.c.bf16 %v2148, %v2140
    %v2213 = vpack.c.bf16 %v2149, %v2141
    %v2214 = vpack.c.bf16 %v2150, %v2142
    %v2215 = vpack.c.bf16 %v2151, %v2143
    %v2216 = vpack.c.bf16 %v2152, %v2144
    %v2217 = vpack.c.bf16 %v2153, %v2145
    %v2218 = vld [vmem:[#allocation8] sm:$0xff]
    %v2219 = vld [vmem:[#allocation8 + $0x8] sm:$0xff]
    %v2220 = vld [vmem:[#allocation8 + $0x10] sm:$0xff]
    %v2221 = vld [vmem:[#allocation8 + $0x18] sm:$0xff]
    %v2222 = vld [vmem:[#allocation8 + $0x20] sm:$0xff]
    %v2223 = vld [vmem:[#allocation8 + $0x28] sm:$0xff]
    %v2224 = vld [vmem:[#allocation8 + $0x30] sm:$0xff]
    %v2225 = vld [vmem:[#allocation8 + $0x38] sm:$0xff]
    %v2226 = vld [vmem:[#allocation8 + $0x40] sm:$0xff]
    %v2227 = vld [vmem:[#allocation8 + $0x48] sm:$0xff]
    %v2228 = vld [vmem:[#allocation8 + $0x50] sm:$0xff]
    %v2229 = vld [vmem:[#allocation8 + $0x58] sm:$0xff]
    %v2230 = vld [vmem:[#allocation8 + $0x60] sm:$0xff]
    %v2231 = vld [vmem:[#allocation8 + $0x68] sm:$0xff]
    %v2232 = vld [vmem:[#allocation8 + $0x70] sm:$0xff]
    %v2233 = vld [vmem:[#allocation8 + $0x78] sm:$0xff]
    %v2234 = vld [vmem:[#allocation8 + $0x80] sm:$0xff]
    %v2235 = vld [vmem:[#allocation8 + $0x88] sm:$0xff]
    %v2236 = vld [vmem:[#allocation8 + $0x90] sm:$0xff]
    %v2237 = vld [vmem:[#allocation8 + $0x98] sm:$0xff]
    %v2238 = vld [vmem:[#allocation8 + $0xa0] sm:$0xff]
    %v2239 = vld [vmem:[#allocation8 + $0xa8] sm:$0xff]
    %v2240 = vld [vmem:[#allocation8 + $0xb0] sm:$0xff]
    %v2241 = vld [vmem:[#allocation8 + $0xb8] sm:$0xff]
    %v2242 = vld [vmem:[#allocation8 + $0xc0] sm:$0xff]
    %v2243 = vld [vmem:[#allocation8 + $0xc8] sm:$0xff]
    %v2244 = vld [vmem:[#allocation8 + $0xd0] sm:$0xff]
    %v2245 = vld [vmem:[#allocation8 + $0xd8] sm:$0xff]
    %v2246 = vld [vmem:[#allocation8 + $0xe0] sm:$0xff]
    %v2247 = vld [vmem:[#allocation8 + $0xe8] sm:$0xff]
    %v2248 = vld [vmem:[#allocation8 + $0xf0] sm:$0xff]
    %v2249 = vld [vmem:[#allocation8 + $0xf8] sm:$0xff]
    %v2250 = vld [vmem:[#allocation8 + $0x100] sm:$0xff]
    %v2251 = vld [vmem:[#allocation8 + $0x108] sm:$0xff]
    %v2252 = vld [vmem:[#allocation8 + $0x110] sm:$0xff]
    %v2253 = vld [vmem:[#allocation8 + $0x118] sm:$0xff]
    %v2254 = vld [vmem:[#allocation8 + $0x120] sm:$0xff]
    %v2255 = vld [vmem:[#allocation8 + $0x128] sm:$0xff]
    %v2256 = vld [vmem:[#allocation8 + $0x130] sm:$0xff]
    %v2257 = vld [vmem:[#allocation8 + $0x138] sm:$0xff]
    %v2258 = vld [vmem:[#allocation8 + $0x140] sm:$0xff]
    %v2259 = vld [vmem:[#allocation8 + $0x148] sm:$0xff]
    %v2260 = vld [vmem:[#allocation8 + $0x150] sm:$0xff]
    %v2261 = vld [vmem:[#allocation8 + $0x158] sm:$0xff]
    %v2262 = vld [vmem:[#allocation8 + $0x160] sm:$0xff]
    %v2263 = vld [vmem:[#allocation8 + $0x168] sm:$0xff]
    %v2264 = vld [vmem:[#allocation8 + $0x170] sm:$0xff]
    %v2265 = vld [vmem:[#allocation8 + $0x178] sm:$0xff]
    %v2266 = vld [vmem:[#allocation8 + $0x180] sm:$0xff]
    %v2267 = vld [vmem:[#allocation8 + $0x188] sm:$0xff]
    %v2268 = vld [vmem:[#allocation8 + $0x190] sm:$0xff]
    %v2269 = vld [vmem:[#allocation8 + $0x198] sm:$0xff]
    %v2270 = vld [vmem:[#allocation8 + $0x1a0] sm:$0xff]
    %v2271 = vld [vmem:[#allocation8 + $0x1a8] sm:$0xff]
    %v2272 = vld [vmem:[#allocation8 + $0x1b0] sm:$0xff]
    %v2273 = vld [vmem:[#allocation8 + $0x1b8] sm:$0xff]
    %v2274 = vld [vmem:[#allocation8 + $0x1c0] sm:$0xff]
    %v2275 = vld [vmem:[#allocation8 + $0x1c8] sm:$0xff]
    %v2276 = vld [vmem:[#allocation8 + $0x1d0] sm:$0xff]
    %v2277 = vld [vmem:[#allocation8 + $0x1d8] sm:$0xff]
    %v2278 = vld [vmem:[#allocation8 + $0x1e0] sm:$0xff]
    %v2279 = vld [vmem:[#allocation8 + $0x1e8] sm:$0xff]
    %v2280 = vld [vmem:[#allocation8 + $0x1f0] sm:$0xff]
    %v2281 = vld [vmem:[#allocation8 + $0x1f8] sm:$0xff]
    %v2282 = vld [vmem:[#allocation8 + $0x200] sm:$0xff]
    %v2283 = vld [vmem:[#allocation8 + $0x208] sm:$0xff]
    %v2284 = vld [vmem:[#allocation8 + $0x210] sm:$0xff]
    %v2285 = vld [vmem:[#allocation8 + $0x218] sm:$0xff]
    %v2286 = vld [vmem:[#allocation8 + $0x220] sm:$0xff]
    %v2287 = vld [vmem:[#allocation8 + $0x228] sm:$0xff]
    %v2288 = vld [vmem:[#allocation8 + $0x230] sm:$0xff]
    %v2289 = vld [vmem:[#allocation8 + $0x238] sm:$0xff]
    %v2290 = vld [vmem:[#allocation8 + $0x240] sm:$0xff]
    %v2291 = vld [vmem:[#allocation8 + $0x248] sm:$0xff]
    %v2292 = vld [vmem:[#allocation8 + $0x250] sm:$0xff]
    %v2293 = vld [vmem:[#allocation8 + $0x258] sm:$0xff]
    %v2294 = vld [vmem:[#allocation8 + $0x260] sm:$0xff]
    %v2295 = vld [vmem:[#allocation8 + $0x268] sm:$0xff]
    %v2296 = vld [vmem:[#allocation8 + $0x270] sm:$0xff]
    %v2297 = vld [vmem:[#allocation8 + $0x278] sm:$0xff]
    %v2298 = vld [vmem:[#allocation8 + $0x280] sm:$0xff]
    %v2299 = vld [vmem:[#allocation8 + $0x288] sm:$0xff]
    %v2300 = vld [vmem:[#allocation8 + $0x290] sm:$0xff]
    %v2301 = vld [vmem:[#allocation8 + $0x298] sm:$0xff]
    %v2302 = vld [vmem:[#allocation8 + $0x2a0] sm:$0xff]
    %v2303 = vld [vmem:[#allocation8 + $0x2a8] sm:$0xff]
    %v2304 = vld [vmem:[#allocation8 + $0x2b0] sm:$0xff]
    %v2305 = vld [vmem:[#allocation8 + $0x2b8] sm:$0xff]
    %v2306 = vld [vmem:[#allocation8 + $0x2c0] sm:$0xff]
    %v2307 = vld [vmem:[#allocation8 + $0x2c8] sm:$0xff]
    %v2308 = vld [vmem:[#allocation8 + $0x2d0] sm:$0xff]
    %v2309 = vld [vmem:[#allocation8 + $0x2d8] sm:$0xff]
    %v2310 = vld [vmem:[#allocation8 + $0x2e0] sm:$0xff]
    %v2311 = vld [vmem:[#allocation8 + $0x2e8] sm:$0xff]
    %v2312 = vld [vmem:[#allocation8 + $0x2f0] sm:$0xff]
    %v2313 = vld [vmem:[#allocation8 + $0x2f8] sm:$0xff]
    %v2314 = vld [vmem:[#allocation8 + $0x300] sm:$0xff]
    %v2315 = vld [vmem:[#allocation8 + $0x308] sm:$0xff]
    %v2316 = vld [vmem:[#allocation8 + $0x310] sm:$0xff]
    %v2317 = vld [vmem:[#allocation8 + $0x318] sm:$0xff]
    %v2318 = vld [vmem:[#allocation8 + $0x320] sm:$0xff]
    %v2319 = vld [vmem:[#allocation8 + $0x328] sm:$0xff]
    %v2320 = vld [vmem:[#allocation8 + $0x330] sm:$0xff]
    %v2321 = vld [vmem:[#allocation8 + $0x338] sm:$0xff]
    %v2322 = vld [vmem:[#allocation8 + $0x340] sm:$0xff]
    %v2323 = vld [vmem:[#allocation8 + $0x348] sm:$0xff]
    %v2324 = vld [vmem:[#allocation8 + $0x350] sm:$0xff]
    %v2325 = vld [vmem:[#allocation8 + $0x358] sm:$0xff]
    %v2326 = vld [vmem:[#allocation8 + $0x360] sm:$0xff]
    %v2327 = vld [vmem:[#allocation8 + $0x368] sm:$0xff]
    %v2328 = vld [vmem:[#allocation8 + $0x370] sm:$0xff]
    %v2329 = vld [vmem:[#allocation8 + $0x378] sm:$0xff]
    %v2330 = vld [vmem:[#allocation8 + $0x380] sm:$0xff]
    %v2331 = vld [vmem:[#allocation8 + $0x388] sm:$0xff]
    %v2332 = vld [vmem:[#allocation8 + $0x390] sm:$0xff]
    %v2333 = vld [vmem:[#allocation8 + $0x398] sm:$0xff]
    %v2334 = vld [vmem:[#allocation8 + $0x3a0] sm:$0xff]
    %v2335 = vld [vmem:[#allocation8 + $0x3a8] sm:$0xff]
    %v2336 = vld [vmem:[#allocation8 + $0x3b0] sm:$0xff]
    %v2337 = vld [vmem:[#allocation8 + $0x3b8] sm:$0xff]
    %v2338 = vld [vmem:[#allocation8 + $0x3c0] sm:$0xff]
    %v2339 = vld [vmem:[#allocation8 + $0x3c8] sm:$0xff]
    %v2340 = vld [vmem:[#allocation8 + $0x3d0] sm:$0xff]
    %v2341 = vld [vmem:[#allocation8 + $0x3d8] sm:$0xff]
    %v2342 = vld [vmem:[#allocation8 + $0x3e0] sm:$0xff]
    %v2343 = vld [vmem:[#allocation8 + $0x3e8] sm:$0xff]
    %v2344 = vld [vmem:[#allocation8 + $0x3f0] sm:$0xff]
    %v2345 = vld [vmem:[#allocation8 + $0x3f8] sm:$0xff]
    %v2346 = vld [vmem:[#allocation8 + $0x400] sm:$0xff]
    %v2347 = vld [vmem:[#allocation8 + $0x408] sm:$0xff]
    %v2348 = vld [vmem:[#allocation8 + $0x410] sm:$0xff]
    %v2349 = vld [vmem:[#allocation8 + $0x418] sm:$0xff]
    %v2350 = vld [vmem:[#allocation8 + $0x420] sm:$0xff]
    %v2351 = vld [vmem:[#allocation8 + $0x428] sm:$0xff]
    %v2352 = vld [vmem:[#allocation8 + $0x430] sm:$0xff]
    %v2353 = vld [vmem:[#allocation8 + $0x438] sm:$0xff]
    %v2354 = vld [vmem:[#allocation8 + $0x440] sm:$0xff]
    %v2355 = vld [vmem:[#allocation8 + $0x448] sm:$0xff]
    %v2356 = vld [vmem:[#allocation8 + $0x450] sm:$0xff]
    %v2357 = vld [vmem:[#allocation8 + $0x458] sm:$0xff]
    %v2358 = vld [vmem:[#allocation8 + $0x460] sm:$0xff]
    %v2359 = vld [vmem:[#allocation8 + $0x468] sm:$0xff]
    %v2360 = vld [vmem:[#allocation8 + $0x470] sm:$0xff]
    %v2361 = vld [vmem:[#allocation8 + $0x478] sm:$0xff]
    %v2362 = vld [vmem:[#allocation8 + $0x480] sm:$0xff]
    %v2363 = vld [vmem:[#allocation8 + $0x488] sm:$0xff]
    %v2364 = vld [vmem:[#allocation8 + $0x490] sm:$0xff]
    %v2365 = vld [vmem:[#allocation8 + $0x498] sm:$0xff]
    %v2366 = vld [vmem:[#allocation8 + $0x4a0] sm:$0xff]
    %v2367 = vld [vmem:[#allocation8 + $0x4a8] sm:$0xff]
    %v2368 = vld [vmem:[#allocation8 + $0x4b0] sm:$0xff]
    %v2369 = vld [vmem:[#allocation8 + $0x4b8] sm:$0xff]
    %v2370 = vld [vmem:[#allocation8 + $0x4c0] sm:$0xff]
    %v2371 = vld [vmem:[#allocation8 + $0x4c8] sm:$0xff]
    %v2372 = vld [vmem:[#allocation8 + $0x4d0] sm:$0xff]
    %v2373 = vld [vmem:[#allocation8 + $0x4d8] sm:$0xff]
    %v2374 = vld [vmem:[#allocation8 + $0x4e0] sm:$0xff]
    %v2375 = vld [vmem:[#allocation8 + $0x4e8] sm:$0xff]
    %v2376 = vld [vmem:[#allocation8 + $0x4f0] sm:$0xff]
    %v2377 = vld [vmem:[#allocation8 + $0x4f8] sm:$0xff]
    %v2378 = vld [vmem:[#allocation8 + $0x500] sm:$0xff]
    %v2379 = vld [vmem:[#allocation8 + $0x508] sm:$0xff]
    %v2380 = vld [vmem:[#allocation8 + $0x510] sm:$0xff]
    %v2381 = vld [vmem:[#allocation8 + $0x518] sm:$0xff]
    %v2382 = vld [vmem:[#allocation8 + $0x520] sm:$0xff]
    %v2383 = vld [vmem:[#allocation8 + $0x528] sm:$0xff]
    %v2384 = vld [vmem:[#allocation8 + $0x530] sm:$0xff]
    %v2385 = vld [vmem:[#allocation8 + $0x538] sm:$0xff]
    %v2386 = vld [vmem:[#allocation8 + $0x540] sm:$0xff]
    %v2387 = vld [vmem:[#allocation8 + $0x548] sm:$0xff]
    %v2388 = vld [vmem:[#allocation8 + $0x550] sm:$0xff]
    %v2389 = vld [vmem:[#allocation8 + $0x558] sm:$0xff]
    %v2390 = vld [vmem:[#allocation8 + $0x560] sm:$0xff]
    %v2391 = vld [vmem:[#allocation8 + $0x568] sm:$0xff]
    %v2392 = vld [vmem:[#allocation8 + $0x570] sm:$0xff]
    %v2393 = vld [vmem:[#allocation8 + $0x578] sm:$0xff]
    %v2394 = vld [vmem:[#allocation8 + $0x580] sm:$0xff]
    %v2395 = vld [vmem:[#allocation8 + $0x588] sm:$0xff]
    %v2396 = vld [vmem:[#allocation8 + $0x590] sm:$0xff]
    %v2397 = vld [vmem:[#allocation8 + $0x598] sm:$0xff]
    %v2398 = vld [vmem:[#allocation8 + $0x5a0] sm:$0xff]
    %v2399 = vld [vmem:[#allocation8 + $0x5a8] sm:$0xff]
    %v2400 = vld [vmem:[#allocation8 + $0x5b0] sm:$0xff]
    %v2401 = vld [vmem:[#allocation8 + $0x5b8] sm:$0xff]
    %v2402 = vld [vmem:[#allocation8 + $0x5c0] sm:$0xff]
    %v2403 = vld [vmem:[#allocation8 + $0x5c8] sm:$0xff]
    %v2404 = vld [vmem:[#allocation8 + $0x5d0] sm:$0xff]
    %v2405 = vld [vmem:[#allocation8 + $0x5d8] sm:$0xff]
    %v2406 = vld [vmem:[#allocation8 + $0x5e0] sm:$0xff]
    %v2407 = vld [vmem:[#allocation8 + $0x5e8] sm:$0xff]
    %v2408 = vld [vmem:[#allocation8 + $0x5f0] sm:$0xff]
    %v2409 = vld [vmem:[#allocation8 + $0x5f8] sm:$0xff]
    %v2410 = vld [vmem:[#allocation8 + $0x600] sm:$0xff]
    %v2411 = vld [vmem:[#allocation8 + $0x608] sm:$0xff]
    %v2412 = vld [vmem:[#allocation8 + $0x610] sm:$0xff]
    %v2413 = vld [vmem:[#allocation8 + $0x618] sm:$0xff]
    %v2414 = vld [vmem:[#allocation8 + $0x620] sm:$0xff]
    %v2415 = vld [vmem:[#allocation8 + $0x628] sm:$0xff]
    %v2416 = vld [vmem:[#allocation8 + $0x630] sm:$0xff]
    %v2417 = vld [vmem:[#allocation8 + $0x638] sm:$0xff]
    %v2418 = vld [vmem:[#allocation8 + $0x640] sm:$0xff]
    %v2419 = vld [vmem:[#allocation8 + $0x648] sm:$0xff]
    %v2420 = vld [vmem:[#allocation8 + $0x650] sm:$0xff]
    %v2421 = vld [vmem:[#allocation8 + $0x658] sm:$0xff]
    %v2422 = vld [vmem:[#allocation8 + $0x660] sm:$0xff]
    %v2423 = vld [vmem:[#allocation8 + $0x668] sm:$0xff]
    %v2424 = vld [vmem:[#allocation8 + $0x670] sm:$0xff]
    %v2425 = vld [vmem:[#allocation8 + $0x678] sm:$0xff]
    %v2426 = vld [vmem:[#allocation8 + $0x680] sm:$0xff]
    %v2427 = vld [vmem:[#allocation8 + $0x688] sm:$0xff]
    %v2428 = vld [vmem:[#allocation8 + $0x690] sm:$0xff]
    %v2429 = vld [vmem:[#allocation8 + $0x698] sm:$0xff]
    %v2430 = vld [vmem:[#allocation8 + $0x6a0] sm:$0xff]
    %v2431 = vld [vmem:[#allocation8 + $0x6a8] sm:$0xff]
    %v2432 = vld [vmem:[#allocation8 + $0x6b0] sm:$0xff]
    %v2433 = vld [vmem:[#allocation8 + $0x6b8] sm:$0xff]
    %v2434 = vld [vmem:[#allocation8 + $0x6c0] sm:$0xff]
    %v2435 = vld [vmem:[#allocation8 + $0x6c8] sm:$0xff]
    %v2436 = vld [vmem:[#allocation8 + $0x6d0] sm:$0xff]
    %v2437 = vld [vmem:[#allocation8 + $0x6d8] sm:$0xff]
    %v2438 = vld [vmem:[#allocation8 + $0x6e0] sm:$0xff]
    %v2439 = vld [vmem:[#allocation8 + $0x6e8] sm:$0xff]
    %v2440 = vld [vmem:[#allocation8 + $0x6f0] sm:$0xff]
    %v2441 = vld [vmem:[#allocation8 + $0x6f8] sm:$0xff]
    %v2442 = vld [vmem:[#allocation8 + $0x700] sm:$0xff]
    %v2443 = vld [vmem:[#allocation8 + $0x708] sm:$0xff]
    %v2444 = vld [vmem:[#allocation8 + $0x710] sm:$0xff]
    %v2445 = vld [vmem:[#allocation8 + $0x718] sm:$0xff]
    %v2446 = vld [vmem:[#allocation8 + $0x720] sm:$0xff]
    %v2447 = vld [vmem:[#allocation8 + $0x728] sm:$0xff]
    %v2448 = vld [vmem:[#allocation8 + $0x730] sm:$0xff]
    %v2449 = vld [vmem:[#allocation8 + $0x738] sm:$0xff]
    %v2450 = vld [vmem:[#allocation8 + $0x740] sm:$0xff]
    %v2451 = vld [vmem:[#allocation8 + $0x748] sm:$0xff]
    %v2452 = vld [vmem:[#allocation8 + $0x750] sm:$0xff]
    %v2453 = vld [vmem:[#allocation8 + $0x758] sm:$0xff]
    %v2454 = vld [vmem:[#allocation8 + $0x760] sm:$0xff]
    %v2455 = vld [vmem:[#allocation8 + $0x768] sm:$0xff]
    %v2456 = vld [vmem:[#allocation8 + $0x770] sm:$0xff]
    %v2457 = vld [vmem:[#allocation8 + $0x778] sm:$0xff]
    %v2458 = vld [vmem:[#allocation8 + $0x780] sm:$0xff]
    %v2459 = vld [vmem:[#allocation8 + $0x788] sm:$0xff]
    %v2460 = vld [vmem:[#allocation8 + $0x790] sm:$0xff]
    %v2461 = vld [vmem:[#allocation8 + $0x798] sm:$0xff]
    %v2462 = vld [vmem:[#allocation8 + $0x7a0] sm:$0xff]
    %v2463 = vld [vmem:[#allocation8 + $0x7a8] sm:$0xff]
    %v2464 = vld [vmem:[#allocation8 + $0x7b0] sm:$0xff]
    %v2465 = vld [vmem:[#allocation8 + $0x7b8] sm:$0xff]
    %v2466 = vld [vmem:[#allocation8 + $0x7c0] sm:$0xff]
    %v2467 = vld [vmem:[#allocation8 + $0x7c8] sm:$0xff]
    %v2468 = vld [vmem:[#allocation8 + $0x7d0] sm:$0xff]
    %v2469 = vld [vmem:[#allocation8 + $0x7d8] sm:$0xff]
    %v2470 = vld [vmem:[#allocation8 + $0x7e0] sm:$0xff]
    %v2471 = vld [vmem:[#allocation8 + $0x7e8] sm:$0xff]
    %v2472 = vld [vmem:[#allocation8 + $0x7f0] sm:$0xff]
    %v2473 = vld [vmem:[#allocation8 + $0x7f8] sm:$0xff]
    %v2474 = vld [vmem:[%s4] sm:$0xf]
    %v2476 = vlaneseq
    %v2477 = vshrl.u32 %v2476, 7
    %v2478 = vsub.s32 0, %v2477
    %v2479 = vrot.slane %v2474, %v2478
    %v2480 = vlaneseq
    %v2481 = vshrl.u32 %v2480, 7
    %v2482 = vsub.s32 1, %v2481
    %v2483 = vrot.slane %v2474, %v2482
    %v2484 = vlaneseq
    %v2485 = vshrl.u32 %v2484, 7
    %v2486 = vsub.s32 2, %v2485
    %v2487 = vrot.slane %v2474, %v2486
    %v2488 = vlaneseq
    %v2489 = vshrl.u32 %v2488, 7
    %v2490 = vsub.s32 3, %v2489
    %v2491 = vrot.slane %v2474, %v2490
    %v2752 = vunpack.c.l.b16 %v2218
    %v2753 = vunpack.c.h.b16 %v2218
    %v2754 = vunpack.c.l.b16 %v2219
    %v2755 = vunpack.c.h.b16 %v2219
    %v2756 = vunpack.c.l.b16 %v2220
    %v2757 = vunpack.c.h.b16 %v2220
    %v2758 = vunpack.c.l.b16 %v2221
    %v2759 = vunpack.c.h.b16 %v2221
    %v2760 = vunpack.c.l.b16 %v2222
    %v2761 = vunpack.c.h.b16 %v2222
    %v2762 = vunpack.c.l.b16 %v2223
    %v2763 = vunpack.c.h.b16 %v2223
    %v2764 = vunpack.c.l.b16 %v2224
    %v2765 = vunpack.c.h.b16 %v2224
    %v2766 = vunpack.c.l.b16 %v2225
    %v2767 = vunpack.c.h.b16 %v2225
    %v2768 = vunpack.c.l.b16 %v2226
    %v2769 = vunpack.c.h.b16 %v2226
    %v2770 = vunpack.c.l.b16 %v2227
    %v2771 = vunpack.c.h.b16 %v2227
    %v2772 = vunpack.c.l.b16 %v2228
    %v2773 = vunpack.c.h.b16 %v2228
    %v2774 = vunpack.c.l.b16 %v2229
    %v2775 = vunpack.c.h.b16 %v2229
    %v2776 = vunpack.c.l.b16 %v2230
    %v2777 = vunpack.c.h.b16 %v2230
    %v2778 = vunpack.c.l.b16 %v2231
    %v2779 = vunpack.c.h.b16 %v2231
    %v2780 = vunpack.c.l.b16 %v2232
    %v2781 = vunpack.c.h.b16 %v2232
    %v2782 = vunpack.c.l.b16 %v2233
    %v2783 = vunpack.c.h.b16 %v2233
    %v2784 = vunpack.c.l.b16 %v2234
    %v2785 = vunpack.c.h.b16 %v2234
    %v2786 = vunpack.c.l.b16 %v2235
    %v2787 = vunpack.c.h.b16 %v2235
    %v2788 = vunpack.c.l.b16 %v2236
    %v2789 = vunpack.c.h.b16 %v2236
    %v2790 = vunpack.c.l.b16 %v2237
    %v2791 = vunpack.c.h.b16 %v2237
    %v2792 = vunpack.c.l.b16 %v2238
    %v2793 = vunpack.c.h.b16 %v2238
    %v2794 = vunpack.c.l.b16 %v2239
    %v2795 = vunpack.c.h.b16 %v2239
    %v2796 = vunpack.c.l.b16 %v2240
    %v2797 = vunpack.c.h.b16 %v2240
    %v2798 = vunpack.c.l.b16 %v2241
    %v2799 = vunpack.c.h.b16 %v2241
    %v2800 = vunpack.c.l.b16 %v2242
    %v2801 = vunpack.c.h.b16 %v2242
    %v2802 = vunpack.c.l.b16 %v2243
    %v2803 = vunpack.c.h.b16 %v2243
    %v2804 = vunpack.c.l.b16 %v2244
    %v2805 = vunpack.c.h.b16 %v2244
    %v2806 = vunpack.c.l.b16 %v2245
    %v2807 = vunpack.c.h.b16 %v2245
    %v2808 = vunpack.c.l.b16 %v2246
    %v2809 = vunpack.c.h.b16 %v2246
    %v2810 = vunpack.c.l.b16 %v2247
    %v2811 = vunpack.c.h.b16 %v2247
    %v2812 = vunpack.c.l.b16 %v2248
    %v2813 = vunpack.c.h.b16 %v2248
    %v2814 = vunpack.c.l.b16 %v2249
    %v2815 = vunpack.c.h.b16 %v2249
    %v2816 = vunpack.c.l.b16 %v2250
    %v2817 = vunpack.c.h.b16 %v2250
    %v2818 = vunpack.c.l.b16 %v2251
    %v2819 = vunpack.c.h.b16 %v2251
    %v2820 = vunpack.c.l.b16 %v2252
    %v2821 = vunpack.c.h.b16 %v2252
    %v2822 = vunpack.c.l.b16 %v2253
    %v2823 = vunpack.c.h.b16 %v2253
    %v2824 = vunpack.c.l.b16 %v2254
    %v2825 = vunpack.c.h.b16 %v2254
    %v2826 = vunpack.c.l.b16 %v2255
    %v2827 = vunpack.c.h.b16 %v2255
    %v2828 = vunpack.c.l.b16 %v2256
    %v2829 = vunpack.c.h.b16 %v2256
    %v2830 = vunpack.c.l.b16 %v2257
    %v2831 = vunpack.c.h.b16 %v2257
    %v2832 = vunpack.c.l.b16 %v2258
    %v2833 = vunpack.c.h.b16 %v2258
    %v2834 = vunpack.c.l.b16 %v2259
    %v2835 = vunpack.c.h.b16 %v2259
    %v2836 = vunpack.c.l.b16 %v2260
    %v2837 = vunpack.c.h.b16 %v2260
    %v2838 = vunpack.c.l.b16 %v2261
    %v2839 = vunpack.c.h.b16 %v2261
    %v2840 = vunpack.c.l.b16 %v2262
    %v2841 = vunpack.c.h.b16 %v2262
    %v2842 = vunpack.c.l.b16 %v2263
    %v2843 = vunpack.c.h.b16 %v2263
    %v2844 = vunpack.c.l.b16 %v2264
    %v2845 = vunpack.c.h.b16 %v2264
    %v2846 = vunpack.c.l.b16 %v2265
    %v2847 = vunpack.c.h.b16 %v2265
    %v2848 = vunpack.c.l.b16 %v2266
    %v2849 = vunpack.c.h.b16 %v2266
    %v2850 = vunpack.c.l.b16 %v2267
    %v2851 = vunpack.c.h.b16 %v2267
    %v2852 = vunpack.c.l.b16 %v2268
    %v2853 = vunpack.c.h.b16 %v2268
    %v2854 = vunpack.c.l.b16 %v2269
    %v2855 = vunpack.c.h.b16 %v2269
    %v2856 = vunpack.c.l.b16 %v2270
    %v2857 = vunpack.c.h.b16 %v2270
    %v2858 = vunpack.c.l.b16 %v2271
    %v2859 = vunpack.c.h.b16 %v2271
    %v2860 = vunpack.c.l.b16 %v2272
    %v2861 = vunpack.c.h.b16 %v2272
    %v2862 = vunpack.c.l.b16 %v2273
    %v2863 = vunpack.c.h.b16 %v2273
    %v2864 = vunpack.c.l.b16 %v2274
    %v2865 = vunpack.c.h.b16 %v2274
    %v2866 = vunpack.c.l.b16 %v2275
    %v2867 = vunpack.c.h.b16 %v2275
    %v2868 = vunpack.c.l.b16 %v2276
    %v2869 = vunpack.c.h.b16 %v2276
    %v2870 = vunpack.c.l.b16 %v2277
    %v2871 = vunpack.c.h.b16 %v2277
    %v2872 = vunpack.c.l.b16 %v2278
    %v2873 = vunpack.c.h.b16 %v2278
    %v2874 = vunpack.c.l.b16 %v2279
    %v2875 = vunpack.c.h.b16 %v2279
    %v2876 = vunpack.c.l.b16 %v2280
    %v2877 = vunpack.c.h.b16 %v2280
    %v2878 = vunpack.c.l.b16 %v2281
    %v2879 = vunpack.c.h.b16 %v2281
    %v2880 = vunpack.c.l.b16 %v2282
    %v2881 = vunpack.c.h.b16 %v2282
    %v2882 = vunpack.c.l.b16 %v2283
    %v2883 = vunpack.c.h.b16 %v2283
    %v2884 = vunpack.c.l.b16 %v2284
    %v2885 = vunpack.c.h.b16 %v2284
    %v2886 = vunpack.c.l.b16 %v2285
    %v2887 = vunpack.c.h.b16 %v2285
    %v2888 = vunpack.c.l.b16 %v2286
    %v2889 = vunpack.c.h.b16 %v2286
    %v2890 = vunpack.c.l.b16 %v2287
    %v2891 = vunpack.c.h.b16 %v2287
    %v2892 = vunpack.c.l.b16 %v2288
    %v2893 = vunpack.c.h.b16 %v2288
    %v2894 = vunpack.c.l.b16 %v2289
    %v2895 = vunpack.c.h.b16 %v2289
    %v2896 = vunpack.c.l.b16 %v2290
    %v2897 = vunpack.c.h.b16 %v2290
    %v2898 = vunpack.c.l.b16 %v2291
    %v2899 = vunpack.c.h.b16 %v2291
    %v2900 = vunpack.c.l.b16 %v2292
    %v2901 = vunpack.c.h.b16 %v2292
    %v2902 = vunpack.c.l.b16 %v2293
    %v2903 = vunpack.c.h.b16 %v2293
    %v2904 = vunpack.c.l.b16 %v2294
    %v2905 = vunpack.c.h.b16 %v2294
    %v2906 = vunpack.c.l.b16 %v2295
    %v2907 = vunpack.c.h.b16 %v2295
    %v2908 = vunpack.c.l.b16 %v2296
    %v2909 = vunpack.c.h.b16 %v2296
    %v2910 = vunpack.c.l.b16 %v2297
    %v2911 = vunpack.c.h.b16 %v2297
    %v2912 = vunpack.c.l.b16 %v2298
    %v2913 = vunpack.c.h.b16 %v2298
    %v2914 = vunpack.c.l.b16 %v2299
    %v2915 = vunpack.c.h.b16 %v2299
    %v2916 = vunpack.c.l.b16 %v2300
    %v2917 = vunpack.c.h.b16 %v2300
    %v2918 = vunpack.c.l.b16 %v2301
    %v2919 = vunpack.c.h.b16 %v2301
    %v2920 = vunpack.c.l.b16 %v2302
    %v2921 = vunpack.c.h.b16 %v2302
    %v2922 = vunpack.c.l.b16 %v2303
    %v2923 = vunpack.c.h.b16 %v2303
    %v2924 = vunpack.c.l.b16 %v2304
    %v2925 = vunpack.c.h.b16 %v2304
    %v2926 = vunpack.c.l.b16 %v2305
    %v2927 = vunpack.c.h.b16 %v2305
    %v2928 = vunpack.c.l.b16 %v2306
    %v2929 = vunpack.c.h.b16 %v2306
    %v2930 = vunpack.c.l.b16 %v2307
    %v2931 = vunpack.c.h.b16 %v2307
    %v2932 = vunpack.c.l.b16 %v2308
    %v2933 = vunpack.c.h.b16 %v2308
    %v2934 = vunpack.c.l.b16 %v2309
    %v2935 = vunpack.c.h.b16 %v2309
    %v2936 = vunpack.c.l.b16 %v2310
    %v2937 = vunpack.c.h.b16 %v2310
    %v2938 = vunpack.c.l.b16 %v2311
    %v2939 = vunpack.c.h.b16 %v2311
    %v2940 = vunpack.c.l.b16 %v2312
    %v2941 = vunpack.c.h.b16 %v2312
    %v2942 = vunpack.c.l.b16 %v2313
    %v2943 = vunpack.c.h.b16 %v2313
    %v2944 = vunpack.c.l.b16 %v2314
    %v2945 = vunpack.c.h.b16 %v2314
    %v2946 = vunpack.c.l.b16 %v2315
    %v2947 = vunpack.c.h.b16 %v2315
    %v2948 = vunpack.c.l.b16 %v2316
    %v2949 = vunpack.c.h.b16 %v2316
    %v2950 = vunpack.c.l.b16 %v2317
    %v2951 = vunpack.c.h.b16 %v2317
    %v2952 = vunpack.c.l.b16 %v2318
    %v2953 = vunpack.c.h.b16 %v2318
    %v2954 = vunpack.c.l.b16 %v2319
    %v2955 = vunpack.c.h.b16 %v2319
    %v2956 = vunpack.c.l.b16 %v2320
    %v2957 = vunpack.c.h.b16 %v2320
    %v2958 = vunpack.c.l.b16 %v2321
    %v2959 = vunpack.c.h.b16 %v2321
    %v2960 = vunpack.c.l.b16 %v2322
    %v2961 = vunpack.c.h.b16 %v2322
    %v2962 = vunpack.c.l.b16 %v2323
    %v2963 = vunpack.c.h.b16 %v2323
    %v2964 = vunpack.c.l.b16 %v2324
    %v2965 = vunpack.c.h.b16 %v2324
    %v2966 = vunpack.c.l.b16 %v2325
    %v2967 = vunpack.c.h.b16 %v2325
    %v2968 = vunpack.c.l.b16 %v2326
    %v2969 = vunpack.c.h.b16 %v2326
    %v2970 = vunpack.c.l.b16 %v2327
    %v2971 = vunpack.c.h.b16 %v2327
    %v2972 = vunpack.c.l.b16 %v2328
    %v2973 = vunpack.c.h.b16 %v2328
    %v2974 = vunpack.c.l.b16 %v2329
    %v2975 = vunpack.c.h.b16 %v2329
    %v2976 = vunpack.c.l.b16 %v2330
    %v2977 = vunpack.c.h.b16 %v2330
    %v2978 = vunpack.c.l.b16 %v2331
    %v2979 = vunpack.c.h.b16 %v2331
    %v2980 = vunpack.c.l.b16 %v2332
    %v2981 = vunpack.c.h.b16 %v2332
    %v2982 = vunpack.c.l.b16 %v2333
    %v2983 = vunpack.c.h.b16 %v2333
    %v2984 = vunpack.c.l.b16 %v2334
    %v2985 = vunpack.c.h.b16 %v2334
    %v2986 = vunpack.c.l.b16 %v2335
    %v2987 = vunpack.c.h.b16 %v2335
    %v2988 = vunpack.c.l.b16 %v2336
    %v2989 = vunpack.c.h.b16 %v2336
    %v2990 = vunpack.c.l.b16 %v2337
    %v2991 = vunpack.c.h.b16 %v2337
    %v2992 = vunpack.c.l.b16 %v2338
    %v2993 = vunpack.c.h.b16 %v2338
    %v2994 = vunpack.c.l.b16 %v2339
    %v2995 = vunpack.c.h.b16 %v2339
    %v2996 = vunpack.c.l.b16 %v2340
    %v2997 = vunpack.c.h.b16 %v2340
    %v2998 = vunpack.c.l.b16 %v2341
    %v2999 = vunpack.c.h.b16 %v2341
    %v3000 = vunpack.c.l.b16 %v2342
    %v3001 = vunpack.c.h.b16 %v2342
    %v3002 = vunpack.c.l.b16 %v2343
    %v3003 = vunpack.c.h.b16 %v2343
    %v3004 = vunpack.c.l.b16 %v2344
    %v3005 = vunpack.c.h.b16 %v2344
    %v3006 = vunpack.c.l.b16 %v2345
    %v3007 = vunpack.c.h.b16 %v2345
    %v3008 = vunpack.c.l.b16 %v2346
    %v3009 = vunpack.c.h.b16 %v2346
    %v3010 = vunpack.c.l.b16 %v2347
    %v3011 = vunpack.c.h.b16 %v2347
    %v3012 = vunpack.c.l.b16 %v2348
    %v3013 = vunpack.c.h.b16 %v2348
    %v3014 = vunpack.c.l.b16 %v2349
    %v3015 = vunpack.c.h.b16 %v2349
    %v3016 = vunpack.c.l.b16 %v2350
    %v3017 = vunpack.c.h.b16 %v2350
    %v3018 = vunpack.c.l.b16 %v2351
    %v3019 = vunpack.c.h.b16 %v2351
    %v3020 = vunpack.c.l.b16 %v2352
    %v3021 = vunpack.c.h.b16 %v2352
    %v3022 = vunpack.c.l.b16 %v2353
    %v3023 = vunpack.c.h.b16 %v2353
    %v3024 = vunpack.c.l.b16 %v2354
    %v3025 = vunpack.c.h.b16 %v2354
    %v3026 = vunpack.c.l.b16 %v2355
    %v3027 = vunpack.c.h.b16 %v2355
    %v3028 = vunpack.c.l.b16 %v2356
    %v3029 = vunpack.c.h.b16 %v2356
    %v3030 = vunpack.c.l.b16 %v2357
    %v3031 = vunpack.c.h.b16 %v2357
    %v3032 = vunpack.c.l.b16 %v2358
    %v3033 = vunpack.c.h.b16 %v2358
    %v3034 = vunpack.c.l.b16 %v2359
    %v3035 = vunpack.c.h.b16 %v2359
    %v3036 = vunpack.c.l.b16 %v2360
    %v3037 = vunpack.c.h.b16 %v2360
    %v3038 = vunpack.c.l.b16 %v2361
    %v3039 = vunpack.c.h.b16 %v2361
    %v3040 = vunpack.c.l.b16 %v2362
    %v3041 = vunpack.c.h.b16 %v2362
    %v3042 = vunpack.c.l.b16 %v2363
    %v3043 = vunpack.c.h.b16 %v2363
    %v3044 = vunpack.c.l.b16 %v2364
    %v3045 = vunpack.c.h.b16 %v2364
    %v3046 = vunpack.c.l.b16 %v2365
    %v3047 = vunpack.c.h.b16 %v2365
    %v3048 = vunpack.c.l.b16 %v2366
    %v3049 = vunpack.c.h.b16 %v2366
    %v3050 = vunpack.c.l.b16 %v2367
    %v3051 = vunpack.c.h.b16 %v2367
    %v3052 = vunpack.c.l.b16 %v2368
    %v3053 = vunpack.c.h.b16 %v2368
    %v3054 = vunpack.c.l.b16 %v2369
    %v3055 = vunpack.c.h.b16 %v2369
    %v3056 = vunpack.c.l.b16 %v2370
    %v3057 = vunpack.c.h.b16 %v2370
    %v3058 = vunpack.c.l.b16 %v2371
    %v3059 = vunpack.c.h.b16 %v2371
    %v3060 = vunpack.c.l.b16 %v2372
    %v3061 = vunpack.c.h.b16 %v2372
    %v3062 = vunpack.c.l.b16 %v2373
    %v3063 = vunpack.c.h.b16 %v2373
    %v3064 = vunpack.c.l.b16 %v2374
    %v3065 = vunpack.c.h.b16 %v2374
    %v3066 = vunpack.c.l.b16 %v2375
    %v3067 = vunpack.c.h.b16 %v2375
    %v3068 = vunpack.c.l.b16 %v2376
    %v3069 = vunpack.c.h.b16 %v2376
    %v3070 = vunpack.c.l.b16 %v2377
    %v3071 = vunpack.c.h.b16 %v2377
    %v3072 = vunpack.c.l.b16 %v2378
    %v3073 = vunpack.c.h.b16 %v2378
    %v3074 = vunpack.c.l.b16 %v2379
    %v3075 = vunpack.c.h.b16 %v2379
    %v3076 = vunpack.c.l.b16 %v2380
    %v3077 = vunpack.c.h.b16 %v2380
    %v3078 = vunpack.c.l.b16 %v2381
    %v3079 = vunpack.c.h.b16 %v2381
    %v3080 = vunpack.c.l.b16 %v2382
    %v3081 = vunpack.c.h.b16 %v2382
    %v3082 = vunpack.c.l.b16 %v2383
    %v3083 = vunpack.c.h.b16 %v2383
    %v3084 = vunpack.c.l.b16 %v2384
    %v3085 = vunpack.c.h.b16 %v2384
    %v3086 = vunpack.c.l.b16 %v2385
    %v3087 = vunpack.c.h.b16 %v2385
    %v3088 = vunpack.c.l.b16 %v2386
    %v3089 = vunpack.c.h.b16 %v2386
    %v3090 = vunpack.c.l.b16 %v2387
    %v3091 = vunpack.c.h.b16 %v2387
    %v3092 = vunpack.c.l.b16 %v2388
    %v3093 = vunpack.c.h.b16 %v2388
    %v3094 = vunpack.c.l.b16 %v2389
    %v3095 = vunpack.c.h.b16 %v2389
    %v3096 = vunpack.c.l.b16 %v2390
    %v3097 = vunpack.c.h.b16 %v2390
    %v3098 = vunpack.c.l.b16 %v2391
    %v3099 = vunpack.c.h.b16 %v2391
    %v3100 = vunpack.c.l.b16 %v2392
    %v3101 = vunpack.c.h.b16 %v2392
    %v3102 = vunpack.c.l.b16 %v2393
    %v3103 = vunpack.c.h.b16 %v2393
    %v3104 = vunpack.c.l.b16 %v2394
    %v3105 = vunpack.c.h.b16 %v2394
    %v3106 = vunpack.c.l.b16 %v2395
    %v3107 = vunpack.c.h.b16 %v2395
    %v3108 = vunpack.c.l.b16 %v2396
    %v3109 = vunpack.c.h.b16 %v2396
    %v3110 = vunpack.c.l.b16 %v2397
    %v3111 = vunpack.c.h.b16 %v2397
    %v3112 = vunpack.c.l.b16 %v2398
    %v3113 = vunpack.c.h.b16 %v2398
    %v3114 = vunpack.c.l.b16 %v2399
    %v3115 = vunpack.c.h.b16 %v2399
    %v3116 = vunpack.c.l.b16 %v2400
    %v3117 = vunpack.c.h.b16 %v2400
    %v3118 = vunpack.c.l.b16 %v2401
    %v3119 = vunpack.c.h.b16 %v2401
    %v3120 = vunpack.c.l.b16 %v2402
    %v3121 = vunpack.c.h.b16 %v2402
    %v3122 = vunpack.c.l.b16 %v2403
    %v3123 = vunpack.c.h.b16 %v2403
    %v3124 = vunpack.c.l.b16 %v2404
    %v3125 = vunpack.c.h.b16 %v2404
    %v3126 = vunpack.c.l.b16 %v2405
    %v3127 = vunpack.c.h.b16 %v2405
    %v3128 = vunpack.c.l.b16 %v2406
    %v3129 = vunpack.c.h.b16 %v2406
    %v3130 = vunpack.c.l.b16 %v2407
    %v3131 = vunpack.c.h.b16 %v2407
    %v3132 = vunpack.c.l.b16 %v2408
    %v3133 = vunpack.c.h.b16 %v2408
    %v3134 = vunpack.c.l.b16 %v2409
    %v3135 = vunpack.c.h.b16 %v2409
    %v3136 = vunpack.c.l.b16 %v2410
    %v3137 = vunpack.c.h.b16 %v2410
    %v3138 = vunpack.c.l.b16 %v2411
    %v3139 = vunpack.c.h.b16 %v2411
    %v3140 = vunpack.c.l.b16 %v2412
    %v3141 = vunpack.c.h.b16 %v2412
    %v3142 = vunpack.c.l.b16 %v2413
    %v3143 = vunpack.c.h.b16 %v2413
    %v3144 = vunpack.c.l.b16 %v2414
    %v3145 = vunpack.c.h.b16 %v2414
    %v3146 = vunpack.c.l.b16 %v2415
    %v3147 = vunpack.c.h.b16 %v2415
    %v3148 = vunpack.c.l.b16 %v2416
    %v3149 = vunpack.c.h.b16 %v2416
    %v3150 = vunpack.c.l.b16 %v2417
    %v3151 = vunpack.c.h.b16 %v2417
    %v3152 = vunpack.c.l.b16 %v2418
    %v3153 = vunpack.c.h.b16 %v2418
    %v3154 = vunpack.c.l.b16 %v2419
    %v3155 = vunpack.c.h.b16 %v2419
    %v3156 = vunpack.c.l.b16 %v2420
    %v3157 = vunpack.c.h.b16 %v2420
    %v3158 = vunpack.c.l.b16 %v2421
    %v3159 = vunpack.c.h.b16 %v2421
    %v3160 = vunpack.c.l.b16 %v2422
    %v3161 = vunpack.c.h.b16 %v2422
    %v3162 = vunpack.c.l.b16 %v2423
    %v3163 = vunpack.c.h.b16 %v2423
    %v3164 = vunpack.c.l.b16 %v2424
    %v3165 = vunpack.c.h.b16 %v2424
    %v3166 = vunpack.c.l.b16 %v2425
    %v3167 = vunpack.c.h.b16 %v2425
    %v3168 = vunpack.c.l.b16 %v2426
    %v3169 = vunpack.c.h.b16 %v2426
    %v3170 = vunpack.c.l.b16 %v2427
    %v3171 = vunpack.c.h.b16 %v2427
    %v3172 = vunpack.c.l.b16 %v2428
    %v3173 = vunpack.c.h.b16 %v2428
    %v3174 = vunpack.c.l.b16 %v2429
    %v3175 = vunpack.c.h.b16 %v2429
    %v3176 = vunpack.c.l.b16 %v2430
    %v3177 = vunpack.c.h.b16 %v2430
    %v3178 = vunpack.c.l.b16 %v2431
    %v3179 = vunpack.c.h.b16 %v2431
    %v3180 = vunpack.c.l.b16 %v2432
    %v3181 = vunpack.c.h.b16 %v2432
    %v3182 = vunpack.c.l.b16 %v2433
    %v3183 = vunpack.c.h.b16 %v2433
    %v3184 = vunpack.c.l.b16 %v2434
    %v3185 = vunpack.c.h.b16 %v2434
    %v3186 = vunpack.c.l.b16 %v2435
    %v3187 = vunpack.c.h.b16 %v2435
    %v3188 = vunpack.c.l.b16 %v2436
    %v3189 = vunpack.c.h.b16 %v2436
    %v3190 = vunpack.c.l.b16 %v2437
    %v3191 = vunpack.c.h.b16 %v2437
    %v3192 = vunpack.c.l.b16 %v2438
    %v3193 = vunpack.c.h.b16 %v2438
    %v3194 = vunpack.c.l.b16 %v2439
    %v3195 = vunpack.c.h.b16 %v2439
    %v3196 = vunpack.c.l.b16 %v2440
    %v3197 = vunpack.c.h.b16 %v2440
    %v3198 = vunpack.c.l.b16 %v2441
    %v3199 = vunpack.c.h.b16 %v2441
    %v3200 = vunpack.c.l.b16 %v2442
    %v3201 = vunpack.c.h.b16 %v2442
    %v3202 = vunpack.c.l.b16 %v2443
    %v3203 = vunpack.c.h.b16 %v2443
    %v3204 = vunpack.c.l.b16 %v2444
    %v3205 = vunpack.c.h.b16 %v2444
    %v3206 = vunpack.c.l.b16 %v2445
    %v3207 = vunpack.c.h.b16 %v2445
    %v3208 = vunpack.c.l.b16 %v2446
    %v3209 = vunpack.c.h.b16 %v2446
    %v3210 = vunpack.c.l.b16 %v2447
    %v3211 = vunpack.c.h.b16 %v2447
    %v3212 = vunpack.c.l.b16 %v2448
    %v3213 = vunpack.c.h.b16 %v2448
    %v3214 = vunpack.c.l.b16 %v2449
    %v3215 = vunpack.c.h.b16 %v2449
    %v3216 = vunpack.c.l.b16 %v2450
    %v3217 = vunpack.c.h.b16 %v2450
    %v3218 = vunpack.c.l.b16 %v2451
    %v3219 = vunpack.c.h.b16 %v2451
    %v3220 = vunpack.c.l.b16 %v2452
    %v3221 = vunpack.c.h.b16 %v2452
    %v3222 = vunpack.c.l.b16 %v2453
    %v3223 = vunpack.c.h.b16 %v2453
    %v3224 = vunpack.c.l.b16 %v2454
    %v3225 = vunpack.c.h.b16 %v2454
    %v3226 = vunpack.c.l.b16 %v2455
    %v3227 = vunpack.c.h.b16 %v2455
    %v3228 = vunpack.c.l.b16 %v2456
    %v3229 = vunpack.c.h.b16 %v2456
    %v3230 = vunpack.c.l.b16 %v2457
    %v3231 = vunpack.c.h.b16 %v2457
    %v3232 = vunpack.c.l.b16 %v2458
    %v3233 = vunpack.c.h.b16 %v2458
    %v3234 = vunpack.c.l.b16 %v2459
    %v3235 = vunpack.c.h.b16 %v2459
    %v3236 = vunpack.c.l.b16 %v2460
    %v3237 = vunpack.c.h.b16 %v2460
    %v3238 = vunpack.c.l.b16 %v2461
    %v3239 = vunpack.c.h.b16 %v2461
    %v3240 = vunpack.c.l.b16 %v2462
    %v3241 = vunpack.c.h.b16 %v2462
    %v3242 = vunpack.c.l.b16 %v2463
    %v3243 = vunpack.c.h.b16 %v2463
    %v3244 = vunpack.c.l.b16 %v2464
    %v3245 = vunpack.c.h.b16 %v2464
    %v3246 = vunpack.c.l.b16 %v2465
    %v3247 = vunpack.c.h.b16 %v2465
    %v3248 = vunpack.c.l.b16 %v2466
    %v3249 = vunpack.c.h.b16 %v2466
    %v3250 = vunpack.c.l.b16 %v2467
    %v3251 = vunpack.c.h.b16 %v2467
    %v3252 = vunpack.c.l.b16 %v2468
    %v3253 = vunpack.c.h.b16 %v2468
    %v3254 = vunpack.c.l.b16 %v2469
    %v3255 = vunpack.c.h.b16 %v2469
    %v3256 = vunpack.c.l.b16 %v2470
    %v3257 = vunpack.c.h.b16 %v2470
    %v3258 = vunpack.c.l.b16 %v2471
    %v3259 = vunpack.c.h.b16 %v2471
    %v3260 = vunpack.c.l.b16 %v2472
    %v3261 = vunpack.c.h.b16 %v2472
    %v3262 = vunpack.c.l.b16 %v2473
    %v3263 = vunpack.c.h.b16 %v2473
    %v3264 = vpack.c.b16 %v2756, %v2752
    %v3265 = vpack.c.b16 %v2757, %v2753
    %v3266 = vpack.c.b16 %v2758, %v2754
    %v3267 = vpack.c.b16 %v2759, %v2755
    %v3268 = vpack.c.b16 %v2764, %v2760
    %v3269 = vpack.c.b16 %v2765, %v2761
    %v3270 = vpack.c.b16 %v2766, %v2762
    %v3271 = vpack.c.b16 %v2767, %v2763
    %v3272 = vpack.c.b16 %v2772, %v2768
    %v3273 = vpack.c.b16 %v2773, %v2769
    %v3274 = vpack.c.b16 %v2774, %v2770
    %v3275 = vpack.c.b16 %v2775, %v2771
    %v3276 = vpack.c.b16 %v2780, %v2776
    %v3277 = vpack.c.b16 %v2781, %v2777
    %v3278 = vpack.c.b16 %v2782, %v2778
    %v3279 = vpack.c.b16 %v2783, %v2779
    %v3280 = vpack.c.b16 %v2788, %v2784
    %v3281 = vpack.c.b16 %v2789, %v2785
    %v3282 = vpack.c.b16 %v2790, %v2786
    %v3283 = vpack.c.b16 %v2791, %v2787
    %v3284 = vpack.c.b16 %v2796, %v2792
    %v3285 = vpack.c.b16 %v2797, %v2793
    %v3286 = vpack.c.b16 %v2798, %v2794
    %v3287 = vpack.c.b16 %v2799, %v2795
    %v3288 = vpack.c.b16 %v2804, %v2800
    %v3289 = vpack.c.b16 %v2805, %v2801
    %v3290 = vpack.c.b16 %v2806, %v2802
    %v3291 = vpack.c.b16 %v2807, %v2803
    %v3292 = vpack.c.b16 %v2812, %v2808
    %v3293 = vpack.c.b16 %v2813, %v2809
    %v3294 = vpack.c.b16 %v2814, %v2810
    %v3295 = vpack.c.b16 %v2815, %v2811
    %v3296 = vpack.c.b16 %v2820, %v2816
    %v3297 = vpack.c.b16 %v2821, %v2817
    %v3298 = vpack.c.b16 %v2822, %v2818
    %v3299 = vpack.c.b16 %v2823, %v2819
    %v3300 = vpack.c.b16 %v2828, %v2824
    %v3301 = vpack.c.b16 %v2829, %v2825
    %v3302 = vpack.c.b16 %v2830, %v2826
    %v3303 = vpack.c.b16 %v2831, %v2827
    %v3304 = vpack.c.b16 %v2836, %v2832
    %v3305 = vpack.c.b16 %v2837, %v2833
    %v3306 = vpack.c.b16 %v2838, %v2834
    %v3307 = vpack.c.b16 %v2839, %v2835
    %v3308 = vpack.c.b16 %v2844, %v2840
    %v3309 = vpack.c.b16 %v2845, %v2841
    %v3310 = vpack.c.b16 %v2846, %v2842
    %v3311 = vpack.c.b16 %v2847, %v2843
    %v3312 = vpack.c.b16 %v2852, %v2848
    %v3313 = vpack.c.b16 %v2853, %v2849
    %v3314 = vpack.c.b16 %v2854, %v2850
    %v3315 = vpack.c.b16 %v2855, %v2851
    %v3316 = vpack.c.b16 %v2860, %v2856
    %v3317 = vpack.c.b16 %v2861, %v2857
    %v3318 = vpack.c.b16 %v2862, %v2858
    %v3319 = vpack.c.b16 %v2863, %v2859
    %v3320 = vpack.c.b16 %v2868, %v2864
    %v3321 = vpack.c.b16 %v2869, %v2865
    %v3322 = vpack.c.b16 %v2870, %v2866
    %v3323 = vpack.c.b16 %v2871, %v2867
    %v3324 = vpack.c.b16 %v2876, %v2872
    %v3325 = vpack.c.b16 %v2877, %v2873
    %v3326 = vpack.c.b16 %v2878, %v2874
    %v3327 = vpack.c.b16 %v2879, %v2875
    %v3328 = vpack.c.b16 %v2884, %v2880
    %v3329 = vpack.c.b16 %v2885, %v2881
    %v3330 = vpack.c.b16 %v2886, %v2882
    %v3331 = vpack.c.b16 %v2887, %v2883
    %v3332 = vpack.c.b16 %v2892, %v2888
    %v3333 = vpack.c.b16 %v2893, %v2889
    %v3334 = vpack.c.b16 %v2894, %v2890
    %v3335 = vpack.c.b16 %v2895, %v2891
    %v3336 = vpack.c.b16 %v2900, %v2896
    %v3337 = vpack.c.b16 %v2901, %v2897
    %v3338 = vpack.c.b16 %v2902, %v2898
    %v3339 = vpack.c.b16 %v2903, %v2899
    %v3340 = vpack.c.b16 %v2908, %v2904
    %v3341 = vpack.c.b16 %v2909, %v2905
    %v3342 = vpack.c.b16 %v2910, %v2906
    %v3343 = vpack.c.b16 %v2911, %v2907
    %v3344 = vpack.c.b16 %v2916, %v2912
    %v3345 = vpack.c.b16 %v2917, %v2913
    %v3346 = vpack.c.b16 %v2918, %v2914
    %v3347 = vpack.c.b16 %v2919, %v2915
    %v3348 = vpack.c.b16 %v2924, %v2920
    %v3349 = vpack.c.b16 %v2925, %v2921
    %v3350 = vpack.c.b16 %v2926, %v2922
    %v3351 = vpack.c.b16 %v2927, %v2923
    %v3352 = vpack.c.b16 %v2932, %v2928
    %v3353 = vpack.c.b16 %v2933, %v2929
    %v3354 = vpack.c.b16 %v2934, %v2930
    %v3355 = vpack.c.b16 %v2935, %v2931
    %v3356 = vpack.c.b16 %v2940, %v2936
    %v3357 = vpack.c.b16 %v2941, %v2937
    %v3358 = vpack.c.b16 %v2942, %v2938
    %v3359 = vpack.c.b16 %v2943, %v2939
    %v3360 = vpack.c.b16 %v2948, %v2944
    %v3361 = vpack.c.b16 %v2949, %v2945
    %v3362 = vpack.c.b16 %v2950, %v2946
    %v3363 = vpack.c.b16 %v2951, %v2947
    %v3364 = vpack.c.b16 %v2956, %v2952
    %v3365 = vpack.c.b16 %v2957, %v2953
    %v3366 = vpack.c.b16 %v2958, %v2954
    %v3367 = vpack.c.b16 %v2959, %v2955
    %v3368 = vpack.c.b16 %v2964, %v2960
    %v3369 = vpack.c.b16 %v2965, %v2961
    %v3370 = vpack.c.b16 %v2966, %v2962
    %v3371 = vpack.c.b16 %v2967, %v2963
    %v3372 = vpack.c.b16 %v2972, %v2968
    %v3373 = vpack.c.b16 %v2973, %v2969
    %v3374 = vpack.c.b16 %v2974, %v2970
    %v3375 = vpack.c.b16 %v2975, %v2971
    %v3376 = vpack.c.b16 %v2980, %v2976
    %v3377 = vpack.c.b16 %v2981, %v2977
    %v3378 = vpack.c.b16 %v2982, %v2978
    %v3379 = vpack.c.b16 %v2983, %v2979
    %v3380 = vpack.c.b16 %v2988, %v2984
    %v3381 = vpack.c.b16 %v2989, %v2985
    %v3382 = vpack.c.b16 %v2990, %v2986
    %v3383 = vpack.c.b16 %v2991, %v2987
    %v3384 = vpack.c.b16 %v2996, %v2992
    %v3385 = vpack.c.b16 %v2997, %v2993
    %v3386 = vpack.c.b16 %v2998, %v2994
    %v3387 = vpack.c.b16 %v2999, %v2995
    %v3388 = vpack.c.b16 %v3004, %v3000
    %v3389 = vpack.c.b16 %v3005, %v3001
    %v3390 = vpack.c.b16 %v3006, %v3002
    %v3391 = vpack.c.b16 %v3007, %v3003
    %v3392 = vpack.c.b16 %v3012, %v3008
    %v3393 = vpack.c.b16 %v3013, %v3009
    %v3394 = vpack.c.b16 %v3014, %v3010
    %v3395 = vpack.c.b16 %v3015, %v3011
    %v3396 = vpack.c.b16 %v3020, %v3016
    %v3397 = vpack.c.b16 %v3021, %v3017
    %v3398 = vpack.c.b16 %v3022, %v3018
    %v3399 = vpack.c.b16 %v3023, %v3019
    %v3400 = vpack.c.b16 %v3028, %v3024
    %v3401 = vpack.c.b16 %v3029, %v3025
    %v3402 = vpack.c.b16 %v3030, %v3026
    %v3403 = vpack.c.b16 %v3031, %v3027
    %v3404 = vpack.c.b16 %v3036, %v3032
    %v3405 = vpack.c.b16 %v3037, %v3033
    %v3406 = vpack.c.b16 %v3038, %v3034
    %v3407 = vpack.c.b16 %v3039, %v3035
    %v3408 = vpack.c.b16 %v3044, %v3040
    %v3409 = vpack.c.b16 %v3045, %v3041
    %v3410 = vpack.c.b16 %v3046, %v3042
    %v3411 = vpack.c.b16 %v3047, %v3043
    %v3412 = vpack.c.b16 %v3052, %v3048
    %v3413 = vpack.c.b16 %v3053, %v3049
    %v3414 = vpack.c.b16 %v3054, %v3050
    %v3415 = vpack.c.b16 %v3055, %v3051
    %v3416 = vpack.c.b16 %v3060, %v3056
    %v3417 = vpack.c.b16 %v3061, %v3057
    %v3418 = vpack.c.b16 %v3062, %v3058
    %v3419 = vpack.c.b16 %v3063, %v3059
    %v3420 = vpack.c.b16 %v3068, %v3064
    %v3421 = vpack.c.b16 %v3069, %v3065
    %v3422 = vpack.c.b16 %v3070, %v3066
    %v3423 = vpack.c.b16 %v3071, %v3067
    %v3424 = vpack.c.b16 %v3076, %v3072
    %v3425 = vpack.c.b16 %v3077, %v3073
    %v3426 = vpack.c.b16 %v3078, %v3074
    %v3427 = vpack.c.b16 %v3079, %v3075
    %v3428 = vpack.c.b16 %v3084, %v3080
    %v3429 = vpack.c.b16 %v3085, %v3081
    %v3430 = vpack.c.b16 %v3086, %v3082
    %v3431 = vpack.c.b16 %v3087, %v3083
    %v3432 = vpack.c.b16 %v3092, %v3088
    %v3433 = vpack.c.b16 %v3093, %v3089
    %v3434 = vpack.c.b16 %v3094, %v3090
    %v3435 = vpack.c.b16 %v3095, %v3091
    %v3436 = vpack.c.b16 %v3100, %v3096
    %v3437 = vpack.c.b16 %v3101, %v3097
    %v3438 = vpack.c.b16 %v3102, %v3098
    %v3439 = vpack.c.b16 %v3103, %v3099
    %v3440 = vpack.c.b16 %v3108, %v3104
    %v3441 = vpack.c.b16 %v3109, %v3105
    %v3442 = vpack.c.b16 %v3110, %v3106
    %v3443 = vpack.c.b16 %v3111, %v3107
    %v3444 = vpack.c.b16 %v3116, %v3112
    %v3445 = vpack.c.b16 %v3117, %v3113
    %v3446 = vpack.c.b16 %v3118, %v3114
    %v3447 = vpack.c.b16 %v3119, %v3115
    %v3448 = vpack.c.b16 %v3124, %v3120
    %v3449 = vpack.c.b16 %v3125, %v3121
    %v3450 = vpack.c.b16 %v3126, %v3122
    %v3451 = vpack.c.b16 %v3127, %v3123
    %v3452 = vpack.c.b16 %v3132, %v3128
    %v3453 = vpack.c.b16 %v3133, %v3129
    %v3454 = vpack.c.b16 %v3134, %v3130
    %v3455 = vpack.c.b16 %v3135, %v3131
    %v3456 = vpack.c.b16 %v3140, %v3136
    %v3457 = vpack.c.b16 %v3141, %v3137
    %v3458 = vpack.c.b16 %v3142, %v3138
    %v3459 = vpack.c.b16 %v3143, %v3139
    %v3460 = vpack.c.b16 %v3148, %v3144
    %v3461 = vpack.c.b16 %v3149, %v3145
    %v3462 = vpack.c.b16 %v3150, %v3146
    %v3463 = vpack.c.b16 %v3151, %v3147
    %v3464 = vpack.c.b16 %v3156, %v3152
    %v3465 = vpack.c.b16 %v3157, %v3153
    %v3466 = vpack.c.b16 %v3158, %v3154
    %v3467 = vpack.c.b16 %v3159, %v3155
    %v3468 = vpack.c.b16 %v3164, %v3160
    %v3469 = vpack.c.b16 %v3165, %v3161
    %v3470 = vpack.c.b16 %v3166, %v3162
    %v3471 = vpack.c.b16 %v3167, %v3163
    %v3472 = vpack.c.b16 %v3172, %v3168
    %v3473 = vpack.c.b16 %v3173, %v3169
    %v3474 = vpack.c.b16 %v3174, %v3170
    %v3475 = vpack.c.b16 %v3175, %v3171
    %v3476 = vpack.c.b16 %v3180, %v3176
    %v3477 = vpack.c.b16 %v3181, %v3177
    %v3478 = vpack.c.b16 %v3182, %v3178
    %v3479 = vpack.c.b16 %v3183, %v3179
    %v3480 = vpack.c.b16 %v3188, %v3184
    %v3481 = vpack.c.b16 %v3189, %v3185
    %v3482 = vpack.c.b16 %v3190, %v3186
    %v3483 = vpack.c.b16 %v3191, %v3187
    %v3484 = vpack.c.b16 %v3196, %v3192
    %v3485 = vpack.c.b16 %v3197, %v3193
    %v3486 = vpack.c.b16 %v3198, %v3194
    %v3487 = vpack.c.b16 %v3199, %v3195
    %v3488 = vpack.c.b16 %v3204, %v3200
    %v3489 = vpack.c.b16 %v3205, %v3201
    %v3490 = vpack.c.b16 %v3206, %v3202
    %v3491 = vpack.c.b16 %v3207, %v3203
    %v3492 = vpack.c.b16 %v3212, %v3208
    %v3493 = vpack.c.b16 %v3213, %v3209
    %v3494 = vpack.c.b16 %v3214, %v3210
    %v3495 = vpack.c.b16 %v3215, %v3211
    %v3496 = vpack.c.b16 %v3220, %v3216
    %v3497 = vpack.c.b16 %v3221, %v3217
    %v3498 = vpack.c.b16 %v3222, %v3218
    %v3499 = vpack.c.b16 %v3223, %v3219
    %v3500 = vpack.c.b16 %v3228, %v3224
    %v3501 = vpack.c.b16 %v3229, %v3225
    %v3502 = vpack.c.b16 %v3230, %v3226
    %v3503 = vpack.c.b16 %v3231, %v3227
    %v3504 = vpack.c.b16 %v3236, %v3232
    %v3505 = vpack.c.b16 %v3237, %v3233
    %v3506 = vpack.c.b16 %v3238, %v3234
    %v3507 = vpack.c.b16 %v3239, %v3235
    %v3508 = vpack.c.b16 %v3244, %v3240
    %v3509 = vpack.c.b16 %v3245, %v3241
    %v3510 = vpack.c.b16 %v3246, %v3242
    %v3511 = vpack.c.b16 %v3247, %v3243
    %v3512 = vpack.c.b16 %v3252, %v3248
    %v3513 = vpack.c.b16 %v3253, %v3249
    %v3514 = vpack.c.b16 %v3254, %v3250
    %v3515 = vpack.c.b16 %v3255, %v3251
    %v3516 = vpack.c.b16 %v3260, %v3256
    %v3517 = vpack.c.b16 %v3261, %v3257
    %v3518 = vpack.c.b16 %v3262, %v3258
    %v3519 = vpack.c.b16 %v3263, %v3259
    %3776 = vmatprep.subr.bf16.mxu0 %v3265
    %3777 = vmatpush1.bf16.msra.mxu0 %v3264
    %3778 = vmatprep.subr.bf16.mxu0 %v3269
    %3779 = vmatpush1.bf16.msra.mxu0 %v3268
    %3780 = vmatprep.subr.bf16.mxu0 %v3273
    %3781 = vmatpush1.bf16.msra.mxu0 %v3272
    %3782 = vmatprep.subr.bf16.mxu0 %v3277
    %3783 = vmatpush1.bf16.msra.mxu0 %v3276
    %3784 = vmatprep.subr.bf16.mxu0 %v3281
    %3785 = vmatpush1.bf16.msra.mxu0 %v3280
    %3786 = vmatprep.subr.bf16.mxu0 %v3285
    %3787 = vmatpush1.bf16.msra.mxu0 %v3284
    %3788 = vmatprep.subr.bf16.mxu0 %v3289
    %3789 = vmatpush1.bf16.msra.mxu0 %v3288
    %3790 = vmatprep.subr.bf16.mxu0 %v3293
    %3791 = vmatpush1.bf16.msra.mxu0 %v3292
    %3792 = vmatprep.subr.bf16.mxu0 %v3297
    %3793 = vmatpush1.bf16.msra.mxu0 %v3296
    %3794 = vmatprep.subr.bf16.mxu0 %v3301
    %3795 = vmatpush1.bf16.msra.mxu0 %v3300
    %3796 = vmatprep.subr.bf16.mxu0 %v3305
    %3797 = vmatpush1.bf16.msra.mxu0 %v3304
    %3798 = vmatprep.subr.bf16.mxu0 %v3309
    %3799 = vmatpush1.bf16.msra.mxu0 %v3308
    %3800 = vmatprep.subr.bf16.mxu0 %v3313
    %3801 = vmatpush1.bf16.msra.mxu0 %v3312
    %3802 = vmatprep.subr.bf16.mxu0 %v3317
    %3803 = vmatpush1.bf16.msra.mxu0 %v3316
    %3804 = vmatprep.subr.bf16.mxu0 %v3321
    %3805 = vmatpush1.bf16.msra.mxu0 %v3320
    %3806 = vmatprep.subr.bf16.mxu0 %v3325
    %3807 = vmatpush1.bf16.msra.mxu0 %v3324
    %3808 = vmatprep.mubr.bf16.mxu0 %v2155
    %3809 = vmatmul.mubr.bf16.gmra.mrb[0].mxu0 %v2154
    %v3810 = vpop.f32.mrb[0].mxu0
    %v3811 = vadd.f32 %v2479, %v3810
    %v3812 = vpop.f32.mrb[0].mxu0
    %v3813 = vadd.f32 %v2483, %v3812
    %v3814 = vpop.f32.mrb[0].mxu0
    %v3815 = vadd.f32 %v2479, %v3814
    %v3816 = vpop.f32.mrb[0].mxu0
    %v3817 = vadd.f32 %v2483, %v3816
    %3818 = vmatprep.mubr.bf16.mxu0 %v2163
    %3819 = vmatmul.mubr.bf16.gmra.mrb[0].mxu0 %v2162
    %v3820 = vpop.f32.mrb[0].mxu0
    %v3821 = vadd.f32 %v2479, %v3820
    %v3822 = vpop.f32.mrb[0].mxu0
    %v3823 = vadd.f32 %v2483, %v3822
    %v3824 = vpop.f32.mrb[0].mxu0
    %v3825 = vadd.f32 %v2479, %v3824
    %v3826 = vpop.f32.mrb[0].mxu0
    %v3827 = vadd.f32 %v2483, %v3826
    %3828 = vmatprep.mubr.bf16.mxu0 %v2171
    %3829 = vmatmul.mubr.bf16.gmra.mrb[0].mxu0 %v2170
    %v3830 = vpop.f32.mrb[0].mxu0
    %v3831 = vadd.f32 %v2479, %v3830
    %v3832 = vpop.f32.mrb[0].mxu0
    %v3833 = vadd.f32 %v2483, %v3832
    %v3834 = vpop.f32.mrb[0].mxu0
    %v3835 = vadd.f32 %v2479, %v3834
    %v3836 = vpop.f32.mrb[0].mxu0
    %v3837 = vadd.f32 %v2483, %v3836
    %3838 = vmatprep.mubr.bf16.mxu0 %v2179
    %3839 = vmatmul.mubr.bf16.gmra.mrb[0].mxu0 %v2178
    %v3840 = vpop.f32.mrb[0].mxu0
    %v3841 = vadd.f32 %v2479, %v3840
    %v3842 = vpop.f32.mrb[0].mxu0
    %v3843 = vadd.f32 %v2483, %v3842
    %v3844 = vpop.f32.mrb[0].mxu0
    %v3845 = vadd.f32 %v2479, %v3844
    %v3846 = vpop.f32.mrb[0].mxu0
    %v3847 = vadd.f32 %v2483, %v3846
    %3848 = vmatprep.mubr.bf16.mxu0 %v2187
    %3849 = vmatmul.mubr.bf16.gmra.mrb[0].mxu0 %v2186
    %v3850 = vpop.f32.mrb[0].mxu0
    %v3851 = vadd.f32 %v2479, %v3850
    %v3852 = vpop.f32.mrb[0].mxu0
    %v3853 = vadd.f32 %v2483, %v3852
    %v3854 = vpop.f32.mrb[0].mxu0
    %v3855 = vadd.f32 %v2479, %v3854
    %v3856 = vpop.f32.mrb[0].mxu0
    %v3857 = vadd.f32 %v2483, %v3856
    %3858 = vmatprep.mubr.bf16.mxu0 %v2195
    %3859 = vmatmul.mubr.bf16.gmra.mrb[0].mxu0 %v2194
    %v3860 = vpop.f32.mrb[0].mxu0
    %v3861 = vadd.f32 %v2479, %v3860
    %v3862 = vpop.f32.mrb[0].mxu0
    %v3863 = vadd.f32 %v2483, %v3862
    %v3864 = vpop.f32.mrb[0].mxu0
    %v3865 = vadd.f32 %v2479, %v3864
    %v3866 = vpop.f32.mrb[0].mxu0
    %v3867 = vadd.f32 %v2483, %v3866
    %3868 = vmatprep.mubr.bf16.mxu0 %v2203
    %3869 = vmatmul.mubr.bf16.gmra.mrb[0].mxu0 %v2202
    %v3870 = vpop.f32.mrb[0].mxu0
    %v3871 = vadd.f32 %v2479, %v3870
    %v3872 = vpop.f32.mrb[0].mxu0
    %v3873 = vadd.f32 %v2483, %v3872
    %v3874 = vpop.f32.mrb[0].mxu0
    %v3875 = vadd.f32 %v2479, %v3874
    %v3876 = vpop.f32.mrb[0].mxu0
    %v3877 = vadd.f32 %v2483, %v3876
    %3878 = vmatprep.mubr.bf16.mxu0 %v2211
    %3879 = vmatmul.mubr.bf16.gmra.mrb[0].mxu0 %v2210
    %v3880 = vpop.f32.mrb[0].mxu0
    %v3881 = vadd.f32 %v2479, %v3880
    %v3882 = vpop.f32.mrb[0].mxu0
    %v3883 = vadd.f32 %v2483, %v3882
    %v3884 = vpop.f32.mrb[0].mxu0
    %v3885 = vadd.f32 %v2479, %v3884
    %v3886 = vpop.f32.mrb[0].mxu0
    %v3887 = vadd.f32 %v2483, %v3886
    %3888 = vdwg.mxu0
    %3889 = vmatprep.subr.bf16.mxu0 %v3329
    %3890 = vmatpush1.bf16.msra.mxu0 %v3328
    %3891 = vmatprep.subr.bf16.mxu0 %v3333
    %3892 = vmatpush1.bf16.msra.mxu0 %v3332
    %3893 = vmatprep.subr.bf16.mxu0 %v3337
    %3894 = vmatpush1.bf16.msra.mxu0 %v3336
    %3895 = vmatprep.subr.bf16.mxu0 %v3341
    %3896 = vmatpush1.bf16.msra.mxu0 %v3340
    %3897 = vmatprep.subr.bf16.mxu0 %v3345
    %3898 = vmatpush1.bf16.msra.mxu0 %v3344
    %3899 = vmatprep.subr.bf16.mxu0 %v3349
    %3900 = vmatpush1.bf16.msra.mxu0 %v3348
    %3901 = vmatprep.subr.bf16.mxu0 %v3353
    %3902 = vmatpush1.bf16.msra.mxu0 %v3352
    %3903 = vmatprep.subr.bf16.mxu0 %v3357
    %3904 = vmatpush1.bf16.msra.mxu0 %v3356
    %3905 = vmatprep.subr.bf16.mxu0 %v3361
    %3906 = vmatpush1.bf16.msra.mxu0 %v3360
    %3907 = vmatprep.subr.bf16.mxu0 %v3365
    %3908 = vmatpush1.bf16.msra.mxu0 %v3364
    %3909 = vmatprep.subr.bf16.mxu0 %v3369
    %3910 = vmatpush1.bf16.msra.mxu0 %v3368
    %3911 = vmatprep.subr.bf16.mxu0 %v3373
    %3912 = vmatpush1.bf16.msra.mxu0 %v3372
    %3913 = vmatprep.subr.bf16.mxu0 %v3377
    %3914 = vmatpush1.bf16.msra.mxu0 %v3376
    %3915 = vmatprep.subr.bf16.mxu0 %v3381
    %3916 = vmatpush1.bf16.msra.mxu0 %v3380
    %3917 = vmatprep.subr.bf16.mxu0 %v3385
    %3918 = vmatpush1.bf16.msra.mxu0 %v3384
    %3919 = vmatprep.subr.bf16.mxu0 %v3389
    %3920 = vmatpush1.bf16.msra.mxu0 %v3388
    %3921 = vmatprep.mubr.bf16.mxu0 %v2157
    %3922 = vmatmul.mubr.bf16.gmra.mrb[0].mxu0 %v2156
    %v3923 = vpop.f32.mrb[0].mxu0
    %v3924 = vadd.f32 %v3811, %v3923
    %v3925 = vpop.f32.mrb[0].mxu0
    %v3926 = vadd.f32 %v3813, %v3925
    %v3927 = vpop.f32.mrb[0].mxu0
    %v3928 = vadd.f32 %v3815, %v3927
    %v3929 = vpop.f32.mrb[0].mxu0
    %v3930 = vadd.f32 %v3817, %v3929
    %3931 = vmatprep.mubr.bf16.mxu0 %v2165
    %3932 = vmatmul.mubr.bf16.gmra.mrb[0].mxu0 %v2164
    %v3933 = vpop.f32.mrb[0].mxu0
    %v3934 = vadd.f32 %v3821, %v3933
    %v3935 = vpop.f32.mrb[0].mxu0
    %v3936 = vadd.f32 %v3823, %v3935
    %v3937 = vpop.f32.mrb[0].mxu0
    %v3938 = vadd.f32 %v3825, %v3937
    %v3939 = vpop.f32.mrb[0].mxu0
    %v3940 = vadd.f32 %v3827, %v3939
    %3941 = vmatprep.mubr.bf16.mxu0 %v2173
    %3942 = vmatmul.mubr.bf16.gmra.mrb[0].mxu0 %v2172
    %v3943 = vpop.f32.mrb[0].mxu0
    %v3944 = vadd.f32 %v3831, %v3943
    %v3945 = vpop.f32.mrb[0].mxu0
    %v3946 = vadd.f32 %v3833, %v3945
    %v3947 = vpop.f32.mrb[0].mxu0
    %v3948 = vadd.f32 %v3835, %v3947
    %v3949 = vpop.f32.mrb[0].mxu0
    %v3950 = vadd.f32 %v3837, %v3949
    %3951 = vmatprep.mubr.bf16.mxu0 %v2181
    %3952 = vmatmul.mubr.bf16.gmra.mrb[0].mxu0 %v2180
    %v3953 = vpop.f32.mrb[0].mxu0
    %v3954 = vadd.f32 %v3841, %v3953
    %v3955 = vpop.f32.mrb[0].mxu0
    %v3956 = vadd.f32 %v3843, %v3955
    %v3957 = vpop.f32.mrb[0].mxu0
    %v3958 = vadd.f32 %v3845, %v3957
    %v3959 = vpop.f32.mrb[0].mxu0
    %v3960 = vadd.f32 %v3847, %v3959
    %3961 = vmatprep.mubr.bf16.mxu0 %v2189
    %3962 = vmatmul.mubr.bf16.gmra.mrb[0].mxu0 %v2188
    %v3963 = vpop.f32.mrb[0].mxu0
    %v3964 = vadd.f32 %v3851, %v3963
    %v3965 = vpop.f32.mrb[0].mxu0
    %v3966 = vadd.f32 %v3853, %v3965
    %v3967 = vpop.f32.mrb[0].mxu0
    %v3968 = vadd.f32 %v3855, %v3967
    %v3969 = vpop.f32.mrb[0].mxu0
    %v3970 = vadd.f32 %v3857, %v3969
    %3971 = vmatprep.mubr.bf16.mxu0 %v2197
    %3972 = vmatmul.mubr.bf16.gmra.mrb[0].mxu0 %v2196
    %v3973 = vpop.f32.mrb[0].mxu0
    %v3974 = vadd.f32 %v3861, %v3973
    %v3975 = vpop.f32.mrb[0].mxu0
    %v3976 = vadd.f32 %v3863, %v3975
    %v3977 = vpop.f32.mrb[0].mxu0
    %v3978 = vadd.f32 %v3865, %v3977
    %v3979 = vpop.f32.mrb[0].mxu0
    %v3980 = vadd.f32 %v3867, %v3979
    %3981 = vmatprep.mubr.bf16.mxu0 %v2205
    %3982 = vmatmul.mubr.bf16.gmra.mrb[0].mxu0 %v2204
    %v3983 = vpop.f32.mrb[0].mxu0
    %v3984 = vadd.f32 %v3871, %v3983
    %v3985 = vpop.f32.mrb[0].mxu0
    %v3986 = vadd.f32 %v3873, %v3985
    %v3987 = vpop.f32.mrb[0].mxu0
    %v3988 = vadd.f32 %v3875, %v3987
    %v3989 = vpop.f32.mrb[0].mxu0
    %v3990 = vadd.f32 %v3877, %v3989
    %3991 = vmatprep.mubr.bf16.mxu0 %v2213
    %3992 = vmatmul.mubr.bf16.gmra.mrb[0].mxu0 %v2212
    %v3993 = vpop.f32.mrb[0].mxu0
    %v3994 = vadd.f32 %v3881, %v3993
    %v3995 = vpop.f32.mrb[0].mxu0
    %v3996 = vadd.f32 %v3883, %v3995
    %v3997 = vpop.f32.mrb[0].mxu0
    %v3998 = vadd.f32 %v3885, %v3997
    %v3999 = vpop.f32.mrb[0].mxu0
    %v4000 = vadd.f32 %v3887, %v3999
    %4001 = vdwg.mxu0
    %4002 = vmatprep.subr.bf16.mxu0 %v3393
    %4003 = vmatpush1.bf16.msra.mxu0 %v3392
    %4004 = vmatprep.subr.bf16.mxu0 %v3397
    %4005 = vmatpush1.bf16.msra.mxu0 %v3396
    %4006 = vmatprep.subr.bf16.mxu0 %v3401
    %4007 = vmatpush1.bf16.msra.mxu0 %v3400
    %4008 = vmatprep.subr.bf16.mxu0 %v3405
    %4009 = vmatpush1.bf16.msra.mxu0 %v3404
    %4010 = vmatprep.subr.bf16.mxu0 %v3409
    %4011 = vmatpush1.bf16.msra.mxu0 %v3408
    %4012 = vmatprep.subr.bf16.mxu0 %v3413
    %4013 = vmatpush1.bf16.msra.mxu0 %v3412
    %4014 = vmatprep.subr.bf16.mxu0 %v3417
    %4015 = vmatpush1.bf16.msra.mxu0 %v3416
    %4016 = vmatprep.subr.bf16.mxu0 %v3421
    %4017 = vmatpush1.bf16.msra.mxu0 %v3420
    %4018 = vmatprep.subr.bf16.mxu0 %v3425
    %4019 = vmatpush1.bf16.msra.mxu0 %v3424
    %4020 = vmatprep.subr.bf16.mxu0 %v3429
    %4021 = vmatpush1.bf16.msra.mxu0 %v3428
    %4022 = vmatprep.subr.bf16.mxu0 %v3433
    %4023 = vmatpush1.bf16.msra.mxu0 %v3432
    %4024 = vmatprep.subr.bf16.mxu0 %v3437
    %4025 = vmatpush1.bf16.msra.mxu0 %v3436
    %4026 = vmatprep.subr.bf16.mxu0 %v3441
    %4027 = vmatpush1.bf16.msra.mxu0 %v3440
    %4028 = vmatprep.subr.bf16.mxu0 %v3445
    %4029 = vmatpush1.bf16.msra.mxu0 %v3444
    %4030 = vmatprep.subr.bf16.mxu0 %v3449
    %4031 = vmatpush1.bf16.msra.mxu0 %v3448
    %4032 = vmatprep.subr.bf16.mxu0 %v3453
    %4033 = vmatpush1.bf16.msra.mxu0 %v3452
    %4034 = vmatprep.mubr.bf16.mxu0 %v2159
    %4035 = vmatmul.mubr.bf16.gmra.mrb[0].mxu0 %v2158
    %v4036 = vpop.f32.mrb[0].mxu0
    %v4037 = vadd.f32 %v3924, %v4036
    %v4038 = vpop.f32.mrb[0].mxu0
    %v4039 = vadd.f32 %v3926, %v4038
    %v4040 = vpop.f32.mrb[0].mxu0
    %v4041 = vadd.f32 %v3928, %v4040
    %v4042 = vpop.f32.mrb[0].mxu0
    %v4043 = vadd.f32 %v3930, %v4042
    %4044 = vmatprep.mubr.bf16.mxu0 %v2167
    %4045 = vmatmul.mubr.bf16.gmra.mrb[0].mxu0 %v2166
    %v4046 = vpop.f32.mrb[0].mxu0
    %v4047 = vadd.f32 %v3934, %v4046
    %v4048 = vpop.f32.mrb[0].mxu0
    %v4049 = vadd.f32 %v3936, %v4048
    %v4050 = vpop.f32.mrb[0].mxu0
    %v4051 = vadd.f32 %v3938, %v4050
    %v4052 = vpop.f32.mrb[0].mxu0
    %v4053 = vadd.f32 %v3940, %v4052
    %4054 = vmatprep.mubr.bf16.mxu0 %v2175
    %4055 = vmatmul.mubr.bf16.gmra.mrb[0].mxu0 %v2174
    %v4056 = vpop.f32.mrb[0].mxu0
    %v4057 = vadd.f32 %v3944, %v4056
    %v4058 = vpop.f32.mrb[0].mxu0
    %v4059 = vadd.f32 %v3946, %v4058
    %v4060 = vpop.f32.mrb[0].mxu0
    %v4061 = vadd.f32 %v3948, %v4060
    %v4062 = vpop.f32.mrb[0].mxu0
    %v4063 = vadd.f32 %v3950, %v4062
    %4064 = vmatprep.mubr.bf16.mxu0 %v2183
    %4065 = vmatmul.mubr.bf16.gmra.mrb[0].mxu0 %v2182
    %v4066 = vpop.f32.mrb[0].mxu0
    %v4067 = vadd.f32 %v3954, %v4066
    %v4068 = vpop.f32.mrb[0].mxu0
    %v4069 = vadd.f32 %v3956, %v4068
    %v4070 = vpop.f32.mrb[0].mxu0
    %v4071 = vadd.f32 %v3958, %v4070
    %v4072 = vpop.f32.mrb[0].mxu0
    %v4073 = vadd.f32 %v3960, %v4072
    %4074 = vmatprep.mubr.bf16.mxu0 %v2191
    %4075 = vmatmul.mubr.bf16.gmra.mrb[0].mxu0 %v2190
    %v4076 = vpop.f32.mrb[0].mxu0
    %v4077 = vadd.f32 %v3964, %v4076
    %v4078 = vpop.f32.mrb[0].mxu0
    %v4079 = vadd.f32 %v3966, %v4078
    %v4080 = vpop.f32.mrb[0].mxu0
    %v4081 = vadd.f32 %v3968, %v4080
    %v4082 = vpop.f32.mrb[0].mxu0
    %v4083 = vadd.f32 %v3970, %v4082
    %4084 = vmatprep.mubr.bf16.mxu0 %v2199
    %4085 = vmatmul.mubr.bf16.gmra.mrb[0].mxu0 %v2198
    %v4086 = vpop.f32.mrb[0].mxu0
    %v4087 = vadd.f32 %v3974, %v4086
    %v4088 = vpop.f32.mrb[0].mxu0
    %v4089 = vadd.f32 %v3976, %v4088
    %v4090 = vpop.f32.mrb[0].mxu0
    %v4091 = vadd.f32 %v3978, %v4090
    %v4092 = vpop.f32.mrb[0].mxu0
    %v4093 = vadd.f32 %v3980, %v4092
    %4094 = vmatprep.mubr.bf16.mxu0 %v2207
    %4095 = vmatmul.mubr.bf16.gmra.mrb[0].mxu0 %v2206
    %v4096 = vpop.f32.mrb[0].mxu0
    %v4097 = vadd.f32 %v3984, %v4096
    %v4098 = vpop.f32.mrb[0].mxu0
    %v4099 = vadd.f32 %v3986, %v4098
    %v4100 = vpop.f32.mrb[0].mxu0
    %v4101 = vadd.f32 %v3988, %v4100
    %v4102 = vpop.f32.mrb[0].mxu0
    %v4103 = vadd.f32 %v3990, %v4102
    %4104 = vmatprep.mubr.bf16.mxu0 %v2215
    %4105 = vmatmul.mubr.bf16.gmra.mrb[0].mxu0 %v2214
    %v4106 = vpop.f32.mrb[0].mxu0
    %v4107 = vadd.f32 %v3994, %v4106
    %v4108 = vpop.f32.mrb[0].mxu0
    %v4109 = vadd.f32 %v3996, %v4108
    %v4110 = vpop.f32.mrb[0].mxu0
    %v4111 = vadd.f32 %v3998, %v4110
    %v4112 = vpop.f32.mrb[0].mxu0
    %v4113 = vadd.f32 %v4000, %v4112
    %4114 = vdwg.mxu0
    %4115 = vmatprep.subr.bf16.mxu0 %v3457
    %4116 = vmatpush1.bf16.msra.mxu0 %v3456
    %4117 = vmatprep.subr.bf16.mxu0 %v3461
    %4118 = vmatpush1.bf16.msra.mxu0 %v3460
    %4119 = vmatprep.subr.bf16.mxu0 %v3465
    %4120 = vmatpush1.bf16.msra.mxu0 %v3464
    %4121 = vmatprep.subr.bf16.mxu0 %v3469
    %4122 = vmatpush1.bf16.msra.mxu0 %v3468
    %4123 = vmatprep.subr.bf16.mxu0 %v3473
    %4124 = vmatpush1.bf16.msra.mxu0 %v3472
    %4125 = vmatprep.subr.bf16.mxu0 %v3477
    %4126 = vmatpush1.bf16.msra.mxu0 %v3476
    %4127 = vmatprep.subr.bf16.mxu0 %v3481
    %4128 = vmatpush1.bf16.msra.mxu0 %v3480
    %4129 = vmatprep.subr.bf16.mxu0 %v3485
    %4130 = vmatpush1.bf16.msra.mxu0 %v3484
    %4131 = vmatprep.subr.bf16.mxu0 %v3489
    %4132 = vmatpush1.bf16.msra.mxu0 %v3488
    %4133 = vmatprep.subr.bf16.mxu0 %v3493
    %4134 = vmatpush1.bf16.msra.mxu0 %v3492
    %4135 = vmatprep.subr.bf16.mxu0 %v3497
    %4136 = vmatpush1.bf16.msra.mxu0 %v3496
    %4137 = vmatprep.subr.bf16.mxu0 %v3501
    %4138 = vmatpush1.bf16.msra.mxu0 %v3500
    %4139 = vmatprep.subr.bf16.mxu0 %v3505
    %4140 = vmatpush1.bf16.msra.mxu0 %v3504
    %4141 = vmatprep.subr.bf16.mxu0 %v3509
    %4142 = vmatpush1.bf16.msra.mxu0 %v3508
    %4143 = vmatprep.subr.bf16.mxu0 %v3513
    %4144 = vmatpush1.bf16.msra.mxu0 %v3512
    %4145 = vmatprep.subr.bf16.mxu0 %v3517
    %4146 = vmatpush1.bf16.msra.mxu0 %v3516
    %4147 = vmatprep.mubr.bf16.mxu0 %v2161
    %4148 = vmatmul.mubr.bf16.gmra.mrb[0].mxu0 %v2160
    %v4149 = vpop.f32.mrb[0].mxu0
    %v4150 = vadd.f32 %v4037, %v4149
    %v4151 = vpop.f32.mrb[0].mxu0
    %v4152 = vadd.f32 %v4039, %v4151
    %v4153 = vpop.f32.mrb[0].mxu0
    %v4154 = vadd.f32 %v4041, %v4153
    %v4155 = vpop.f32.mrb[0].mxu0
    %v4156 = vadd.f32 %v4043, %v4155
    %4157 = vmatprep.mubr.bf16.mxu0 %v2169
    %4158 = vmatmul.mubr.bf16.gmra.mrb[0].mxu0 %v2168
    %v4159 = vpop.f32.mrb[0].mxu0
    %v4160 = vadd.f32 %v4047, %v4159
    %v4161 = vpop.f32.mrb[0].mxu0
    %v4162 = vadd.f32 %v4049, %v4161
    %v4163 = vpop.f32.mrb[0].mxu0
    %v4164 = vadd.f32 %v4051, %v4163
    %v4165 = vpop.f32.mrb[0].mxu0
    %v4166 = vadd.f32 %v4053, %v4165
    %4167 = vmatprep.mubr.bf16.mxu0 %v2177
    %4168 = vmatmul.mubr.bf16.gmra.mrb[0].mxu0 %v2176
    %v4169 = vpop.f32.mrb[0].mxu0
    %v4170 = vadd.f32 %v4057, %v4169
    %v4171 = vpop.f32.mrb[0].mxu0
    %v4172 = vadd.f32 %v4059, %v4171
    %v4173 = vpop.f32.mrb[0].mxu0
    %v4174 = vadd.f32 %v4061, %v4173
    %v4175 = vpop.f32.mrb[0].mxu0
    %v4176 = vadd.f32 %v4063, %v4175
    %4177 = vmatprep.mubr.bf16.mxu0 %v2185
    %4178 = vmatmul.mubr.bf16.gmra.mrb[0].mxu0 %v2184
    %v4179 = vpop.f32.mrb[0].mxu0
    %v4180 = vadd.f32 %v4067, %v4179
    %v4181 = vpop.f32.mrb[0].mxu0
    %v4182 = vadd.f32 %v4069, %v4181
    %v4183 = vpop.f32.mrb[0].mxu0
    %v4184 = vadd.f32 %v4071, %v4183
    %v4185 = vpop.f32.mrb[0].mxu0
    %v4186 = vadd.f32 %v4073, %v4185
    %4187 = vmatprep.mubr.bf16.mxu0 %v2193
    %4188 = vmatmul.mubr.bf16.gmra.mrb[0].mxu0 %v2192
    %v4189 = vpop.f32.mrb[0].mxu0
    %v4190 = vadd.f32 %v4077, %v4189
    %v4191 = vpop.f32.mrb[0].mxu0
    %v4192 = vadd.f32 %v4079, %v4191
    %v4193 = vpop.f32.mrb[0].mxu0
    %v4194 = vadd.f32 %v4081, %v4193
    %v4195 = vpop.f32.mrb[0].mxu0
    %v4196 = vadd.f32 %v4083, %v4195
    %4197 = vmatprep.mubr.bf16.mxu0 %v2201
    %4198 = vmatmul.mubr.bf16.gmra.mrb[0].mxu0 %v2200
    %v4199 = vpop.f32.mrb[0].mxu0
    %v4200 = vadd.f32 %v4087, %v4199
    %v4201 = vpop.f32.mrb[0].mxu0
    %v4202 = vadd.f32 %v4089, %v4201
    %v4203 = vpop.f32.mrb[0].mxu0
    %v4204 = vadd.f32 %v4091, %v4203
    %v4205 = vpop.f32.mrb[0].mxu0
    %v4206 = vadd.f32 %v4093, %v4205
    %4207 = vmatprep.mubr.bf16.mxu0 %v2209
    %4208 = vmatmul.mubr.bf16.gmra.mrb[0].mxu0 %v2208
    %v4209 = vpop.f32.mrb[0].mxu0
    %v4210 = vadd.f32 %v4097, %v4209
    %v4211 = vpop.f32.mrb[0].mxu0
    %v4212 = vadd.f32 %v4099, %v4211
    %v4213 = vpop.f32.mrb[0].mxu0
    %v4214 = vadd.f32 %v4101, %v4213
    %v4215 = vpop.f32.mrb[0].mxu0
    %v4216 = vadd.f32 %v4103, %v4215
    %4217 = vmatprep.mubr.bf16.mxu0 %v2217
    %4218 = vmatmul.mubr.bf16.gmra.mrb[0].mxu0 %v2216
    %v4219 = vpop.f32.mrb[0].mxu0
    %v4220 = vadd.f32 %v4107, %v4219
    %v4221 = vpop.f32.mrb[0].mxu0
    %v4222 = vadd.f32 %v4109, %v4221
    %v4223 = vpop.f32.mrb[0].mxu0
    %v4224 = vadd.f32 %v4111, %v4223
    %v4225 = vpop.f32.mrb[0].mxu0
    %v4226 = vadd.f32 %v4113, %v4225
    %4227 = vdwg.mxu0
    %4228 = vmatprep.subr.bf16.mxu0 %v3267
    %4229 = vmatpush1.bf16.msra.mxu0 %v3266
    %4230 = vmatprep.subr.bf16.mxu0 %v3271
    %4231 = vmatpush1.bf16.msra.mxu0 %v3270
    %4232 = vmatprep.subr.bf16.mxu0 %v3275
    %4233 = vmatpush1.bf16.msra.mxu0 %v3274
    %4234 = vmatprep.subr.bf16.mxu0 %v3279
    %4235 = vmatpush1.bf16.msra.mxu0 %v3278
    %4236 = vmatprep.subr.bf16.mxu0 %v3283
    %4237 = vmatpush1.bf16.msra.mxu0 %v3282
    %4238 = vmatprep.subr.bf16.mxu0 %v3287
    %4239 = vmatpush1.bf16.msra.mxu0 %v3286
    %4240 = vmatprep.subr.bf16.mxu0 %v3291
    %4241 = vmatpush1.bf16.msra.mxu0 %v3290
    %4242 = vmatprep.subr.bf16.mxu0 %v3295
    %4243 = vmatpush1.bf16.msra.mxu0 %v3294
    %4244 = vmatprep.subr.bf16.mxu0 %v3299
    %4245 = vmatpush1.bf16.msra.mxu0 %v3298
    %4246 = vmatprep.subr.bf16.mxu0 %v3303
    %4247 = vmatpush1.bf16.msra.mxu0 %v3302
    %4248 = vmatprep.subr.bf16.mxu0 %v3307
    %4249 = vmatpush1.bf16.msra.mxu0 %v3306
    %4250 = vmatprep.subr.bf16.mxu0 %v3311
    %4251 = vmatpush1.bf16.msra.mxu0 %v3310
    %4252 = vmatprep.subr.bf16.mxu0 %v3315
    %4253 = vmatpush1.bf16.msra.mxu0 %v3314
    %4254 = vmatprep.subr.bf16.mxu0 %v3319
    %4255 = vmatpush1.bf16.msra.mxu0 %v3318
    %4256 = vmatprep.subr.bf16.mxu0 %v3323
    %4257 = vmatpush1.bf16.msra.mxu0 %v3322
    %4258 = vmatprep.subr.bf16.mxu0 %v3327
    %4259 = vmatpush1.bf16.msra.mxu0 %v3326
    %4260 = vmatprep.mubr.bf16.mxu0 %v2155
    %4261 = vmatmul.mubr.bf16.gmra.mrb[0].mxu0 %v2154
    %v4262 = vpop.f32.mrb[0].mxu0
    %v4263 = vadd.f32 %v2487, %v4262
    %v4264 = vpop.f32.mrb[0].mxu0
    %v4265 = vadd.f32 %v2491, %v4264
    %v4266 = vpop.f32.mrb[0].mxu0
    %v4267 = vadd.f32 %v2487, %v4266
    %v4268 = vpop.f32.mrb[0].mxu0
    %v4269 = vadd.f32 %v2491, %v4268
    %4270 = vmatprep.mubr.bf16.mxu0 %v2163
    %4271 = vmatmul.mubr.bf16.gmra.mrb[0].mxu0 %v2162
    %v4272 = vpop.f32.mrb[0].mxu0
    %v4273 = vadd.f32 %v2487, %v4272
    %v4274 = vpop.f32.mrb[0].mxu0
    %v4275 = vadd.f32 %v2491, %v4274
    %v4276 = vpop.f32.mrb[0].mxu0
    %v4277 = vadd.f32 %v2487, %v4276
    %v4278 = vpop.f32.mrb[0].mxu0
    %v4279 = vadd.f32 %v2491, %v4278
    %4280 = vmatprep.mubr.bf16.mxu0 %v2171
    %4281 = vmatmul.mubr.bf16.gmra.mrb[0].mxu0 %v2170
    %v4282 = vpop.f32.mrb[0].mxu0
    %v4283 = vadd.f32 %v2487, %v4282
    %v4284 = vpop.f32.mrb[0].mxu0
    %v4285 = vadd.f32 %v2491, %v4284
    %v4286 = vpop.f32.mrb[0].mxu0
    %v4287 = vadd.f32 %v2487, %v4286
    %v4288 = vpop.f32.mrb[0].mxu0
    %v4289 = vadd.f32 %v2491, %v4288
    %4290 = vmatprep.mubr.bf16.mxu0 %v2179
    %4291 = vmatmul.mubr.bf16.gmra.mrb[0].mxu0 %v2178
    %v4292 = vpop.f32.mrb[0].mxu0
    %v4293 = vadd.f32 %v2487, %v4292
    %v4294 = vpop.f32.mrb[0].mxu0
    %v4295 = vadd.f32 %v2491, %v4294
    %v4296 = vpop.f32.mrb[0].mxu0
    %v4297 = vadd.f32 %v2487, %v4296
    %v4298 = vpop.f32.mrb[0].mxu0
    %v4299 = vadd.f32 %v2491, %v4298
    %4300 = vmatprep.mubr.bf16.mxu0 %v2187
    %4301 = vmatmul.mubr.bf16.gmra.mrb[0].mxu0 %v2186
    %v4302 = vpop.f32.mrb[0].mxu0
    %v4303 = vadd.f32 %v2487, %v4302
    %v4304 = vpop.f32.mrb[0].mxu0
    %v4305 = vadd.f32 %v2491, %v4304
    %v4306 = vpop.f32.mrb[0].mxu0
    %v4307 = vadd.f32 %v2487, %v4306
    %v4308 = vpop.f32.mrb[0].mxu0
    %v4309 = vadd.f32 %v2491, %v4308
    %4310 = vmatprep.mubr.bf16.mxu0 %v2195
    %4311 = vmatmul.mubr.bf16.gmra.mrb[0].mxu0 %v2194
    %v4312 = vpop.f32.mrb[0].mxu0
    %v4313 = vadd.f32 %v2487, %v4312
    %v4314 = vpop.f32.mrb[0].mxu0
    %v4315 = vadd.f32 %v2491, %v4314
    %v4316 = vpop.f32.mrb[0].mxu0
    %v4317 = vadd.f32 %v2487, %v4316
    %v4318 = vpop.f32.mrb[0].mxu0
    %v4319 = vadd.f32 %v2491, %v4318
    %4320 = vmatprep.mubr.bf16.mxu0 %v2203
    %4321 = vmatmul.mubr.bf16.gmra.mrb[0].mxu0 %v2202
    %v4322 = vpop.f32.mrb[0].mxu0
    %v4323 = vadd.f32 %v2487, %v4322
    %v4324 = vpop.f32.mrb[0].mxu0
    %v4325 = vadd.f32 %v2491, %v4324
    %v4326 = vpop.f32.mrb[0].mxu0
    %v4327 = vadd.f32 %v2487, %v4326
    %v4328 = vpop.f32.mrb[0].mxu0
    %v4329 = vadd.f32 %v2491, %v4328
    %4330 = vmatprep.mubr.bf16.mxu0 %v2211
    %4331 = vmatmul.mubr.bf16.gmra.mrb[0].mxu0 %v2210
    %v4332 = vpop.f32.mrb[0].mxu0
    %v4333 = vadd.f32 %v2487, %v4332
    %v4334 = vpop.f32.mrb[0].mxu0
    %v4335 = vadd.f32 %v2491, %v4334
    %v4336 = vpop.f32.mrb[0].mxu0
    %v4337 = vadd.f32 %v2487, %v4336
    %v4338 = vpop.f32.mrb[0].mxu0
    %v4339 = vadd.f32 %v2491, %v4338
    %4340 = vdwg.mxu0
    %4341 = vmatprep.subr.bf16.mxu0 %v3331
    %4342 = vmatpush1.bf16.msra.mxu0 %v3330
    %4343 = vmatprep.subr.bf16.mxu0 %v3335
    %4344 = vmatpush1.bf16.msra.mxu0 %v3334
    %4345 = vmatprep.subr.bf16.mxu0 %v3339
    %4346 = vmatpush1.bf16.msra.mxu0 %v3338
    %4347 = vmatprep.subr.bf16.mxu0 %v3343
    %4348 = vmatpush1.bf16.msra.mxu0 %v3342
    %4349 = vmatprep.subr.bf16.mxu0 %v3347
    %4350 = vmatpush1.bf16.msra.mxu0 %v3346
    %4351 = vmatprep.subr.bf16.mxu0 %v3351
    %4352 = vmatpush1.bf16.msra.mxu0 %v3350
    %4353 = vmatprep.subr.bf16.mxu0 %v3355
    %4354 = vmatpush1.bf16.msra.mxu0 %v3354
    %4355 = vmatprep.subr.bf16.mxu0 %v3359
    %4356 = vmatpush1.bf16.msra.mxu0 %v3358
    %4357 = vmatprep.subr.bf16.mxu0 %v3363
    %4358 = vmatpush1.bf16.msra.mxu0 %v3362
    %4359 = vmatprep.subr.bf16.mxu0 %v3367
    %4360 = vmatpush1.bf16.msra.mxu0 %v3366
    %4361 = vmatprep.subr.bf16.mxu0 %v3371
    %4362 = vmatpush1.bf16.msra.mxu0 %v3370
    %4363 = vmatprep.subr.bf16.mxu0 %v3375
    %4364 = vmatpush1.bf16.msra.mxu0 %v3374
    %4365 = vmatprep.subr.bf16.mxu0 %v3379
    %4366 = vmatpush1.bf16.msra.mxu0 %v3378
    %4367 = vmatprep.subr.bf16.mxu0 %v3383
    %4368 = vmatpush1.bf16.msra.mxu0 %v3382
    %4369 = vmatprep.subr.bf16.mxu0 %v3387
    %4370 = vmatpush1.bf16.msra.mxu0 %v3386
    %4371 = vmatprep.subr.bf16.mxu0 %v3391
    %4372 = vmatpush1.bf16.msra.mxu0 %v3390
    %4373 = vmatprep.mubr.bf16.mxu0 %v2157
    %4374 = vmatmul.mubr.bf16.gmra.mrb[0].mxu0 %v2156
    %v4375 = vpop.f32.mrb[0].mxu0
    %v4376 = vadd.f32 %v4263, %v4375
    %v4377 = vpop.f32.mrb[0].mxu0
    %v4378 = vadd.f32 %v4265, %v4377
    %v4379 = vpop.f32.mrb[0].mxu0
    %v4380 = vadd.f32 %v4267, %v4379
    %v4381 = vpop.f32.mrb[0].mxu0
    %v4382 = vadd.f32 %v4269, %v4381
    %4383 = vmatprep.mubr.bf16.mxu0 %v2165
    %4384 = vmatmul.mubr.bf16.gmra.mrb[0].mxu0 %v2164
    %v4385 = vpop.f32.mrb[0].mxu0
    %v4386 = vadd.f32 %v4273, %v4385
    %v4387 = vpop.f32.mrb[0].mxu0
    %v4388 = vadd.f32 %v4275, %v4387
    %v4389 = vpop.f32.mrb[0].mxu0
    %v4390 = vadd.f32 %v4277, %v4389
    %v4391 = vpop.f32.mrb[0].mxu0
    %v4392 = vadd.f32 %v4279, %v4391
    %4393 = vmatprep.mubr.bf16.mxu0 %v2173
    %4394 = vmatmul.mubr.bf16.gmra.mrb[0].mxu0 %v2172
    %v4395 = vpop.f32.mrb[0].mxu0
    %v4396 = vadd.f32 %v4283, %v4395
    %v4397 = vpop.f32.mrb[0].mxu0
    %v4398 = vadd.f32 %v4285, %v4397
    %v4399 = vpop.f32.mrb[0].mxu0
    %v4400 = vadd.f32 %v4287, %v4399
    %v4401 = vpop.f32.mrb[0].mxu0
    %v4402 = vadd.f32 %v4289, %v4401
    %4403 = vmatprep.mubr.bf16.mxu0 %v2181
    %4404 = vmatmul.mubr.bf16.gmra.mrb[0].mxu0 %v2180
    %v4405 = vpop.f32.mrb[0].mxu0
    %v4406 = vadd.f32 %v4293, %v4405
    %v4407 = vpop.f32.mrb[0].mxu0
    %v4408 = vadd.f32 %v4295, %v4407
    %v4409 = vpop.f32.mrb[0].mxu0
    %v4410 = vadd.f32 %v4297, %v4409
    %v4411 = vpop.f32.mrb[0].mxu0
    %v4412 = vadd.f32 %v4299, %v4411
    %4413 = vmatprep.mubr.bf16.mxu0 %v2189
    %4414 = vmatmul.mubr.bf16.gmra.mrb[0].mxu0 %v2188
    %v4415 = vpop.f32.mrb[0].mxu0
    %v4416 = vadd.f32 %v4303, %v4415
    %v4417 = vpop.f32.mrb[0].mxu0
    %v4418 = vadd.f32 %v4305, %v4417
    %v4419 = vpop.f32.mrb[0].mxu0
    %v4420 = vadd.f32 %v4307, %v4419
    %v4421 = vpop.f32.mrb[0].mxu0
    %v4422 = vadd.f32 %v4309, %v4421
    %4423 = vmatprep.mubr.bf16.mxu0 %v2197
    %4424 = vmatmul.mubr.bf16.gmra.mrb[0].mxu0 %v2196
    %v4425 = vpop.f32.mrb[0].mxu0
    %v4426 = vadd.f32 %v4313, %v4425
    %v4427 = vpop.f32.mrb[0].mxu0
    %v4428 = vadd.f32 %v4315, %v4427
    %v4429 = vpop.f32.mrb[0].mxu0
    %v4430 = vadd.f32 %v4317, %v4429
    %v4431 = vpop.f32.mrb[0].mxu0
    %v4432 = vadd.f32 %v4319, %v4431
    %4433 = vmatprep.mubr.bf16.mxu0 %v2205
    %4434 = vmatmul.mubr.bf16.gmra.mrb[0].mxu0 %v2204
    %v4435 = vpop.f32.mrb[0].mxu0
    %v4436 = vadd.f32 %v4323, %v4435
    %v4437 = vpop.f32.mrb[0].mxu0
    %v4438 = vadd.f32 %v4325, %v4437
    %v4439 = vpop.f32.mrb[0].mxu0
    %v4440 = vadd.f32 %v4327, %v4439
    %v4441 = vpop.f32.mrb[0].mxu0
    %v4442 = vadd.f32 %v4329, %v4441
    %4443 = vmatprep.mubr.bf16.mxu0 %v2213
    %4444 = vmatmul.mubr.bf16.gmra.mrb[0].mxu0 %v2212
    %v4445 = vpop.f32.mrb[0].mxu0
    %v4446 = vadd.f32 %v4333, %v4445
    %v4447 = vpop.f32.mrb[0].mxu0
    %v4448 = vadd.f32 %v4335, %v4447
    %v4449 = vpop.f32.mrb[0].mxu0
    %v4450 = vadd.f32 %v4337, %v4449
    %v4451 = vpop.f32.mrb[0].mxu0
    %v4452 = vadd.f32 %v4339, %v4451
    %4453 = vdwg.mxu0
    %4454 = vmatprep.subr.bf16.mxu0 %v3395
    %4455 = vmatpush1.bf16.msra.mxu0 %v3394
    %4456 = vmatprep.subr.bf16.mxu0 %v3399
    %4457 = vmatpush1.bf16.msra.mxu0 %v3398
    %4458 = vmatprep.subr.bf16.mxu0 %v3403
    %4459 = vmatpush1.bf16.msra.mxu0 %v3402
    %4460 = vmatprep.subr.bf16.mxu0 %v3407
    %4461 = vmatpush1.bf16.msra.mxu0 %v3406
    %4462 = vmatprep.subr.bf16.mxu0 %v3411
    %4463 = vmatpush1.bf16.msra.mxu0 %v3410
    %4464 = vmatprep.subr.bf16.mxu0 %v3415
    %4465 = vmatpush1.bf16.msra.mxu0 %v3414
    %4466 = vmatprep.subr.bf16.mxu0 %v3419
    %4467 = vmatpush1.bf16.msra.mxu0 %v3418
    %4468 = vmatprep.subr.bf16.mxu0 %v3423
    %4469 = vmatpush1.bf16.msra.mxu0 %v3422
    %4470 = vmatprep.subr.bf16.mxu0 %v3427
    %4471 = vmatpush1.bf16.msra.mxu0 %v3426
    %4472 = vmatprep.subr.bf16.mxu0 %v3431
    %4473 = vmatpush1.bf16.msra.mxu0 %v3430
    %4474 = vmatprep.subr.bf16.mxu0 %v3435
    %4475 = vmatpush1.bf16.msra.mxu0 %v3434
    %4476 = vmatprep.subr.bf16.mxu0 %v3439
    %4477 = vmatpush1.bf16.msra.mxu0 %v3438
    %4478 = vmatprep.subr.bf16.mxu0 %v3443
    %4479 = vmatpush1.bf16.msra.mxu0 %v3442
    %4480 = vmatprep.subr.bf16.mxu0 %v3447
    %4481 = vmatpush1.bf16.msra.mxu0 %v3446
    %4482 = vmatprep.subr.bf16.mxu0 %v3451
    %4483 = vmatpush1.bf16.msra.mxu0 %v3450
    %4484 = vmatprep.subr.bf16.mxu0 %v3455
    %4485 = vmatpush1.bf16.msra.mxu0 %v3454
    %4486 = vmatprep.mubr.bf16.mxu0 %v2159
    %4487 = vmatmul.mubr.bf16.gmra.mrb[0].mxu0 %v2158
    %v4488 = vpop.f32.mrb[0].mxu0
    %v4489 = vadd.f32 %v4376, %v4488
    %v4490 = vpop.f32.mrb[0].mxu0
    %v4491 = vadd.f32 %v4378, %v4490
    %v4492 = vpop.f32.mrb[0].mxu0
    %v4493 = vadd.f32 %v4380, %v4492
    %v4494 = vpop.f32.mrb[0].mxu0
    %v4495 = vadd.f32 %v4382, %v4494
    %4496 = vmatprep.mubr.bf16.mxu0 %v2167
    %4497 = vmatmul.mubr.bf16.gmra.mrb[0].mxu0 %v2166
    %v4498 = vpop.f32.mrb[0].mxu0
    %v4499 = vadd.f32 %v4386, %v4498
    %v4500 = vpop.f32.mrb[0].mxu0
    %v4501 = vadd.f32 %v4388, %v4500
    %v4502 = vpop.f32.mrb[0].mxu0
    %v4503 = vadd.f32 %v4390, %v4502
    %v4504 = vpop.f32.mrb[0].mxu0
    %v4505 = vadd.f32 %v4392, %v4504
    %4506 = vmatprep.mubr.bf16.mxu0 %v2175
    %4507 = vmatmul.mubr.bf16.gmra.mrb[0].mxu0 %v2174
    %v4508 = vpop.f32.mrb[0].mxu0
    %v4509 = vadd.f32 %v4396, %v4508
    %v4510 = vpop.f32.mrb[0].mxu0
    %v4511 = vadd.f32 %v4398, %v4510
    %v4512 = vpop.f32.mrb[0].mxu0
    %v4513 = vadd.f32 %v4400, %v4512
    %v4514 = vpop.f32.mrb[0].mxu0
    %v4515 = vadd.f32 %v4402, %v4514
    %4516 = vmatprep.mubr.bf16.mxu0 %v2183
    %4517 = vmatmul.mubr.bf16.gmra.mrb[0].mxu0 %v2182
    %v4518 = vpop.f32.mrb[0].mxu0
    %v4519 = vadd.f32 %v4406, %v4518
    %v4520 = vpop.f32.mrb[0].mxu0
    %v4521 = vadd.f32 %v4408, %v4520
    %v4522 = vpop.f32.mrb[0].mxu0
    %v4523 = vadd.f32 %v4410, %v4522
    %v4524 = vpop.f32.mrb[0].mxu0
    %v4525 = vadd.f32 %v4412, %v4524
    %4526 = vmatprep.mubr.bf16.mxu0 %v2191
    %4527 = vmatmul.mubr.bf16.gmra.mrb[0].mxu0 %v2190
    %v4528 = vpop.f32.mrb[0].mxu0
    %v4529 = vadd.f32 %v4416, %v4528
    %v4530 = vpop.f32.mrb[0].mxu0
    %v4531 = vadd.f32 %v4418, %v4530
    %v4532 = vpop.f32.mrb[0].mxu0
    %v4533 = vadd.f32 %v4420, %v4532
    %v4534 = vpop.f32.mrb[0].mxu0
    %v4535 = vadd.f32 %v4422, %v4534
    %4536 = vmatprep.mubr.bf16.mxu0 %v2199
    %4537 = vmatmul.mubr.bf16.gmra.mrb[0].mxu0 %v2198
    %v4538 = vpop.f32.mrb[0].mxu0
    %v4539 = vadd.f32 %v4426, %v4538
    %v4540 = vpop.f32.mrb[0].mxu0
    %v4541 = vadd.f32 %v4428, %v4540
    %v4542 = vpop.f32.mrb[0].mxu0
    %v4543 = vadd.f32 %v4430, %v4542
    %v4544 = vpop.f32.mrb[0].mxu0
    %v4545 = vadd.f32 %v4432, %v4544
    %4546 = vmatprep.mubr.bf16.mxu0 %v2207
    %4547 = vmatmul.mubr.bf16.gmra.mrb[0].mxu0 %v2206
    %v4548 = vpop.f32.mrb[0].mxu0
    %v4549 = vadd.f32 %v4436, %v4548
    %v4550 = vpop.f32.mrb[0].mxu0
    %v4551 = vadd.f32 %v4438, %v4550
    %v4552 = vpop.f32.mrb[0].mxu0
    %v4553 = vadd.f32 %v4440, %v4552
    %v4554 = vpop.f32.mrb[0].mxu0
    %v4555 = vadd.f32 %v4442, %v4554
    %4556 = vmatprep.mubr.bf16.mxu0 %v2215
    %4557 = vmatmul.mubr.bf16.gmra.mrb[0].mxu0 %v2214
    %v4558 = vpop.f32.mrb[0].mxu0
    %v4559 = vadd.f32 %v4446, %v4558
    %v4560 = vpop.f32.mrb[0].mxu0
    %v4561 = vadd.f32 %v4448, %v4560
    %v4562 = vpop.f32.mrb[0].mxu0
    %v4563 = vadd.f32 %v4450, %v4562
    %v4564 = vpop.f32.mrb[0].mxu0
    %v4565 = vadd.f32 %v4452, %v4564
    %4566 = vdwg.mxu0
    %4567 = vmatprep.subr.bf16.mxu0 %v3459
    %4568 = vmatpush1.bf16.msra.mxu0 %v3458
    %4569 = vmatprep.subr.bf16.mxu0 %v3463
    %4570 = vmatpush1.bf16.msra.mxu0 %v3462
    %4571 = vmatprep.subr.bf16.mxu0 %v3467
    %4572 = vmatpush1.bf16.msra.mxu0 %v3466
    %4573 = vmatprep.subr.bf16.mxu0 %v3471
    %4574 = vmatpush1.bf16.msra.mxu0 %v3470
    %4575 = vmatprep.subr.bf16.mxu0 %v3475
    %4576 = vmatpush1.bf16.msra.mxu0 %v3474
    %4577 = vmatprep.subr.bf16.mxu0 %v3479
    %4578 = vmatpush1.bf16.msra.mxu0 %v3478
    %4579 = vmatprep.subr.bf16.mxu0 %v3483
    %4580 = vmatpush1.bf16.msra.mxu0 %v3482
    %4581 = vmatprep.subr.bf16.mxu0 %v3487
    %4582 = vmatpush1.bf16.msra.mxu0 %v3486
    %4583 = vmatprep.subr.bf16.mxu0 %v3491
    %4584 = vmatpush1.bf16.msra.mxu0 %v3490
    %4585 = vmatprep.subr.bf16.mxu0 %v3495
    %4586 = vmatpush1.bf16.msra.mxu0 %v3494
    %4587 = vmatprep.subr.bf16.mxu0 %v3499
    %4588 = vmatpush1.bf16.msra.mxu0 %v3498
    %4589 = vmatprep.subr.bf16.mxu0 %v3503
    %4590 = vmatpush1.bf16.msra.mxu0 %v3502
    %4591 = vmatprep.subr.bf16.mxu0 %v3507
    %4592 = vmatpush1.bf16.msra.mxu0 %v3506
    %4593 = vmatprep.subr.bf16.mxu0 %v3511
    %4594 = vmatpush1.bf16.msra.mxu0 %v3510
    %4595 = vmatprep.subr.bf16.mxu0 %v3515
    %4596 = vmatpush1.bf16.msra.mxu0 %v3514
    %4597 = vmatprep.subr.bf16.mxu0 %v3519
    %4598 = vmatpush1.bf16.msra.mxu0 %v3518
    %4599 = vmatprep.mubr.bf16.mxu0 %v2161
    %4600 = vmatmul.mubr.bf16.gmra.mrb[0].mxu0 %v2160
    %v4601 = vpop.f32.mrb[0].mxu0
    %v4602 = vadd.f32 %v4489, %v4601
    %v4603 = vpop.f32.mrb[0].mxu0
    %v4604 = vadd.f32 %v4491, %v4603
    %v4605 = vpop.f32.mrb[0].mxu0
    %v4606 = vadd.f32 %v4493, %v4605
    %v4607 = vpop.f32.mrb[0].mxu0
    %v4608 = vadd.f32 %v4495, %v4607
    %4609 = vmatprep.mubr.bf16.mxu0 %v2169
    %4610 = vmatmul.mubr.bf16.gmra.mrb[0].mxu0 %v2168
    %v4611 = vpop.f32.mrb[0].mxu0
    %v4612 = vadd.f32 %v4499, %v4611
    %v4613 = vpop.f32.mrb[0].mxu0
    %v4614 = vadd.f32 %v4501, %v4613
    %v4615 = vpop.f32.mrb[0].mxu0
    %v4616 = vadd.f32 %v4503, %v4615
    %v4617 = vpop.f32.mrb[0].mxu0
    %v4618 = vadd.f32 %v4505, %v4617
    %4619 = vmatprep.mubr.bf16.mxu0 %v2177
    %4620 = vmatmul.mubr.bf16.gmra.mrb[0].mxu0 %v2176
    %v4621 = vpop.f32.mrb[0].mxu0
    %v4622 = vadd.f32 %v4509, %v4621
    %v4623 = vpop.f32.mrb[0].mxu0
    %v4624 = vadd.f32 %v4511, %v4623
    %v4625 = vpop.f32.mrb[0].mxu0
    %v4626 = vadd.f32 %v4513, %v4625
    %v4627 = vpop.f32.mrb[0].mxu0
    %v4628 = vadd.f32 %v4515, %v4627
    %4629 = vmatprep.mubr.bf16.mxu0 %v2185
    %4630 = vmatmul.mubr.bf16.gmra.mrb[0].mxu0 %v2184
    %v4631 = vpop.f32.mrb[0].mxu0
    %v4632 = vadd.f32 %v4519, %v4631
    %v4633 = vpop.f32.mrb[0].mxu0
    %v4634 = vadd.f32 %v4521, %v4633
    %v4635 = vpop.f32.mrb[0].mxu0
    %v4636 = vadd.f32 %v4523, %v4635
    %v4637 = vpop.f32.mrb[0].mxu0
    %v4638 = vadd.f32 %v4525, %v4637
    %4639 = vmatprep.mubr.bf16.mxu0 %v2193
    %4640 = vmatmul.mubr.bf16.gmra.mrb[0].mxu0 %v2192
    %v4641 = vpop.f32.mrb[0].mxu0
    %v4642 = vadd.f32 %v4529, %v4641
    %v4643 = vpop.f32.mrb[0].mxu0
    %v4644 = vadd.f32 %v4531, %v4643
    %v4645 = vpop.f32.mrb[0].mxu0
    %v4646 = vadd.f32 %v4533, %v4645
    %v4647 = vpop.f32.mrb[0].mxu0
    %v4648 = vadd.f32 %v4535, %v4647
    %4649 = vmatprep.mubr.bf16.mxu0 %v2201
    %4650 = vmatmul.mubr.bf16.gmra.mrb[0].mxu0 %v2200
    %v4651 = vpop.f32.mrb[0].mxu0
    %v4652 = vadd.f32 %v4539, %v4651
    %v4653 = vpop.f32.mrb[0].mxu0
    %v4654 = vadd.f32 %v4541, %v4653
    %v4655 = vpop.f32.mrb[0].mxu0
    %v4656 = vadd.f32 %v4543, %v4655
    %v4657 = vpop.f32.mrb[0].mxu0
    %v4658 = vadd.f32 %v4545, %v4657
    %4659 = vmatprep.mubr.bf16.mxu0 %v2209
    %4660 = vmatmul.mubr.bf16.gmra.mrb[0].mxu0 %v2208
    %v4661 = vpop.f32.mrb[0].mxu0
    %v4662 = vadd.f32 %v4549, %v4661
    %v4663 = vpop.f32.mrb[0].mxu0
    %v4664 = vadd.f32 %v4551, %v4663
    %v4665 = vpop.f32.mrb[0].mxu0
    %v4666 = vadd.f32 %v4553, %v4665
    %v4667 = vpop.f32.mrb[0].mxu0
    %v4668 = vadd.f32 %v4555, %v4667
    %4669 = vmatprep.mubr.bf16.mxu0 %v2217
    %4670 = vmatmul.mubr.bf16.gmra.mrb[0].mxu0 %v2216
    %v4671 = vpop.f32.mrb[0].mxu0
    %v4672 = vadd.f32 %v4559, %v4671
    %v4673 = vpop.f32.mrb[0].mxu0
    %v4674 = vadd.f32 %v4561, %v4673
    %v4675 = vpop.f32.mrb[0].mxu0
    %v4676 = vadd.f32 %v4563, %v4675
    %v4677 = vpop.f32.mrb[0].mxu0
    %v4678 = vadd.f32 %v4565, %v4677
    %4679 = vdwg.mxu0
    %v4680 = vmul.f32 %v4150, %v4150
    %v4681 = vmul.f32 %v4152, %v4152
    %v4682 = vmul.f32 %v4602, %v4602
    %v4683 = vmul.f32 %v4604, %v4604
    %v4684 = vmul.f32 %v4154, %v4154
    %v4685 = vmul.f32 %v4156, %v4156
    %v4686 = vmul.f32 %v4606, %v4606
    %v4687 = vmul.f32 %v4608, %v4608
    %v4688 = vmul.f32 %v4160, %v4160
    %v4689 = vmul.f32 %v4162, %v4162
    %v4690 = vmul.f32 %v4612, %v4612
    %v4691 = vmul.f32 %v4614, %v4614
    %v4692 = vmul.f32 %v4164, %v4164
    %v4693 = vmul.f32 %v4166, %v4166
    %v4694 = vmul.f32 %v4616, %v4616
    %v4695 = vmul.f32 %v4618, %v4618
    %v4696 = vmul.f32 %v4170, %v4170
    %v4697 = vmul.f32 %v4172, %v4172
    %v4698 = vmul.f32 %v4622, %v4622
    %v4699 = vmul.f32 %v4624, %v4624
    %v4700 = vmul.f32 %v4174, %v4174
    %v4701 = vmul.f32 %v4176, %v4176
    %v4702 = vmul.f32 %v4626, %v4626
    %v4703 = vmul.f32 %v4628, %v4628
    %v4704 = vmul.f32 %v4180, %v4180
    %v4705 = vmul.f32 %v4182, %v4182
    %v4706 = vmul.f32 %v4632, %v4632
    %v4707 = vmul.f32 %v4634, %v4634
    %v4708 = vmul.f32 %v4184, %v4184
    %v4709 = vmul.f32 %v4186, %v4186
    %v4710 = vmul.f32 %v4636, %v4636
    %v4711 = vmul.f32 %v4638, %v4638
    %v4712 = vmul.f32 %v4190, %v4190
    %v4713 = vmul.f32 %v4192, %v4192
    %v4714 = vmul.f32 %v4642, %v4642
    %v4715 = vmul.f32 %v4644, %v4644
    %v4716 = vmul.f32 %v4194, %v4194
    %v4717 = vmul.f32 %v4196, %v4196
    %v4718 = vmul.f32 %v4646, %v4646
    %v4719 = vmul.f32 %v4648, %v4648
    %v4720 = vmul.f32 %v4200, %v4200
    %v4721 = vmul.f32 %v4202, %v4202
    %v4722 = vmul.f32 %v4652, %v4652
    %v4723 = vmul.f32 %v4654, %v4654
    %v4724 = vmul.f32 %v4204, %v4204
    %v4725 = vmul.f32 %v4206, %v4206
    %v4726 = vmul.f32 %v4656, %v4656
    %v4727 = vmul.f32 %v4658, %v4658
    %v4728 = vmul.f32 %v4210, %v4210
    %v4729 = vmul.f32 %v4212, %v4212
    %v4730 = vmul.f32 %v4662, %v4662
    %v4731 = vmul.f32 %v4664, %v4664
    %v4732 = vmul.f32 %v4214, %v4214
    %v4733 = vmul.f32 %v4216, %v4216
    %v4734 = vmul.f32 %v4666, %v4666
    %v4735 = vmul.f32 %v4668, %v4668
    %v4736 = vmul.f32 %v4220, %v4220
    %v4737 = vmul.f32 %v4222, %v4222
    %v4738 = vmul.f32 %v4672, %v4672
    %v4739 = vmul.f32 %v4674, %v4674
    %v4740 = vmul.f32 %v4224, %v4224
    %v4741 = vmul.f32 %v4226, %v4226
    %v4742 = vmul.f32 %v4676, %v4676
    %v4743 = vmul.f32 %v4678, %v4678
    %v4744 = vmul.f32 %v4150, %v4680
    %v4745 = vmul.f32 %v4152, %v4681
    %v4746 = vmul.f32 %v4602, %v4682
    %v4747 = vmul.f32 %v4604, %v4683
    %v4748 = vmul.f32 %v4154, %v4684
    %v4749 = vmul.f32 %v4156, %v4685
    %v4750 = vmul.f32 %v4606, %v4686
    %v4751 = vmul.f32 %v4608, %v4687
    %v4752 = vmul.f32 %v4160, %v4688
    %v4753 = vmul.f32 %v4162, %v4689
    %v4754 = vmul.f32 %v4612, %v4690
    %v4755 = vmul.f32 %v4614, %v4691
    %v4756 = vmul.f32 %v4164, %v4692
    %v4757 = vmul.f32 %v4166, %v4693
    %v4758 = vmul.f32 %v4616, %v4694
    %v4759 = vmul.f32 %v4618, %v4695
    %v4760 = vmul.f32 %v4170, %v4696
    %v4761 = vmul.f32 %v4172, %v4697
    %v4762 = vmul.f32 %v4622, %v4698
    %v4763 = vmul.f32 %v4624, %v4699
    %v4764 = vmul.f32 %v4174, %v4700
    %v4765 = vmul.f32 %v4176, %v4701
    %v4766 = vmul.f32 %v4626, %v4702
    %v4767 = vmul.f32 %v4628, %v4703
    %v4768 = vmul.f32 %v4180, %v4704
    %v4769 = vmul.f32 %v4182, %v4705
    %v4770 = vmul.f32 %v4632, %v4706
    %v4771 = vmul.f32 %v4634, %v4707
    %v4772 = vmul.f32 %v4184, %v4708
    %v4773 = vmul.f32 %v4186, %v4709
    %v4774 = vmul.f32 %v4636, %v4710
    %v4775 = vmul.f32 %v4638, %v4711
    %v4776 = vmul.f32 %v4190, %v4712
    %v4777 = vmul.f32 %v4192, %v4713
    %v4778 = vmul.f32 %v4642, %v4714
    %v4779 = vmul.f32 %v4644, %v4715
    %v4780 = vmul.f32 %v4194, %v4716
    %v4781 = vmul.f32 %v4196, %v4717
    %v4782 = vmul.f32 %v4646, %v4718
    %v4783 = vmul.f32 %v4648, %v4719
    %v4784 = vmul.f32 %v4200, %v4720
    %v4785 = vmul.f32 %v4202, %v4721
    %v4786 = vmul.f32 %v4652, %v4722
    %v4787 = vmul.f32 %v4654, %v4723
    %v4788 = vmul.f32 %v4204, %v4724
    %v4789 = vmul.f32 %v4206, %v4725
    %v4790 = vmul.f32 %v4656, %v4726
    %v4791 = vmul.f32 %v4658, %v4727
    %v4792 = vmul.f32 %v4210, %v4728
    %v4793 = vmul.f32 %v4212, %v4729
    %v4794 = vmul.f32 %v4662, %v4730
    %v4795 = vmul.f32 %v4664, %v4731
    %v4796 = vmul.f32 %v4214, %v4732
    %v4797 = vmul.f32 %v4216, %v4733
    %v4798 = vmul.f32 %v4666, %v4734
    %v4799 = vmul.f32 %v4668, %v4735
    %v4800 = vmul.f32 %v4220, %v4736
    %v4801 = vmul.f32 %v4222, %v4737
    %v4802 = vmul.f32 %v4672, %v4738
    %v4803 = vmul.f32 %v4674, %v4739
    %v4804 = vmul.f32 %v4224, %v4740
    %v4805 = vmul.f32 %v4226, %v4741
    %v4806 = vmul.f32 %v4676, %v4742
    %v4807 = vmul.f32 %v4678, %v4743
    %v4808 = vmul.f32 %v4744, 0.044715
    %v4809 = vmul.f32 %v4745, 0.044715
    %v4810 = vmul.f32 %v4746, 0.044715
    %v4811 = vmul.f32 %v4747, 0.044715
    %v4812 = vmul.f32 %v4748, 0.044715
    %v4813 = vmul.f32 %v4749, 0.044715
    %v4814 = vmul.f32 %v4750, 0.044715
    %v4815 = vmul.f32 %v4751, 0.044715
    %v4816 = vmul.f32 %v4752, 0.044715
    %v4817 = vmul.f32 %v4753, 0.044715
    %v4818 = vmul.f32 %v4754, 0.044715
    %v4819 = vmul.f32 %v4755, 0.044715
    %v4820 = vmul.f32 %v4756, 0.044715
    %v4821 = vmul.f32 %v4757, 0.044715
    %v4822 = vmul.f32 %v4758, 0.044715
    %v4823 = vmul.f32 %v4759, 0.044715
    %v4824 = vmul.f32 %v4760, 0.044715
    %v4825 = vmul.f32 %v4761, 0.044715
    %v4826 = vmul.f32 %v4762, 0.044715
    %v4827 = vmul.f32 %v4763, 0.044715
    %v4828 = vmul.f32 %v4764, 0.044715
    %v4829 = vmul.f32 %v4765, 0.044715
    %v4830 = vmul.f32 %v4766, 0.044715
    %v4831 = vmul.f32 %v4767, 0.044715
    %v4832 = vmul.f32 %v4768, 0.044715
    %v4833 = vmul.f32 %v4769, 0.044715
    %v4834 = vmul.f32 %v4770, 0.044715
    %v4835 = vmul.f32 %v4771, 0.044715
    %v4836 = vmul.f32 %v4772, 0.044715
    %v4837 = vmul.f32 %v4773, 0.044715
    %v4838 = vmul.f32 %v4774, 0.044715
    %v4839 = vmul.f32 %v4775, 0.044715
    %v4840 = vmul.f32 %v4776, 0.044715
    %v4841 = vmul.f32 %v4777, 0.044715
    %v4842 = vmul.f32 %v4778, 0.044715
    %v4843 = vmul.f32 %v4779, 0.044715
    %v4844 = vmul.f32 %v4780, 0.044715
    %v4845 = vmul.f32 %v4781, 0.044715
    %v4846 = vmul.f32 %v4782, 0.044715
    %v4847 = vmul.f32 %v4783, 0.044715
    %v4848 = vmul.f32 %v4784, 0.044715
    %v4849 = vmul.f32 %v4785, 0.044715
    %v4850 = vmul.f32 %v4786, 0.044715
    %v4851 = vmul.f32 %v4787, 0.044715
    %v4852 = vmul.f32 %v4788, 0.044715
    %v4853 = vmul.f32 %v4789, 0.044715
    %v4854 = vmul.f32 %v4790, 0.044715
    %v4855 = vmul.f32 %v4791, 0.044715
    %v4856 = vmul.f32 %v4792, 0.044715
    %v4857 = vmul.f32 %v4793, 0.044715
    %v4858 = vmul.f32 %v4794, 0.044715
    %v4859 = vmul.f32 %v4795, 0.044715
    %v4860 = vmul.f32 %v4796, 0.044715
    %v4861 = vmul.f32 %v4797, 0.044715
    %v4862 = vmul.f32 %v4798, 0.044715
    %v4863 = vmul.f32 %v4799, 0.044715
    %v4864 = vmul.f32 %v4800, 0.044715
    %v4865 = vmul.f32 %v4801, 0.044715
    %v4866 = vmul.f32 %v4802, 0.044715
    %v4867 = vmul.f32 %v4803, 0.044715
    %v4868 = vmul.f32 %v4804, 0.044715
    %v4869 = vmul.f32 %v4805, 0.044715
    %v4870 = vmul.f32 %v4806, 0.044715
    %v4871 = vmul.f32 %v4807, 0.044715
    %v4872 = vadd.f32 %v4150, %v4808
    %v4873 = vadd.f32 %v4152, %v4809
    %v4874 = vadd.f32 %v4602, %v4810
    %v4875 = vadd.f32 %v4604, %v4811
    %v4876 = vadd.f32 %v4154, %v4812
    %v4877 = vadd.f32 %v4156, %v4813
    %v4878 = vadd.f32 %v4606, %v4814
    %v4879 = vadd.f32 %v4608, %v4815
    %v4880 = vadd.f32 %v4160, %v4816
    %v4881 = vadd.f32 %v4162, %v4817
    %v4882 = vadd.f32 %v4612, %v4818
    %v4883 = vadd.f32 %v4614, %v4819
    %v4884 = vadd.f32 %v4164, %v4820
    %v4885 = vadd.f32 %v4166, %v4821
    %v4886 = vadd.f32 %v4616, %v4822
    %v4887 = vadd.f32 %v4618, %v4823
    %v4888 = vadd.f32 %v4170, %v4824
    %v4889 = vadd.f32 %v4172, %v4825
    %v4890 = vadd.f32 %v4622, %v4826
    %v4891 = vadd.f32 %v4624, %v4827
    %v4892 = vadd.f32 %v4174, %v4828
    %v4893 = vadd.f32 %v4176, %v4829
    %v4894 = vadd.f32 %v4626, %v4830
    %v4895 = vadd.f32 %v4628, %v4831
    %v4896 = vadd.f32 %v4180, %v4832
    %v4897 = vadd.f32 %v4182, %v4833
    %v4898 = vadd.f32 %v4632, %v4834
    %v4899 = vadd.f32 %v4634, %v4835
    %v4900 = vadd.f32 %v4184, %v4836
    %v4901 = vadd.f32 %v4186, %v4837
    %v4902 = vadd.f32 %v4636, %v4838
    %v4903 = vadd.f32 %v4638, %v4839
    %v4904 = vadd.f32 %v4190, %v4840
    %v4905 = vadd.f32 %v4192, %v4841
    %v4906 = vadd.f32 %v4642, %v4842
    %v4907 = vadd.f32 %v4644, %v4843
    %v4908 = vadd.f32 %v4194, %v4844
    %v4909 = vadd.f32 %v4196, %v4845
    %v4910 = vadd.f32 %v4646, %v4846
    %v4911 = vadd.f32 %v4648, %v4847
    %v4912 = vadd.f32 %v4200, %v4848
    %v4913 = vadd.f32 %v4202, %v4849
    %v4914 = vadd.f32 %v4652, %v4850
    %v4915 = vadd.f32 %v4654, %v4851
    %v4916 = vadd.f32 %v4204, %v4852
    %v4917 = vadd.f32 %v4206, %v4853
    %v4918 = vadd.f32 %v4656, %v4854
    %v4919 = vadd.f32 %v4658, %v4855
    %v4920 = vadd.f32 %v4210, %v4856
    %v4921 = vadd.f32 %v4212, %v4857
    %v4922 = vadd.f32 %v4662, %v4858
    %v4923 = vadd.f32 %v4664, %v4859
    %v4924 = vadd.f32 %v4214, %v4860
    %v4925 = vadd.f32 %v4216, %v4861
    %v4926 = vadd.f32 %v4666, %v4862
    %v4927 = vadd.f32 %v4668, %v4863
    %v4928 = vadd.f32 %v4220, %v4864
    %v4929 = vadd.f32 %v4222, %v4865
    %v4930 = vadd.f32 %v4672, %v4866
    %v4931 = vadd.f32 %v4674, %v4867
    %v4932 = vadd.f32 %v4224, %v4868
    %v4933 = vadd.f32 %v4226, %v4869
    %v4934 = vadd.f32 %v4676, %v4870
    %v4935 = vadd.f32 %v4678, %v4871
    %v4936 = vmul.f32 %v4872, 0.7978846
    %v4937 = vmul.f32 %v4873, 0.7978846
    %v4938 = vmul.f32 %v4874, 0.7978846
    %v4939 = vmul.f32 %v4875, 0.7978846
    %v4940 = vmul.f32 %v4876, 0.7978846
    %v4941 = vmul.f32 %v4877, 0.7978846
    %v4942 = vmul.f32 %v4878, 0.7978846
    %v4943 = vmul.f32 %v4879, 0.7978846
    %v4944 = vmul.f32 %v4880, 0.7978846
    %v4945 = vmul.f32 %v4881, 0.7978846
    %v4946 = vmul.f32 %v4882, 0.7978846
    %v4947 = vmul.f32 %v4883, 0.7978846
    %v4948 = vmul.f32 %v4884, 0.7978846
    %v4949 = vmul.f32 %v4885, 0.7978846
    %v4950 = vmul.f32 %v4886, 0.7978846
    %v4951 = vmul.f32 %v4887, 0.7978846
    %v4952 = vmul.f32 %v4888, 0.7978846
    %v4953 = vmul.f32 %v4889, 0.7978846
    %v4954 = vmul.f32 %v4890, 0.7978846
    %v4955 = vmul.f32 %v4891, 0.7978846
    %v4956 = vmul.f32 %v4892, 0.7978846
    %v4957 = vmul.f32 %v4893, 0.7978846
    %v4958 = vmul.f32 %v4894, 0.7978846
    %v4959 = vmul.f32 %v4895, 0.7978846
    %v4960 = vmul.f32 %v4896, 0.7978846
    %v4961 = vmul.f32 %v4897, 0.7978846
    %v4962 = vmul.f32 %v4898, 0.7978846
    %v4963 = vmul.f32 %v4899, 0.7978846
    %v4964 = vmul.f32 %v4900, 0.7978846
    %v4965 = vmul.f32 %v4901, 0.7978846
    %v4966 = vmul.f32 %v4902, 0.7978846
    %v4967 = vmul.f32 %v4903, 0.7978846
    %v4968 = vmul.f32 %v4904, 0.7978846
    %v4969 = vmul.f32 %v4905, 0.7978846
    %v4970 = vmul.f32 %v4906, 0.7978846
    %v4971 = vmul.f32 %v4907, 0.7978846
    %v4972 = vmul.f32 %v4908, 0.7978846
    %v4973 = vmul.f32 %v4909, 0.7978846
    %v4974 = vmul.f32 %v4910, 0.7978846
    %v4975 = vmul.f32 %v4911, 0.7978846
    %v4976 = vmul.f32 %v4912, 0.7978846
    %v4977 = vmul.f32 %v4913, 0.7978846
    %v4978 = vmul.f32 %v4914, 0.7978846
    %v4979 = vmul.f32 %v4915, 0.7978846
    %v4980 = vmul.f32 %v4916, 0.7978846
    %v4981 = vmul.f32 %v4917, 0.7978846
    %v4982 = vmul.f32 %v4918, 0.7978846
    %v4983 = vmul.f32 %v4919, 0.7978846
    %v4984 = vmul.f32 %v4920, 0.7978846
    %v4985 = vmul.f32 %v4921, 0.7978846
    %v4986 = vmul.f32 %v4922, 0.7978846
    %v4987 = vmul.f32 %v4923, 0.7978846
    %v4988 = vmul.f32 %v4924, 0.7978846
    %v4989 = vmul.f32 %v4925, 0.7978846
    %v4990 = vmul.f32 %v4926, 0.7978846
    %v4991 = vmul.f32 %v4927, 0.7978846
    %v4992 = vmul.f32 %v4928, 0.7978846
    %v4993 = vmul.f32 %v4929, 0.7978846
    %v4994 = vmul.f32 %v4930, 0.7978846
    %v4995 = vmul.f32 %v4931, 0.7978846
    %v4996 = vmul.f32 %v4932, 0.7978846
    %v4997 = vmul.f32 %v4933, 0.7978846
    %v4998 = vmul.f32 %v4934, 0.7978846
    %v4999 = vmul.f32 %v4935, 0.7978846
    %v5000 = vtanh.pop %v4936
    %v5001 = vtanh.pop %v4937
    %v5002 = vtanh.pop %v4938
    %v5003 = vtanh.pop %v4939
    %v5004 = vtanh.pop %v4940
    %v5005 = vtanh.pop %v4941
    %v5006 = vtanh.pop %v4942
    %v5007 = vtanh.pop %v4943
    %v5008 = vtanh.pop %v4944
    %v5009 = vtanh.pop %v4945
    %v5010 = vtanh.pop %v4946
    %v5011 = vtanh.pop %v4947
    %v5012 = vtanh.pop %v4948
    %v5013 = vtanh.pop %v4949
    %v5014 = vtanh.pop %v4950
    %v5015 = vtanh.pop %v4951
    %v5016 = vtanh.pop %v4952
    %v5017 = vtanh.pop %v4953
    %v5018 = vtanh.pop %v4954
    %v5019 = vtanh.pop %v4955
    %v5020 = vtanh.pop %v4956
    %v5021 = vtanh.pop %v4957
    %v5022 = vtanh.pop %v4958
    %v5023 = vtanh.pop %v4959
    %v5024 = vtanh.pop %v4960
    %v5025 = vtanh.pop %v4961
    %v5026 = vtanh.pop %v4962
    %v5027 = vtanh.pop %v4963
    %v5028 = vtanh.pop %v4964
    %v5029 = vtanh.pop %v4965
    %v5030 = vtanh.pop %v4966
    %v5031 = vtanh.pop %v4967
    %v5032 = vtanh.pop %v4968
    %v5033 = vtanh.pop %v4969
    %v5034 = vtanh.pop %v4970
    %v5035 = vtanh.pop %v4971
    %v5036 = vtanh.pop %v4972
    %v5037 = vtanh.pop %v4973
    %v5038 = vtanh.pop %v4974
    %v5039 = vtanh.pop %v4975
    %v5040 = vtanh.pop %v4976
    %v5041 = vtanh.pop %v4977
    %v5042 = vtanh.pop %v4978
    %v5043 = vtanh.pop %v4979
    %v5044 = vtanh.pop %v4980
    %v5045 = vtanh.pop %v4981
    %v5046 = vtanh.pop %v4982
    %v5047 = vtanh.pop %v4983
    %v5048 = vtanh.pop %v4984
    %v5049 = vtanh.pop %v4985
    %v5050 = vtanh.pop %v4986
    %v5051 = vtanh.pop %v4987
    %v5052 = vtanh.pop %v4988
    %v5053 = vtanh.pop %v4989
    %v5054 = vtanh.pop %v4990
    %v5055 = vtanh.pop %v4991
    %v5056 = vtanh.pop %v4992
    %v5057 = vtanh.pop %v4993
    %v5058 = vtanh.pop %v4994
    %v5059 = vtanh.pop %v4995
    %v5060 = vtanh.pop %v4996
    %v5061 = vtanh.pop %v4997
    %v5062 = vtanh.pop %v4998
    %v5063 = vtanh.pop %v4999
    %v5064 = vadd.f32 %v5000, 1.0
    %v5065 = vadd.f32 %v5001, 1.0
    %v5066 = vadd.f32 %v5002, 1.0
    %v5067 = vadd.f32 %v5003, 1.0
    %v5068 = vadd.f32 %v5004, 1.0
    %v5069 = vadd.f32 %v5005, 1.0
    %v5070 = vadd.f32 %v5006, 1.0
    %v5071 = vadd.f32 %v5007, 1.0
    %v5072 = vadd.f32 %v5008, 1.0
    %v5073 = vadd.f32 %v5009, 1.0
    %v5074 = vadd.f32 %v5010, 1.0
    %v5075 = vadd.f32 %v5011, 1.0
    %v5076 = vadd.f32 %v5012, 1.0
    %v5077 = vadd.f32 %v5013, 1.0
    %v5078 = vadd.f32 %v5014, 1.0
    %v5079 = vadd.f32 %v5015, 1.0
    %v5080 = vadd.f32 %v5016, 1.0
    %v5081 = vadd.f32 %v5017, 1.0
    %v5082 = vadd.f32 %v5018, 1.0
    %v5083 = vadd.f32 %v5019, 1.0
    %v5084 = vadd.f32 %v5020, 1.0
    %v5085 = vadd.f32 %v5021, 1.0
    %v5086 = vadd.f32 %v5022, 1.0
    %v5087 = vadd.f32 %v5023, 1.0
    %v5088 = vadd.f32 %v5024, 1.0
    %v5089 = vadd.f32 %v5025, 1.0
    %v5090 = vadd.f32 %v5026, 1.0
    %v5091 = vadd.f32 %v5027, 1.0
    %v5092 = vadd.f32 %v5028, 1.0
    %v5093 = vadd.f32 %v5029, 1.0
    %v5094 = vadd.f32 %v5030, 1.0
    %v5095 = vadd.f32 %v5031, 1.0
    %v5096 = vadd.f32 %v5032, 1.0
    %v5097 = vadd.f32 %v5033, 1.0
    %v5098 = vadd.f32 %v5034, 1.0
    %v5099 = vadd.f32 %v5035, 1.0
    %v5100 = vadd.f32 %v5036, 1.0
    %v5101 = vadd.f32 %v5037, 1.0
    %v5102 = vadd.f32 %v5038, 1.0
    %v5103 = vadd.f32 %v5039, 1.0
    %v5104 = vadd.f32 %v5040, 1.0
    %v5105 = vadd.f32 %v5041, 1.0
    %v5106 = vadd.f32 %v5042, 1.0
    %v5107 = vadd.f32 %v5043, 1.0
    %v5108 = vadd.f32 %v5044, 1.0
    %v5109 = vadd.f32 %v5045, 1.0
    %v5110 = vadd.f32 %v5046, 1.0
    %v5111 = vadd.f32 %v5047, 1.0
    %v5112 = vadd.f32 %v5048, 1.0
    %v5113 = vadd.f32 %v5049, 1.0
    %v5114 = vadd.f32 %v5050, 1.0
    %v5115 = vadd.f32 %v5051, 1.0
    %v5116 = vadd.f32 %v5052, 1.0
    %v5117 = vadd.f32 %v5053, 1.0
    %v5118 = vadd.f32 %v5054, 1.0
    %v5119 = vadd.f32 %v5055, 1.0
    %v5120 = vadd.f32 %v5056, 1.0
    %v5121 = vadd.f32 %v5057, 1.0
    %v5122 = vadd.f32 %v5058, 1.0
    %v5123 = vadd.f32 %v5059, 1.0
    %v5124 = vadd.f32 %v5060, 1.0
    %v5125 = vadd.f32 %v5061, 1.0
    %v5126 = vadd.f32 %v5062, 1.0
    %v5127 = vadd.f32 %v5063, 1.0
    %v5128 = vmul.f32 %v5064, 0.5
    %v5129 = vmul.f32 %v5065, 0.5
    %v5130 = vmul.f32 %v5066, 0.5
    %v5131 = vmul.f32 %v5067, 0.5
    %v5132 = vmul.f32 %v5068, 0.5
    %v5133 = vmul.f32 %v5069, 0.5
    %v5134 = vmul.f32 %v5070, 0.5
    %v5135 = vmul.f32 %v5071, 0.5
    %v5136 = vmul.f32 %v5072, 0.5
    %v5137 = vmul.f32 %v5073, 0.5
    %v5138 = vmul.f32 %v5074, 0.5
    %v5139 = vmul.f32 %v5075, 0.5
    %v5140 = vmul.f32 %v5076, 0.5
    %v5141 = vmul.f32 %v5077, 0.5
    %v5142 = vmul.f32 %v5078, 0.5
    %v5143 = vmul.f32 %v5079, 0.5
    %v5144 = vmul.f32 %v5080, 0.5
    %v5145 = vmul.f32 %v5081, 0.5
    %v5146 = vmul.f32 %v5082, 0.5
    %v5147 = vmul.f32 %v5083, 0.5
    %v5148 = vmul.f32 %v5084, 0.5
    %v5149 = vmul.f32 %v5085, 0.5
    %v5150 = vmul.f32 %v5086, 0.5
    %v5151 = vmul.f32 %v5087, 0.5
    %v5152 = vmul.f32 %v5088, 0.5
    %v5153 = vmul.f32 %v5089, 0.5
    %v5154 = vmul.f32 %v5090, 0.5
    %v5155 = vmul.f32 %v5091, 0.5
    %v5156 = vmul.f32 %v5092, 0.5
    %v5157 = vmul.f32 %v5093, 0.5
    %v5158 = vmul.f32 %v5094, 0.5
    %v5159 = vmul.f32 %v5095, 0.5
    %v5160 = vmul.f32 %v5096, 0.5
    %v5161 = vmul.f32 %v5097, 0.5
    %v5162 = vmul.f32 %v5098, 0.5
    %v5163 = vmul.f32 %v5099, 0.5
    %v5164 = vmul.f32 %v5100, 0.5
    %v5165 = vmul.f32 %v5101, 0.5
    %v5166 = vmul.f32 %v5102, 0.5
    %v5167 = vmul.f32 %v5103, 0.5
    %v5168 = vmul.f32 %v5104, 0.5
    %v5169 = vmul.f32 %v5105, 0.5
    %v5170 = vmul.f32 %v5106, 0.5
    %v5171 = vmul.f32 %v5107, 0.5
    %v5172 = vmul.f32 %v5108, 0.5
    %v5173 = vmul.f32 %v5109, 0.5
    %v5174 = vmul.f32 %v5110, 0.5
    %v5175 = vmul.f32 %v5111, 0.5
    %v5176 = vmul.f32 %v5112, 0.5
    %v5177 = vmul.f32 %v5113, 0.5
    %v5178 = vmul.f32 %v5114, 0.5
    %v5179 = vmul.f32 %v5115, 0.5
    %v5180 = vmul.f32 %v5116, 0.5
    %v5181 = vmul.f32 %v5117, 0.5
    %v5182 = vmul.f32 %v5118, 0.5
    %v5183 = vmul.f32 %v5119, 0.5
    %v5184 = vmul.f32 %v5120, 0.5
    %v5185 = vmul.f32 %v5121, 0.5
    %v5186 = vmul.f32 %v5122, 0.5
    %v5187 = vmul.f32 %v5123, 0.5
    %v5188 = vmul.f32 %v5124, 0.5
    %v5189 = vmul.f32 %v5125, 0.5
    %v5190 = vmul.f32 %v5126, 0.5
    %v5191 = vmul.f32 %v5127, 0.5
    %v5192 = vmul.f32 %v4150, %v5128
    %v5193 = vmul.f32 %v4152, %v5129
    %v5194 = vmul.f32 %v4602, %v5130
    %v5195 = vmul.f32 %v4604, %v5131
    %v5196 = vmul.f32 %v4154, %v5132
    %v5197 = vmul.f32 %v4156, %v5133
    %v5198 = vmul.f32 %v4606, %v5134
    %v5199 = vmul.f32 %v4608, %v5135
    %v5200 = vmul.f32 %v4160, %v5136
    %v5201 = vmul.f32 %v4162, %v5137
    %v5202 = vmul.f32 %v4612, %v5138
    %v5203 = vmul.f32 %v4614, %v5139
    %v5204 = vmul.f32 %v4164, %v5140
    %v5205 = vmul.f32 %v4166, %v5141
    %v5206 = vmul.f32 %v4616, %v5142
    %v5207 = vmul.f32 %v4618, %v5143
    %v5208 = vmul.f32 %v4170, %v5144
    %v5209 = vmul.f32 %v4172, %v5145
    %v5210 = vmul.f32 %v4622, %v5146
    %v5211 = vmul.f32 %v4624, %v5147
    %v5212 = vmul.f32 %v4174, %v5148
    %v5213 = vmul.f32 %v4176, %v5149
    %v5214 = vmul.f32 %v4626, %v5150
    %v5215 = vmul.f32 %v4628, %v5151
    %v5216 = vmul.f32 %v4180, %v5152
    %v5217 = vmul.f32 %v4182, %v5153
    %v5218 = vmul.f32 %v4632, %v5154
    %v5219 = vmul.f32 %v4634, %v5155
    %v5220 = vmul.f32 %v4184, %v5156
    %v5221 = vmul.f32 %v4186, %v5157
    %v5222 = vmul.f32 %v4636, %v5158
    %v5223 = vmul.f32 %v4638, %v5159
    %v5224 = vmul.f32 %v4190, %v5160
    %v5225 = vmul.f32 %v4192, %v5161
    %v5226 = vmul.f32 %v4642, %v5162
    %v5227 = vmul.f32 %v4644, %v5163
    %v5228 = vmul.f32 %v4194, %v5164
    %v5229 = vmul.f32 %v4196, %v5165
    %v5230 = vmul.f32 %v4646, %v5166
    %v5231 = vmul.f32 %v4648, %v5167
    %v5232 = vmul.f32 %v4200, %v5168
    %v5233 = vmul.f32 %v4202, %v5169
    %v5234 = vmul.f32 %v4652, %v5170
    %v5235 = vmul.f32 %v4654, %v5171
    %v5236 = vmul.f32 %v4204, %v5172
    %v5237 = vmul.f32 %v4206, %v5173
    %v5238 = vmul.f32 %v4656, %v5174
    %v5239 = vmul.f32 %v4658, %v5175
    %v5240 = vmul.f32 %v4210, %v5176
    %v5241 = vmul.f32 %v4212, %v5177
    %v5242 = vmul.f32 %v4662, %v5178
    %v5243 = vmul.f32 %v4664, %v5179
    %v5244 = vmul.f32 %v4214, %v5180
    %v5245 = vmul.f32 %v4216, %v5181
    %v5246 = vmul.f32 %v4666, %v5182
    %v5247 = vmul.f32 %v4668, %v5183
    %v5248 = vmul.f32 %v4220, %v5184
    %v5249 = vmul.f32 %v4222, %v5185
    %v5250 = vmul.f32 %v4672, %v5186
    %v5251 = vmul.f32 %v4674, %v5187
    %v5252 = vmul.f32 %v4224, %v5188
    %v5253 = vmul.f32 %v4226, %v5189
    %v5254 = vmul.f32 %v4676, %v5190
    %v5255 = vmul.f32 %v4678, %v5191
    %v5256 = vpack.c.bf16 %v5196, %v5192
    %v5257 = vpack.c.bf16 %v5197, %v5193
    %v5258 = vpack.c.bf16 %v5198, %v5194
    %v5259 = vpack.c.bf16 %v5199, %v5195
    %v5260 = vpack.c.bf16 %v5204, %v5200
    %v5261 = vpack.c.bf16 %v5205, %v5201
    %v5262 = vpack.c.bf16 %v5206, %v5202
    %v5263 = vpack.c.bf16 %v5207, %v5203
    %v5264 = vpack.c.bf16 %v5212, %v5208
    %v5265 = vpack.c.bf16 %v5213, %v5209
    %v5266 = vpack.c.bf16 %v5214, %v5210
    %v5267 = vpack.c.bf16 %v5215, %v5211
    %v5268 = vpack.c.bf16 %v5220, %v5216
    %v5269 = vpack.c.bf16 %v5221, %v5217
    %v5270 = vpack.c.bf16 %v5222, %v5218
    %v5271 = vpack.c.bf16 %v5223, %v5219
    %v5272 = vpack.c.bf16 %v5228, %v5224
    %v5273 = vpack.c.bf16 %v5229, %v5225
    %v5274 = vpack.c.bf16 %v5230, %v5226
    %v5275 = vpack.c.bf16 %v5231, %v5227
    %v5276 = vpack.c.bf16 %v5236, %v5232
    %v5277 = vpack.c.bf16 %v5237, %v5233
    %v5278 = vpack.c.bf16 %v5238, %v5234
    %v5279 = vpack.c.bf16 %v5239, %v5235
    %v5280 = vpack.c.bf16 %v5244, %v5240
    %v5281 = vpack.c.bf16 %v5245, %v5241
    %v5282 = vpack.c.bf16 %v5246, %v5242
    %v5283 = vpack.c.bf16 %v5247, %v5243
    %v5284 = vpack.c.bf16 %v5252, %v5248
    %v5285 = vpack.c.bf16 %v5253, %v5249
    %v5286 = vpack.c.bf16 %v5254, %v5250
    %v5287 = vpack.c.bf16 %v5255, %v5251
    %v5288 = vld [vmem:[#allocation10] sm:$0xff]
    %v5289 = vld [vmem:[#allocation10 + $0x8] sm:$0xff]
    %v5290 = vld [vmem:[#allocation10 + $0x10] sm:$0xff]
    %v5291 = vld [vmem:[#allocation10 + $0x18] sm:$0xff]
    %v5292 = vld [vmem:[#allocation10 + $0x20] sm:$0xff]
    %v5293 = vld [vmem:[#allocation10 + $0x28] sm:$0xff]
    %v5294 = vld [vmem:[#allocation10 + $0x30] sm:$0xff]
    %v5295 = vld [vmem:[#allocation10 + $0x38] sm:$0xff]
    %v5296 = vld [vmem:[#allocation10 + $0x40] sm:$0xff]
    %v5297 = vld [vmem:[#allocation10 + $0x48] sm:$0xff]
    %v5298 = vld [vmem:[#allocation10 + $0x50] sm:$0xff]
    %v5299 = vld [vmem:[#allocation10 + $0x58] sm:$0xff]
    %v5300 = vld [vmem:[#allocation10 + $0x60] sm:$0xff]
    %v5301 = vld [vmem:[#allocation10 + $0x68] sm:$0xff]
    %v5302 = vld [vmem:[#allocation10 + $0x70] sm:$0xff]
    %v5303 = vld [vmem:[#allocation10 + $0x78] sm:$0xff]
    %v5304 = vld [vmem:[#allocation10 + $0x80] sm:$0xff]
    %v5305 = vld [vmem:[#allocation10 + $0x88] sm:$0xff]
    %v5306 = vld [vmem:[#allocation10 + $0x90] sm:$0xff]
    %v5307 = vld [vmem:[#allocation10 + $0x98] sm:$0xff]
    %v5308 = vld [vmem:[#allocation10 + $0xa0] sm:$0xff]
    %v5309 = vld [vmem:[#allocation10 + $0xa8] sm:$0xff]
    %v5310 = vld [vmem:[#allocation10 + $0xb0] sm:$0xff]
    %v5311 = vld [vmem:[#allocation10 + $0xb8] sm:$0xff]
    %v5312 = vld [vmem:[#allocation10 + $0xc0] sm:$0xff]
    %v5313 = vld [vmem:[#allocation10 + $0xc8] sm:$0xff]
    %v5314 = vld [vmem:[#allocation10 + $0xd0] sm:$0xff]
    %v5315 = vld [vmem:[#allocation10 + $0xd8] sm:$0xff]
    %v5316 = vld [vmem:[#allocation10 + $0xe0] sm:$0xff]
    %v5317 = vld [vmem:[#allocation10 + $0xe8] sm:$0xff]
    %v5318 = vld [vmem:[#allocation10 + $0xf0] sm:$0xff]
    %v5319 = vld [vmem:[#allocation10 + $0xf8] sm:$0xff]
    %v5320 = vld [vmem:[#allocation10 + $0x100] sm:$0xff]
    %v5321 = vld [vmem:[#allocation10 + $0x108] sm:$0xff]
    %v5322 = vld [vmem:[#allocation10 + $0x110] sm:$0xff]
    %v5323 = vld [vmem:[#allocation10 + $0x118] sm:$0xff]
    %v5324 = vld [vmem:[#allocation10 + $0x120] sm:$0xff]
    %v5325 = vld [vmem:[#allocation10 + $0x128] sm:$0xff]
    %v5326 = vld [vmem:[#allocation10 + $0x130] sm:$0xff]
    %v5327 = vld [vmem:[#allocation10 + $0x138] sm:$0xff]
    %v5328 = vld [vmem:[#allocation10 + $0x140] sm:$0xff]
    %v5329 = vld [vmem:[#allocation10 + $0x148] sm:$0xff]
    %v5330 = vld [vmem:[#allocation10 + $0x150] sm:$0xff]
    %v5331 = vld [vmem:[#allocation10 + $0x158] sm:$0xff]
    %v5332 = vld [vmem:[#allocation10 + $0x160] sm:$0xff]
    %v5333 = vld [vmem:[#allocation10 + $0x168] sm:$0xff]
    %v5334 = vld [vmem:[#allocation10 + $0x170] sm:$0xff]
    %v5335 = vld [vmem:[#allocation10 + $0x178] sm:$0xff]
    %v5336 = vld [vmem:[#allocation10 + $0x180] sm:$0xff]
    %v5337 = vld [vmem:[#allocation10 + $0x188] sm:$0xff]
    %v5338 = vld [vmem:[#allocation10 + $0x190] sm:$0xff]
    %v5339 = vld [vmem:[#allocation10 + $0x198] sm:$0xff]
    %v5340 = vld [vmem:[#allocation10 + $0x1a0] sm:$0xff]
    %v5341 = vld [vmem:[#allocation10 + $0x1a8] sm:$0xff]
    %v5342 = vld [vmem:[#allocation10 + $0x1b0] sm:$0xff]
    %v5343 = vld [vmem:[#allocation10 + $0x1b8] sm:$0xff]
    %v5344 = vld [vmem:[#allocation10 + $0x1c0] sm:$0xff]
    %v5345 = vld [vmem:[#allocation10 + $0x1c8] sm:$0xff]
    %v5346 = vld [vmem:[#allocation10 + $0x1d0] sm:$0xff]
    %v5347 = vld [vmem:[#allocation10 + $0x1d8] sm:$0xff]
    %v5348 = vld [vmem:[#allocation10 + $0x1e0] sm:$0xff]
    %v5349 = vld [vmem:[#allocation10 + $0x1e8] sm:$0xff]
    %v5350 = vld [vmem:[#allocation10 + $0x1f0] sm:$0xff]
    %v5351 = vld [vmem:[#allocation10 + $0x1f8] sm:$0xff]
    %v5352 = vld [vmem:[%s6] sm:$0x3]
    %v5354 = vlaneseq
    %v5355 = vshrl.u32 %v5354, 7
    %v5356 = vsub.s32 0, %v5355
    %v5357 = vrot.slane %v5352, %v5356
    %v5358 = vlaneseq
    %v5359 = vshrl.u32 %v5358, 7
    %v5360 = vsub.s32 1, %v5359
    %v5361 = vrot.slane %v5352, %v5360
    %v5428 = vunpack.c.l.b16 %v5288
    %v5429 = vunpack.c.h.b16 %v5288
    %v5430 = vunpack.c.l.b16 %v5289
    %v5431 = vunpack.c.h.b16 %v5289
    %v5432 = vunpack.c.l.b16 %v5290
    %v5433 = vunpack.c.h.b16 %v5290
    %v5434 = vunpack.c.l.b16 %v5291
    %v5435 = vunpack.c.h.b16 %v5291
    %v5436 = vunpack.c.l.b16 %v5292
    %v5437 = vunpack.c.h.b16 %v5292
    %v5438 = vunpack.c.l.b16 %v5293
    %v5439 = vunpack.c.h.b16 %v5293
    %v5440 = vunpack.c.l.b16 %v5294
    %v5441 = vunpack.c.h.b16 %v5294
    %v5442 = vunpack.c.l.b16 %v5295
    %v5443 = vunpack.c.h.b16 %v5295
    %v5444 = vunpack.c.l.b16 %v5296
    %v5445 = vunpack.c.h.b16 %v5296
    %v5446 = vunpack.c.l.b16 %v5297
    %v5447 = vunpack.c.h.b16 %v5297
    %v5448 = vunpack.c.l.b16 %v5298
    %v5449 = vunpack.c.h.b16 %v5298
    %v5450 = vunpack.c.l.b16 %v5299
    %v5451 = vunpack.c.h.b16 %v5299
    %v5452 = vunpack.c.l.b16 %v5300
    %v5453 = vunpack.c.h.b16 %v5300
    %v5454 = vunpack.c.l.b16 %v5301
    %v5455 = vunpack.c.h.b16 %v5301
    %v5456 = vunpack.c.l.b16 %v5302
    %v5457 = vunpack.c.h.b16 %v5302
    %v5458 = vunpack.c.l.b16 %v5303
    %v5459 = vunpack.c.h.b16 %v5303
    %v5460 = vunpack.c.l.b16 %v5304
    %v5461 = vunpack.c.h.b16 %v5304
    %v5462 = vunpack.c.l.b16 %v5305
    %v5463 = vunpack.c.h.b16 %v5305
    %v5464 = vunpack.c.l.b16 %v5306
    %v5465 = vunpack.c.h.b16 %v5306
    %v5466 = vunpack.c.l.b16 %v5307
    %v5467 = vunpack.c.h.b16 %v5307
    %v5468 = vunpack.c.l.b16 %v5308
    %v5469 = vunpack.c.h.b16 %v5308
    %v5470 = vunpack.c.l.b16 %v5309
    %v5471 = vunpack.c.h.b16 %v5309
    %v5472 = vunpack.c.l.b16 %v5310
    %v5473 = vunpack.c.h.b16 %v5310
    %v5474 = vunpack.c.l.b16 %v5311
    %v5475 = vunpack.c.h.b16 %v5311
    %v5476 = vunpack.c.l.b16 %v5312
    %v5477 = vunpack.c.h.b16 %v5312
    %v5478 = vunpack.c.l.b16 %v5313
    %v5479 = vunpack.c.h.b16 %v5313
    %v5480 = vunpack.c.l.b16 %v5314
    %v5481 = vunpack.c.h.b16 %v5314
    %v5482 = vunpack.c.l.b16 %v5315
    %v5483 = vunpack.c.h.b16 %v5315
    %v5484 = vunpack.c.l.b16 %v5316
    %v5485 = vunpack.c.h.b16 %v5316
    %v5486 = vunpack.c.l.b16 %v5317
    %v5487 = vunpack.c.h.b16 %v5317
    %v5488 = vunpack.c.l.b16 %v5318
    %v5489 = vunpack.c.h.b16 %v5318
    %v5490 = vunpack.c.l.b16 %v5319
    %v5491 = vunpack.c.h.b16 %v5319
    %v5492 = vunpack.c.l.b16 %v5320
    %v5493 = vunpack.c.h.b16 %v5320
    %v5494 = vunpack.c.l.b16 %v5321
    %v5495 = vunpack.c.h.b16 %v5321
    %v5496 = vunpack.c.l.b16 %v5322
    %v5497 = vunpack.c.h.b16 %v5322
    %v5498 = vunpack.c.l.b16 %v5323
    %v5499 = vunpack.c.h.b16 %v5323
    %v5500 = vunpack.c.l.b16 %v5324
    %v5501 = vunpack.c.h.b16 %v5324
    %v5502 = vunpack.c.l.b16 %v5325
    %v5503 = vunpack.c.h.b16 %v5325
    %v5504 = vunpack.c.l.b16 %v5326
    %v5505 = vunpack.c.h.b16 %v5326
    %v5506 = vunpack.c.l.b16 %v5327
    %v5507 = vunpack.c.h.b16 %v5327
    %v5508 = vunpack.c.l.b16 %v5328
    %v5509 = vunpack.c.h.b16 %v5328
    %v5510 = vunpack.c.l.b16 %v5329
    %v5511 = vunpack.c.h.b16 %v5329
    %v5512 = vunpack.c.l.b16 %v5330
    %v5513 = vunpack.c.h.b16 %v5330
    %v5514 = vunpack.c.l.b16 %v5331
    %v5515 = vunpack.c.h.b16 %v5331
    %v5516 = vunpack.c.l.b16 %v5332
    %v5517 = vunpack.c.h.b16 %v5332
    %v5518 = vunpack.c.l.b16 %v5333
    %v5519 = vunpack.c.h.b16 %v5333
    %v5520 = vunpack.c.l.b16 %v5334
    %v5521 = vunpack.c.h.b16 %v5334
    %v5522 = vunpack.c.l.b16 %v5335
    %v5523 = vunpack.c.h.b16 %v5335
    %v5524 = vunpack.c.l.b16 %v5336
    %v5525 = vunpack.c.h.b16 %v5336
    %v5526 = vunpack.c.l.b16 %v5337
    %v5527 = vunpack.c.h.b16 %v5337
    %v5528 = vunpack.c.l.b16 %v5338
    %v5529 = vunpack.c.h.b16 %v5338
    %v5530 = vunpack.c.l.b16 %v5339
    %v5531 = vunpack.c.h.b16 %v5339
    %v5532 = vunpack.c.l.b16 %v5340
    %v5533 = vunpack.c.h.b16 %v5340
    %v5534 = vunpack.c.l.b16 %v5341
    %v5535 = vunpack.c.h.b16 %v5341
    %v5536 = vunpack.c.l.b16 %v5342
    %v5537 = vunpack.c.h.b16 %v5342
    %v5538 = vunpack.c.l.b16 %v5343
    %v5539 = vunpack.c.h.b16 %v5343
    %v5540 = vunpack.c.l.b16 %v5344
    %v5541 = vunpack.c.h.b16 %v5344
    %v5542 = vunpack.c.l.b16 %v5345
    %v5543 = vunpack.c.h.b16 %v5345
    %v5544 = vunpack.c.l.b16 %v5346
    %v5545 = vunpack.c.h.b16 %v5346
    %v5546 = vunpack.c.l.b16 %v5347
    %v5547 = vunpack.c.h.b16 %v5347
    %v5548 = vunpack.c.l.b16 %v5348
    %v5549 = vunpack.c.h.b16 %v5348
    %v5550 = vunpack.c.l.b16 %v5349
    %v5551 = vunpack.c.h.b16 %v5349
    %v5552 = vunpack.c.l.b16 %v5350
    %v5553 = vunpack.c.h.b16 %v5350
    %v5554 = vunpack.c.l.b16 %v5351
    %v5555 = vunpack.c.h.b16 %v5351
    %v5556 = vpack.c.b16 %v5430, %v5428
    %v5557 = vpack.c.b16 %v5431, %v5429
    %v5558 = vpack.c.b16 %v5434, %v5432
    %v5559 = vpack.c.b16 %v5435, %v5433
    %v5560 = vpack.c.b16 %v5438, %v5436
    %v5561 = vpack.c.b16 %v5439, %v5437
    %v5562 = vpack.c.b16 %v5442, %v5440
    %v5563 = vpack.c.b16 %v5443, %v5441
    %v5564 = vpack.c.b16 %v5446, %v5444
    %v5565 = vpack.c.b16 %v5447, %v5445
    %v5566 = vpack.c.b16 %v5450, %v5448
    %v5567 = vpack.c.b16 %v5451, %v5449
    %v5568 = vpack.c.b16 %v5454, %v5452
    %v5569 = vpack.c.b16 %v5455, %v5453
    %v5570 = vpack.c.b16 %v5458, %v5456
    %v5571 = vpack.c.b16 %v5459, %v5457
    %v5572 = vpack.c.b16 %v5462, %v5460
    %v5573 = vpack.c.b16 %v5463, %v5461
    %v5574 = vpack.c.b16 %v5466, %v5464
    %v5575 = vpack.c.b16 %v5467, %v5465
    %v5576 = vpack.c.b16 %v5470, %v5468
    %v5577 = vpack.c.b16 %v5471, %v5469
    %v5578 = vpack.c.b16 %v5474, %v5472
    %v5579 = vpack.c.b16 %v5475, %v5473
    %v5580 = vpack.c.b16 %v5478, %v5476
    %v5581 = vpack.c.b16 %v5479, %v5477
    %v5582 = vpack.c.b16 %v5482, %v5480
    %v5583 = vpack.c.b16 %v5483, %v5481
    %v5584 = vpack.c.b16 %v5486, %v5484
    %v5585 = vpack.c.b16 %v5487, %v5485
    %v5586 = vpack.c.b16 %v5490, %v5488
    %v5587 = vpack.c.b16 %v5491, %v5489
    %v5588 = vpack.c.b16 %v5494, %v5492
    %v5589 = vpack.c.b16 %v5495, %v5493
    %v5590 = vpack.c.b16 %v5498, %v5496
    %v5591 = vpack.c.b16 %v5499, %v5497
    %v5592 = vpack.c.b16 %v5502, %v5500
    %v5593 = vpack.c.b16 %v5503, %v5501
    %v5594 = vpack.c.b16 %v5506, %v5504
    %v5595 = vpack.c.b16 %v5507, %v5505
    %v5596 = vpack.c.b16 %v5510, %v5508
    %v5597 = vpack.c.b16 %v5511, %v5509
    %v5598 = vpack.c.b16 %v5514, %v5512
    %v5599 = vpack.c.b16 %v5515, %v5513
    %v5600 = vpack.c.b16 %v5518, %v5516
    %v5601 = vpack.c.b16 %v5519, %v5517
    %v5602 = vpack.c.b16 %v5522, %v5520
    %v5603 = vpack.c.b16 %v5523, %v5521
    %v5604 = vpack.c.b16 %v5526, %v5524
    %v5605 = vpack.c.b16 %v5527, %v5525
    %v5606 = vpack.c.b16 %v5530, %v5528
    %v5607 = vpack.c.b16 %v5531, %v5529
    %v5608 = vpack.c.b16 %v5534, %v5532
    %v5609 = vpack.c.b16 %v5535, %v5533
    %v5610 = vpack.c.b16 %v5538, %v5536
    %v5611 = vpack.c.b16 %v5539, %v5537
    %v5612 = vpack.c.b16 %v5542, %v5540
    %v5613 = vpack.c.b16 %v5543, %v5541
    %v5614 = vpack.c.b16 %v5546, %v5544
    %v5615 = vpack.c.b16 %v5547, %v5545
    %v5616 = vpack.c.b16 %v5550, %v5548
    %v5617 = vpack.c.b16 %v5551, %v5549
    %v5618 = vpack.c.b16 %v5554, %v5552
    %v5619 = vpack.c.b16 %v5555, %v5553
    %5684 = vmatprep.subr.bf16.mxu0 %v5557
    %5685 = vmatpush1.bf16.msra.mxu0 %v5556
    %5686 = vmatprep.subr.bf16.mxu0 %v5559
    %5687 = vmatpush1.bf16.msra.mxu0 %v5558
    %5688 = vmatprep.subr.bf16.mxu0 %v5561
    %5689 = vmatpush1.bf16.msra.mxu0 %v5560
    %5690 = vmatprep.subr.bf16.mxu0 %v5563
    %5691 = vmatpush1.bf16.msra.mxu0 %v5562
    %5692 = vmatprep.subr.bf16.mxu0 %v5565
    %5693 = vmatpush1.bf16.msra.mxu0 %v5564
    %5694 = vmatprep.subr.bf16.mxu0 %v5567
    %5695 = vmatpush1.bf16.msra.mxu0 %v5566
    %5696 = vmatprep.subr.bf16.mxu0 %v5569
    %5697 = vmatpush1.bf16.msra.mxu0 %v5568
    %5698 = vmatprep.subr.bf16.mxu0 %v5571
    %5699 = vmatpush1.bf16.msra.mxu0 %v5570
    %5700 = vmatprep.subr.bf16.mxu0 %v5573
    %5701 = vmatpush1.bf16.msra.mxu0 %v5572
    %5702 = vmatprep.subr.bf16.mxu0 %v5575
    %5703 = vmatpush1.bf16.msra.mxu0 %v5574
    %5704 = vmatprep.subr.bf16.mxu0 %v5577
    %5705 = vmatpush1.bf16.msra.mxu0 %v5576
    %5706 = vmatprep.subr.bf16.mxu0 %v5579
    %5707 = vmatpush1.bf16.msra.mxu0 %v5578
    %5708 = vmatprep.subr.bf16.mxu0 %v5581
    %5709 = vmatpush1.bf16.msra.mxu0 %v5580
    %5710 = vmatprep.subr.bf16.mxu0 %v5583
    %5711 = vmatpush1.bf16.msra.mxu0 %v5582
    %5712 = vmatprep.subr.bf16.mxu0 %v5585
    %5713 = vmatpush1.bf16.msra.mxu0 %v5584
    %5714 = vmatprep.subr.bf16.mxu0 %v5587
    %5715 = vmatpush1.bf16.msra.mxu0 %v5586
    %5716 = vmatprep.mubr.bf16.mxu0 %v5257
    %5717 = vmatmul.mubr.bf16.gmra.mrb[0].mxu0 %v5256
    %v5718 = vpop.f32.mrb[0].mxu0
    %v5719 = vadd.f32 %v5357, %v5718
    %v5720 = vpop.f32.mrb[0].mxu0
    %v5721 = vadd.f32 %v5361, %v5720
    %v5722 = vpop.f32.mrb[0].mxu0
    %v5723 = vadd.f32 %v5357, %v5722
    %v5724 = vpop.f32.mrb[0].mxu0
    %v5725 = vadd.f32 %v5361, %v5724
    %5726 = vmatprep.mubr.bf16.mxu0 %v5261
    %5727 = vmatmul.mubr.bf16.gmra.mrb[0].mxu0 %v5260
    %v5728 = vpop.f32.mrb[0].mxu0
    %v5729 = vadd.f32 %v5357, %v5728
    %v5730 = vpop.f32.mrb[0].mxu0
    %v5731 = vadd.f32 %v5361, %v5730
    %v5732 = vpop.f32.mrb[0].mxu0
    %v5733 = vadd.f32 %v5357, %v5732
    %v5734 = vpop.f32.mrb[0].mxu0
    %v5735 = vadd.f32 %v5361, %v5734
    %5736 = vmatprep.mubr.bf16.mxu0 %v5265
    %5737 = vmatmul.mubr.bf16.gmra.mrb[0].mxu0 %v5264
    %v5738 = vpop.f32.mrb[0].mxu0
    %v5739 = vadd.f32 %v5357, %v5738
    %v5740 = vpop.f32.mrb[0].mxu0
    %v5741 = vadd.f32 %v5361, %v5740
    %v5742 = vpop.f32.mrb[0].mxu0
    %v5743 = vadd.f32 %v5357, %v5742
    %v5744 = vpop.f32.mrb[0].mxu0
    %v5745 = vadd.f32 %v5361, %v5744
    %5746 = vmatprep.mubr.bf16.mxu0 %v5269
    %5747 = vmatmul.mubr.bf16.gmra.mrb[0].mxu0 %v5268
    %v5748 = vpop.f32.mrb[0].mxu0
    %v5749 = vadd.f32 %v5357, %v5748
    %v5750 = vpop.f32.mrb[0].mxu0
    %v5751 = vadd.f32 %v5361, %v5750
    %v5752 = vpop.f32.mrb[0].mxu0
    %v5753 = vadd.f32 %v5357, %v5752
    %v5754 = vpop.f32.mrb[0].mxu0
    %v5755 = vadd.f32 %v5361, %v5754
    %5756 = vmatprep.mubr.bf16.mxu0 %v5273
    %5757 = vmatmul.mubr.bf16.gmra.mrb[0].mxu0 %v5272
    %v5758 = vpop.f32.mrb[0].mxu0
    %v5759 = vadd.f32 %v5357, %v5758
    %v5760 = vpop.f32.mrb[0].mxu0
    %v5761 = vadd.f32 %v5361, %v5760
    %v5762 = vpop.f32.mrb[0].mxu0
    %v5763 = vadd.f32 %v5357, %v5762
    %v5764 = vpop.f32.mrb[0].mxu0
    %v5765 = vadd.f32 %v5361, %v5764
    %5766 = vmatprep.mubr.bf16.mxu0 %v5277
    %5767 = vmatmul.mubr.bf16.gmra.mrb[0].mxu0 %v5276
    %v5768 = vpop.f32.mrb[0].mxu0
    %v5769 = vadd.f32 %v5357, %v5768
    %v5770 = vpop.f32.mrb[0].mxu0
    %v5771 = vadd.f32 %v5361, %v5770
    %v5772 = vpop.f32.mrb[0].mxu0
    %v5773 = vadd.f32 %v5357, %v5772
    %v5774 = vpop.f32.mrb[0].mxu0
    %v5775 = vadd.f32 %v5361, %v5774
    %5776 = vmatprep.mubr.bf16.mxu0 %v5281
    %5777 = vmatmul.mubr.bf16.gmra.mrb[0].mxu0 %v5280
    %v5778 = vpop.f32.mrb[0].mxu0
    %v5779 = vadd.f32 %v5357, %v5778
    %v5780 = vpop.f32.mrb[0].mxu0
    %v5781 = vadd.f32 %v5361, %v5780
    %v5782 = vpop.f32.mrb[0].mxu0
    %v5783 = vadd.f32 %v5357, %v5782
    %v5784 = vpop.f32.mrb[0].mxu0
    %v5785 = vadd.f32 %v5361, %v5784
    %5786 = vmatprep.mubr.bf16.mxu0 %v5285
    %5787 = vmatmul.mubr.bf16.gmra.mrb[0].mxu0 %v5284
    %v5788 = vpop.f32.mrb[0].mxu0
    %v5789 = vadd.f32 %v5357, %v5788
    %v5790 = vpop.f32.mrb[0].mxu0
    %v5791 = vadd.f32 %v5361, %v5790
    %v5792 = vpop.f32.mrb[0].mxu0
    %v5793 = vadd.f32 %v5357, %v5792
    %v5794 = vpop.f32.mrb[0].mxu0
    %v5795 = vadd.f32 %v5361, %v5794
    %5796 = vdwg.mxu0
    %5797 = vmatprep.subr.bf16.mxu0 %v5589
    %5798 = vmatpush1.bf16.msra.mxu0 %v5588
    %5799 = vmatprep.subr.bf16.mxu0 %v5591
    %5800 = vmatpush1.bf16.msra.mxu0 %v5590
    %5801 = vmatprep.subr.bf16.mxu0 %v5593
    %5802 = vmatpush1.bf16.msra.mxu0 %v5592
    %5803 = vmatprep.subr.bf16.mxu0 %v5595
    %5804 = vmatpush1.bf16.msra.mxu0 %v5594
    %5805 = vmatprep.subr.bf16.mxu0 %v5597
    %5806 = vmatpush1.bf16.msra.mxu0 %v5596
    %5807 = vmatprep.subr.bf16.mxu0 %v5599
    %5808 = vmatpush1.bf16.msra.mxu0 %v5598
    %5809 = vmatprep.subr.bf16.mxu0 %v5601
    %5810 = vmatpush1.bf16.msra.mxu0 %v5600
    %5811 = vmatprep.subr.bf16.mxu0 %v5603
    %5812 = vmatpush1.bf16.msra.mxu0 %v5602
    %5813 = vmatprep.subr.bf16.mxu0 %v5605
    %5814 = vmatpush1.bf16.msra.mxu0 %v5604
    %5815 = vmatprep.subr.bf16.mxu0 %v5607
    %5816 = vmatpush1.bf16.msra.mxu0 %v5606
    %5817 = vmatprep.subr.bf16.mxu0 %v5609
    %5818 = vmatpush1.bf16.msra.mxu0 %v5608
    %5819 = vmatprep.subr.bf16.mxu0 %v5611
    %5820 = vmatpush1.bf16.msra.mxu0 %v5610
    %5821 = vmatprep.subr.bf16.mxu0 %v5613
    %5822 = vmatpush1.bf16.msra.mxu0 %v5612
    %5823 = vmatprep.subr.bf16.mxu0 %v5615
    %5824 = vmatpush1.bf16.msra.mxu0 %v5614
    %5825 = vmatprep.subr.bf16.mxu0 %v5617
    %5826 = vmatpush1.bf16.msra.mxu0 %v5616
    %5827 = vmatprep.subr.bf16.mxu0 %v5619
    %5828 = vmatpush1.bf16.msra.mxu0 %v5618
    %5829 = vmatprep.mubr.bf16.mxu0 %v5259
    %5830 = vmatmul.mubr.bf16.gmra.mrb[0].mxu0 %v5258
    %v5831 = vpop.f32.mrb[0].mxu0
    %v5832 = vadd.f32 %v5719, %v5831
    %v5833 = vpop.f32.mrb[0].mxu0
    %v5834 = vadd.f32 %v5721, %v5833
    %v5835 = vpop.f32.mrb[0].mxu0
    %v5836 = vadd.f32 %v5723, %v5835
    %v5837 = vpop.f32.mrb[0].mxu0
    %v5838 = vadd.f32 %v5725, %v5837
    %5839 = vmatprep.mubr.bf16.mxu0 %v5263
    %5840 = vmatmul.mubr.bf16.gmra.mrb[0].mxu0 %v5262
    %v5841 = vpop.f32.mrb[0].mxu0
    %v5842 = vadd.f32 %v5729, %v5841
    %v5843 = vpop.f32.mrb[0].mxu0
    %v5844 = vadd.f32 %v5731, %v5843
    %v5845 = vpop.f32.mrb[0].mxu0
    %v5846 = vadd.f32 %v5733, %v5845
    %v5847 = vpop.f32.mrb[0].mxu0
    %v5848 = vadd.f32 %v5735, %v5847
    %5849 = vmatprep.mubr.bf16.mxu0 %v5267
    %5850 = vmatmul.mubr.bf16.gmra.mrb[0].mxu0 %v5266
    %v5851 = vpop.f32.mrb[0].mxu0
    %v5852 = vadd.f32 %v5739, %v5851
    %v5853 = vpop.f32.mrb[0].mxu0
    %v5854 = vadd.f32 %v5741, %v5853
    %v5855 = vpop.f32.mrb[0].mxu0
    %v5856 = vadd.f32 %v5743, %v5855
    %v5857 = vpop.f32.mrb[0].mxu0
    %v5858 = vadd.f32 %v5745, %v5857
    %5859 = vmatprep.mubr.bf16.mxu0 %v5271
    %5860 = vmatmul.mubr.bf16.gmra.mrb[0].mxu0 %v5270
    %v5861 = vpop.f32.mrb[0].mxu0
    %v5862 = vadd.f32 %v5749, %v5861
    %v5863 = vpop.f32.mrb[0].mxu0
    %v5864 = vadd.f32 %v5751, %v5863
    %v5865 = vpop.f32.mrb[0].mxu0
    %v5866 = vadd.f32 %v5753, %v5865
    %v5867 = vpop.f32.mrb[0].mxu0
    %v5868 = vadd.f32 %v5755, %v5867
    %5869 = vmatprep.mubr.bf16.mxu0 %v5275
    %5870 = vmatmul.mubr.bf16.gmra.mrb[0].mxu0 %v5274
    %v5871 = vpop.f32.mrb[0].mxu0
    %v5872 = vadd.f32 %v5759, %v5871
    %v5873 = vpop.f32.mrb[0].mxu0
    %v5874 = vadd.f32 %v5761, %v5873
    %v5875 = vpop.f32.mrb[0].mxu0
    %v5876 = vadd.f32 %v5763, %v5875
    %v5877 = vpop.f32.mrb[0].mxu0
    %v5878 = vadd.f32 %v5765, %v5877
    %5879 = vmatprep.mubr.bf16.mxu0 %v5279
    %5880 = vmatmul.mubr.bf16.gmra.mrb[0].mxu0 %v5278
    %v5881 = vpop.f32.mrb[0].mxu0
    %v5882 = vadd.f32 %v5769, %v5881
    %v5883 = vpop.f32.mrb[0].mxu0
    %v5884 = vadd.f32 %v5771, %v5883
    %v5885 = vpop.f32.mrb[0].mxu0
    %v5886 = vadd.f32 %v5773, %v5885
    %v5887 = vpop.f32.mrb[0].mxu0
    %v5888 = vadd.f32 %v5775, %v5887
    %5889 = vmatprep.mubr.bf16.mxu0 %v5283
    %5890 = vmatmul.mubr.bf16.gmra.mrb[0].mxu0 %v5282
    %v5891 = vpop.f32.mrb[0].mxu0
    %v5892 = vadd.f32 %v5779, %v5891
    %v5893 = vpop.f32.mrb[0].mxu0
    %v5894 = vadd.f32 %v5781, %v5893
    %v5895 = vpop.f32.mrb[0].mxu0
    %v5896 = vadd.f32 %v5783, %v5895
    %v5897 = vpop.f32.mrb[0].mxu0
    %v5898 = vadd.f32 %v5785, %v5897
    %5899 = vmatprep.mubr.bf16.mxu0 %v5287
    %5900 = vmatmul.mubr.bf16.gmra.mrb[0].mxu0 %v5286
    %v5901 = vpop.f32.mrb[0].mxu0
    %v5902 = vadd.f32 %v5789, %v5901
    %v5903 = vpop.f32.mrb[0].mxu0
    %v5904 = vadd.f32 %v5791, %v5903
    %v5905 = vpop.f32.mrb[0].mxu0
    %v5906 = vadd.f32 %v5793, %v5905
    %v5907 = vpop.f32.mrb[0].mxu0
    %v5908 = vadd.f32 %v5795, %v5907
    %5909 = vdwg.mxu0
    %v5910 = vmul.f32 %v5832, %v5832
    %v5911 = vmul.f32 %v5834, %v5834
    %v5912 = vmul.f32 %v5836, %v5836
    %v5913 = vmul.f32 %v5838, %v5838
    %v5914 = vmul.f32 %v5842, %v5842
    %v5915 = vmul.f32 %v5844, %v5844
    %v5916 = vmul.f32 %v5846, %v5846
    %v5917 = vmul.f32 %v5848, %v5848
    %v5918 = vmul.f32 %v5852, %v5852
    %v5919 = vmul.f32 %v5854, %v5854
    %v5920 = vmul.f32 %v5856, %v5856
    %v5921 = vmul.f32 %v5858, %v5858
    %v5922 = vmul.f32 %v5862, %v5862
    %v5923 = vmul.f32 %v5864, %v5864
    %v5924 = vmul.f32 %v5866, %v5866
    %v5925 = vmul.f32 %v5868, %v5868
    %v5926 = vmul.f32 %v5872, %v5872
    %v5927 = vmul.f32 %v5874, %v5874
    %v5928 = vmul.f32 %v5876, %v5876
    %v5929 = vmul.f32 %v5878, %v5878
    %v5930 = vmul.f32 %v5882, %v5882
    %v5931 = vmul.f32 %v5884, %v5884
    %v5932 = vmul.f32 %v5886, %v5886
    %v5933 = vmul.f32 %v5888, %v5888
    %v5934 = vmul.f32 %v5892, %v5892
    %v5935 = vmul.f32 %v5894, %v5894
    %v5936 = vmul.f32 %v5896, %v5896
    %v5937 = vmul.f32 %v5898, %v5898
    %v5938 = vmul.f32 %v5902, %v5902
    %v5939 = vmul.f32 %v5904, %v5904
    %v5940 = vmul.f32 %v5906, %v5906
    %v5941 = vmul.f32 %v5908, %v5908
    %v5942 = vmul.f32 %v5832, %v5910
    %v5943 = vmul.f32 %v5834, %v5911
    %v5944 = vmul.f32 %v5836, %v5912
    %v5945 = vmul.f32 %v5838, %v5913
    %v5946 = vmul.f32 %v5842, %v5914
    %v5947 = vmul.f32 %v5844, %v5915
    %v5948 = vmul.f32 %v5846, %v5916
    %v5949 = vmul.f32 %v5848, %v5917
    %v5950 = vmul.f32 %v5852, %v5918
    %v5951 = vmul.f32 %v5854, %v5919
    %v5952 = vmul.f32 %v5856, %v5920
    %v5953 = vmul.f32 %v5858, %v5921
    %v5954 = vmul.f32 %v5862, %v5922
    %v5955 = vmul.f32 %v5864, %v5923
    %v5956 = vmul.f32 %v5866, %v5924
    %v5957 = vmul.f32 %v5868, %v5925
    %v5958 = vmul.f32 %v5872, %v5926
    %v5959 = vmul.f32 %v5874, %v5927
    %v5960 = vmul.f32 %v5876, %v5928
    %v5961 = vmul.f32 %v5878, %v5929
    %v5962 = vmul.f32 %v5882, %v5930
    %v5963 = vmul.f32 %v5884, %v5931
    %v5964 = vmul.f32 %v5886, %v5932
    %v5965 = vmul.f32 %v5888, %v5933
    %v5966 = vmul.f32 %v5892, %v5934
    %v5967 = vmul.f32 %v5894, %v5935
    %v5968 = vmul.f32 %v5896, %v5936
    %v5969 = vmul.f32 %v5898, %v5937
    %v5970 = vmul.f32 %v5902, %v5938
    %v5971 = vmul.f32 %v5904, %v5939
    %v5972 = vmul.f32 %v5906, %v5940
    %v5973 = vmul.f32 %v5908, %v5941
    %v5974 = vmul.f32 %v5942, 0.044715
    %v5975 = vmul.f32 %v5943, 0.044715
    %v5976 = vmul.f32 %v5944, 0.044715
    %v5977 = vmul.f32 %v5945, 0.044715
    %v5978 = vmul.f32 %v5946, 0.044715
    %v5979 = vmul.f32 %v5947, 0.044715
    %v5980 = vmul.f32 %v5948, 0.044715
    %v5981 = vmul.f32 %v5949, 0.044715
    %v5982 = vmul.f32 %v5950, 0.044715
    %v5983 = vmul.f32 %v5951, 0.044715
    %v5984 = vmul.f32 %v5952, 0.044715
    %v5985 = vmul.f32 %v5953, 0.044715
    %v5986 = vmul.f32 %v5954, 0.044715
    %v5987 = vmul.f32 %v5955, 0.044715
    %v5988 = vmul.f32 %v5956, 0.044715
    %v5989 = vmul.f32 %v5957, 0.044715
    %v5990 = vmul.f32 %v5958, 0.044715
    %v5991 = vmul.f32 %v5959, 0.044715
    %v5992 = vmul.f32 %v5960, 0.044715
    %v5993 = vmul.f32 %v5961, 0.044715
    %v5994 = vmul.f32 %v5962, 0.044715
    %v5995 = vmul.f32 %v5963, 0.044715
    %v5996 = vmul.f32 %v5964, 0.044715
    %v5997 = vmul.f32 %v5965, 0.044715
    %v5998 = vmul.f32 %v5966, 0.044715
    %v5999 = vmul.f32 %v5967, 0.044715
    %v6000 = vmul.f32 %v5968, 0.044715
    %v6001 = vmul.f32 %v5969, 0.044715
    %v6002 = vmul.f32 %v5970, 0.044715
    %v6003 = vmul.f32 %v5971, 0.044715
    %v6004 = vmul.f32 %v5972, 0.044715
    %v6005 = vmul.f32 %v5973, 0.044715
    %v6006 = vadd.f32 %v5832, %v5974
    %v6007 = vadd.f32 %v5834, %v5975
    %v6008 = vadd.f32 %v5836, %v5976
    %v6009 = vadd.f32 %v5838, %v5977
    %v6010 = vadd.f32 %v5842, %v5978
    %v6011 = vadd.f32 %v5844, %v5979
    %v6012 = vadd.f32 %v5846, %v5980
    %v6013 = vadd.f32 %v5848, %v5981
    %v6014 = vadd.f32 %v5852, %v5982
    %v6015 = vadd.f32 %v5854, %v5983
    %v6016 = vadd.f32 %v5856, %v5984
    %v6017 = vadd.f32 %v5858, %v5985
    %v6018 = vadd.f32 %v5862, %v5986
    %v6019 = vadd.f32 %v5864, %v5987
    %v6020 = vadd.f32 %v5866, %v5988
    %v6021 = vadd.f32 %v5868, %v5989
    %v6022 = vadd.f32 %v5872, %v5990
    %v6023 = vadd.f32 %v5874, %v5991
    %v6024 = vadd.f32 %v5876, %v5992
    %v6025 = vadd.f32 %v5878, %v5993
    %v6026 = vadd.f32 %v5882, %v5994
    %v6027 = vadd.f32 %v5884, %v5995
    %v6028 = vadd.f32 %v5886, %v5996
    %v6029 = vadd.f32 %v5888, %v5997
    %v6030 = vadd.f32 %v5892, %v5998
    %v6031 = vadd.f32 %v5894, %v5999
    %v6032 = vadd.f32 %v5896, %v6000
    %v6033 = vadd.f32 %v5898, %v6001
    %v6034 = vadd.f32 %v5902, %v6002
    %v6035 = vadd.f32 %v5904, %v6003
    %v6036 = vadd.f32 %v5906, %v6004
    %v6037 = vadd.f32 %v5908, %v6005
    %v6038 = vmul.f32 %v6006, 0.7978846
    %v6039 = vmul.f32 %v6007, 0.7978846
    %v6040 = vmul.f32 %v6008, 0.7978846
    %v6041 = vmul.f32 %v6009, 0.7978846
    %v6042 = vmul.f32 %v6010, 0.7978846
    %v6043 = vmul.f32 %v6011, 0.7978846
    %v6044 = vmul.f32 %v6012, 0.7978846
    %v6045 = vmul.f32 %v6013, 0.7978846
    %v6046 = vmul.f32 %v6014, 0.7978846
    %v6047 = vmul.f32 %v6015, 0.7978846
    %v6048 = vmul.f32 %v6016, 0.7978846
    %v6049 = vmul.f32 %v6017, 0.7978846
    %v6050 = vmul.f32 %v6018, 0.7978846
    %v6051 = vmul.f32 %v6019, 0.7978846
    %v6052 = vmul.f32 %v6020, 0.7978846
    %v6053 = vmul.f32 %v6021, 0.7978846
    %v6054 = vmul.f32 %v6022, 0.7978846
    %v6055 = vmul.f32 %v6023, 0.7978846
    %v6056 = vmul.f32 %v6024, 0.7978846
    %v6057 = vmul.f32 %v6025, 0.7978846
    %v6058 = vmul.f32 %v6026, 0.7978846
    %v6059 = vmul.f32 %v6027, 0.7978846
    %v6060 = vmul.f32 %v6028, 0.7978846
    %v6061 = vmul.f32 %v6029, 0.7978846
    %v6062 = vmul.f32 %v6030, 0.7978846
    %v6063 = vmul.f32 %v6031, 0.7978846
    %v6064 = vmul.f32 %v6032, 0.7978846
    %v6065 = vmul.f32 %v6033, 0.7978846
    %v6066 = vmul.f32 %v6034, 0.7978846
    %v6067 = vmul.f32 %v6035, 0.7978846
    %v6068 = vmul.f32 %v6036, 0.7978846
    %v6069 = vmul.f32 %v6037, 0.7978846
    %v6070 = vtanh.pop %v6038
    %v6071 = vtanh.pop %v6039
    %v6072 = vtanh.pop %v6040
    %v6073 = vtanh.pop %v6041
    %v6074 = vtanh.pop %v6042
    %v6075 = vtanh.pop %v6043
    %v6076 = vtanh.pop %v6044
    %v6077 = vtanh.pop %v6045
    %v6078 = vtanh.pop %v6046
    %v6079 = vtanh.pop %v6047
    %v6080 = vtanh.pop %v6048
    %v6081 = vtanh.pop %v6049
    %v6082 = vtanh.pop %v6050
    %v6083 = vtanh.pop %v6051
    %v6084 = vtanh.pop %v6052
    %v6085 = vtanh.pop %v6053
    %v6086 = vtanh.pop %v6054
    %v6087 = vtanh.pop %v6055
    %v6088 = vtanh.pop %v6056
    %v6089 = vtanh.pop %v6057
    %v6090 = vtanh.pop %v6058
    %v6091 = vtanh.pop %v6059
    %v6092 = vtanh.pop %v6060
    %v6093 = vtanh.pop %v6061
    %v6094 = vtanh.pop %v6062
    %v6095 = vtanh.pop %v6063
    %v6096 = vtanh.pop %v6064
    %v6097 = vtanh.pop %v6065
    %v6098 = vtanh.pop %v6066
    %v6099 = vtanh.pop %v6067
    %v6100 = vtanh.pop %v6068
    %v6101 = vtanh.pop %v6069
    %v6102 = vadd.f32 %v6070, 1.0
    %v6103 = vadd.f32 %v6071, 1.0
    %v6104 = vadd.f32 %v6072, 1.0
    %v6105 = vadd.f32 %v6073, 1.0
    %v6106 = vadd.f32 %v6074, 1.0
    %v6107 = vadd.f32 %v6075, 1.0
    %v6108 = vadd.f32 %v6076, 1.0
    %v6109 = vadd.f32 %v6077, 1.0
    %v6110 = vadd.f32 %v6078, 1.0
    %v6111 = vadd.f32 %v6079, 1.0
    %v6112 = vadd.f32 %v6080, 1.0
    %v6113 = vadd.f32 %v6081, 1.0
    %v6114 = vadd.f32 %v6082, 1.0
    %v6115 = vadd.f32 %v6083, 1.0
    %v6116 = vadd.f32 %v6084, 1.0
    %v6117 = vadd.f32 %v6085, 1.0
    %v6118 = vadd.f32 %v6086, 1.0
    %v6119 = vadd.f32 %v6087, 1.0
    %v6120 = vadd.f32 %v6088, 1.0
    %v6121 = vadd.f32 %v6089, 1.0
    %v6122 = vadd.f32 %v6090, 1.0
    %v6123 = vadd.f32 %v6091, 1.0
    %v6124 = vadd.f32 %v6092, 1.0
    %v6125 = vadd.f32 %v6093, 1.0
    %v6126 = vadd.f32 %v6094, 1.0
    %v6127 = vadd.f32 %v6095, 1.0
    %v6128 = vadd.f32 %v6096, 1.0
    %v6129 = vadd.f32 %v6097, 1.0
    %v6130 = vadd.f32 %v6098, 1.0
    %v6131 = vadd.f32 %v6099, 1.0
    %v6132 = vadd.f32 %v6100, 1.0
    %v6133 = vadd.f32 %v6101, 1.0
    %v6134 = vmul.f32 %v6102, 0.5
    %v6135 = vmul.f32 %v6103, 0.5
    %v6136 = vmul.f32 %v6104, 0.5
    %v6137 = vmul.f32 %v6105, 0.5
    %v6138 = vmul.f32 %v6106, 0.5
    %v6139 = vmul.f32 %v6107, 0.5
    %v6140 = vmul.f32 %v6108, 0.5
    %v6141 = vmul.f32 %v6109, 0.5
    %v6142 = vmul.f32 %v6110, 0.5
    %v6143 = vmul.f32 %v6111, 0.5
    %v6144 = vmul.f32 %v6112, 0.5
    %v6145 = vmul.f32 %v6113, 0.5
    %v6146 = vmul.f32 %v6114, 0.5
    %v6147 = vmul.f32 %v6115, 0.5
    %v6148 = vmul.f32 %v6116, 0.5
    %v6149 = vmul.f32 %v6117, 0.5
    %v6150 = vmul.f32 %v6118, 0.5
    %v6151 = vmul.f32 %v6119, 0.5
    %v6152 = vmul.f32 %v6120, 0.5
    %v6153 = vmul.f32 %v6121, 0.5
    %v6154 = vmul.f32 %v6122, 0.5
    %v6155 = vmul.f32 %v6123, 0.5
    %v6156 = vmul.f32 %v6124, 0.5
    %v6157 = vmul.f32 %v6125, 0.5
    %v6158 = vmul.f32 %v6126, 0.5
    %v6159 = vmul.f32 %v6127, 0.5
    %v6160 = vmul.f32 %v6128, 0.5
    %v6161 = vmul.f32 %v6129, 0.5
    %v6162 = vmul.f32 %v6130, 0.5
    %v6163 = vmul.f32 %v6131, 0.5
    %v6164 = vmul.f32 %v6132, 0.5
    %v6165 = vmul.f32 %v6133, 0.5
    %v6166 = vmul.f32 %v5832, %v6134
    %v6167 = vmul.f32 %v5834, %v6135
    %v6168 = vmul.f32 %v5836, %v6136
    %v6169 = vmul.f32 %v5838, %v6137
    %v6170 = vmul.f32 %v5842, %v6138
    %v6171 = vmul.f32 %v5844, %v6139
    %v6172 = vmul.f32 %v5846, %v6140
    %v6173 = vmul.f32 %v5848, %v6141
    %v6174 = vmul.f32 %v5852, %v6142
    %v6175 = vmul.f32 %v5854, %v6143
    %v6176 = vmul.f32 %v5856, %v6144
    %v6177 = vmul.f32 %v5858, %v6145
    %v6178 = vmul.f32 %v5862, %v6146
    %v6179 = vmul.f32 %v5864, %v6147
    %v6180 = vmul.f32 %v5866, %v6148
    %v6181 = vmul.f32 %v5868, %v6149
    %v6182 = vmul.f32 %v5872, %v6150
    %v6183 = vmul.f32 %v5874, %v6151
    %v6184 = vmul.f32 %v5876, %v6152
    %v6185 = vmul.f32 %v5878, %v6153
    %v6186 = vmul.f32 %v5882, %v6154
    %v6187 = vmul.f32 %v5884, %v6155
    %v6188 = vmul.f32 %v5886, %v6156
    %v6189 = vmul.f32 %v5888, %v6157
    %v6190 = vmul.f32 %v5892, %v6158
    %v6191 = vmul.f32 %v5894, %v6159
    %v6192 = vmul.f32 %v5896, %v6160
    %v6193 = vmul.f32 %v5898, %v6161
    %v6194 = vmul.f32 %v5902, %v6162
    %v6195 = vmul.f32 %v5904, %v6163
    %v6196 = vmul.f32 %v5906, %v6164
    %v6197 = vmul.f32 %v5908, %v6165
    %v6198 = vld [vmem:[%s7] sm:$0x3]
    %v6200 = vlaneseq
    %v6201 = vshrl.u32 %v6200, 7
    %v6202 = vsub.s32 0, %v6201
    %v6203 = vrot.slane %v6198, %v6202
    %v6204 = vlaneseq
    %v6205 = vshrl.u32 %v6204, 7
    %v6206 = vsub.s32 1, %v6205
    %v6207 = vrot.slane %v6198, %v6206
    %v6210 = vmul.f32 %v6166, %v6203
    %v6211 = vmul.f32 %v6167, %v6207
    %v6212 = vmul.f32 %v6168, %v6203
    %v6213 = vmul.f32 %v6169, %v6207
    %v6214 = vmul.f32 %v6170, %v6203
    %v6215 = vmul.f32 %v6171, %v6207
    %v6216 = vmul.f32 %v6172, %v6203
    %v6217 = vmul.f32 %v6173, %v6207
    %v6218 = vmul.f32 %v6174, %v6203
    %v6219 = vmul.f32 %v6175, %v6207
    %v6220 = vmul.f32 %v6176, %v6203
    %v6221 = vmul.f32 %v6177, %v6207
    %v6222 = vmul.f32 %v6178, %v6203
    %v6223 = vmul.f32 %v6179, %v6207
    %v6224 = vmul.f32 %v6180, %v6203
    %v6225 = vmul.f32 %v6181, %v6207
    %v6226 = vmul.f32 %v6182, %v6203
    %v6227 = vmul.f32 %v6183, %v6207
    %v6228 = vmul.f32 %v6184, %v6203
    %v6229 = vmul.f32 %v6185, %v6207
    %v6230 = vmul.f32 %v6186, %v6203
    %v6231 = vmul.f32 %v6187, %v6207
    %v6232 = vmul.f32 %v6188, %v6203
    %v6233 = vmul.f32 %v6189, %v6207
    %v6234 = vmul.f32 %v6190, %v6203
    %v6235 = vmul.f32 %v6191, %v6207
    %v6236 = vmul.f32 %v6192, %v6203
    %v6237 = vmul.f32 %v6193, %v6207
    %v6238 = vmul.f32 %v6194, %v6203
    %v6239 = vmul.f32 %v6195, %v6207
    %v6240 = vmul.f32 %v6196, %v6203
    %v6241 = vmul.f32 %v6197, %v6207
    %v6242 = vadd.f32 %v6210, %v6211
    %6243 = vadd.xlane.f32.xlu0 %v6242
    %v6244 = vpop.xlane.xlu0 %6243
    %v6245 = vadd.f32 %v6212, %v6213
    %6246 = vadd.xlane.f32.xlu0 %v6245
    %v6247 = vpop.xlane.xlu0 %6246
    %v6248 = vadd.f32 %v6214, %v6215
    %6249 = vadd.xlane.f32.xlu0 %v6248
    %v6250 = vpop.xlane.xlu0 %6249
    %v6251 = vadd.f32 %v6216, %v6217
    %6252 = vadd.xlane.f32.xlu0 %v6251
    %v6253 = vpop.xlane.xlu0 %6252
    %v6254 = vadd.f32 %v6218, %v6219
    %6255 = vadd.xlane.f32.xlu0 %v6254
    %v6256 = vpop.xlane.xlu0 %6255
    %v6257 = vadd.f32 %v6220, %v6221
    %6258 = vadd.xlane.f32.xlu0 %v6257
    %v6259 = vpop.xlane.xlu0 %6258
    %v6260 = vadd.f32 %v6222, %v6223
    %6261 = vadd.xlane.f32.xlu0 %v6260
    %v6262 = vpop.xlane.xlu0 %6261
    %v6263 = vadd.f32 %v6224, %v6225
    %6264 = vadd.xlane.f32.xlu0 %v6263
    %v6265 = vpop.xlane.xlu0 %6264
    %v6266 = vadd.f32 %v6226, %v6227
    %6267 = vadd.xlane.f32.xlu0 %v6266
    %v6268 = vpop.xlane.xlu0 %6267
    %v6269 = vadd.f32 %v6228, %v6229
    %6270 = vadd.xlane.f32.xlu0 %v6269
    %v6271 = vpop.xlane.xlu0 %6270
    %v6272 = vadd.f32 %v6230, %v6231
    %6273 = vadd.xlane.f32.xlu0 %v6272
    %v6274 = vpop.xlane.xlu0 %6273
    %v6275 = vadd.f32 %v6232, %v6233
    %6276 = vadd.xlane.f32.xlu0 %v6275
    %v6277 = vpop.xlane.xlu0 %6276
    %v6278 = vadd.f32 %v6234, %v6235
    %6279 = vadd.xlane.f32.xlu0 %v6278
    %v6280 = vpop.xlane.xlu0 %6279
    %v6281 = vadd.f32 %v6236, %v6237
    %6282 = vadd.xlane.f32.xlu0 %v6281
    %v6283 = vpop.xlane.xlu0 %6282
    %v6284 = vadd.f32 %v6238, %v6239
    %6285 = vadd.xlane.f32.xlu0 %v6284
    %v6286 = vpop.xlane.xlu0 %6285
    %v6287 = vadd.f32 %v6240, %v6241
    %6288 = vadd.xlane.f32.xlu0 %v6287
    %v6289 = vpop.xlane.xlu0 %6288
    %v6290 = vld [vmem:[%s8] sm:$0x1]
    %v6292 = vlaneseq
    %v6293 = vshrl.u32 %v6292, 7
    %v6294 = vsub.s32 0, %v6293
    %v6295 = vrot.slane %v6290, %v6294
    %v6297 = vmul.f32 %v100, %v6295
    %v6298 = vmul.f32 %v101, %v6295
    %v6299 = vmul.f32 %v102, %v6295
    %v6300 = vmul.f32 %v103, %v6295
    %v6301 = vmul.f32 %v104, %v6295
    %v6302 = vmul.f32 %v105, %v6295
    %v6303 = vmul.f32 %v106, %v6295
    %v6304 = vmul.f32 %v107, %v6295
    %v6305 = vmul.f32 %v108, %v6295
    %v6306 = vmul.f32 %v109, %v6295
    %v6307 = vmul.f32 %v110, %v6295
    %v6308 = vmul.f32 %v111, %v6295
    %v6309 = vmul.f32 %v112, %v6295
    %v6310 = vmul.f32 %v113, %v6295
    %v6311 = vmul.f32 %v114, %v6295
    %v6312 = vmul.f32 %v115, %v6295
    %6313 = vadd.xlane.f32.xlu0 %v6297
    %v6314 = vpop.xlane.xlu0 %6313
    %6315 = vadd.xlane.f32.xlu0 %v6298
    %v6316 = vpop.xlane.xlu0 %6315
    %6317 = vadd.xlane.f32.xlu0 %v6299
    %v6318 = vpop.xlane.xlu0 %6317
    %6319 = vadd.xlane.f32.xlu0 %v6300
    %v6320 = vpop.xlane.xlu0 %6319
    %6321 = vadd.xlane.f32.xlu0 %v6301
    %v6322 = vpop.xlane.xlu0 %6321
    %6323 = vadd.xlane.f32.xlu0 %v6302
    %v6324 = vpop.xlane.xlu0 %6323
    %6325 = vadd.xlane.f32.xlu0 %v6303
    %v6326 = vpop.xlane.xlu0 %6325
    %6327 = vadd.xlane.f32.xlu0 %v6304
    %v6328 = vpop.xlane.xlu0 %6327
    %6329 = vadd.xlane.f32.xlu0 %v6305
    %v6330 = vpop.xlane.xlu0 %6329
    %6331 = vadd.xlane.f32.xlu0 %v6306
    %v6332 = vpop.xlane.xlu0 %6331
    %6333 = vadd.xlane.f32.xlu0 %v6307
    %v6334 = vpop.xlane.xlu0 %6333
    %6335 = vadd.xlane.f32.xlu0 %v6308
    %v6336 = vpop.xlane.xlu0 %6335
    %6337 = vadd.xlane.f32.xlu0 %v6309
    %v6338 = vpop.xlane.xlu0 %6337
    %6339 = vadd.xlane.f32.xlu0 %v6310
    %v6340 = vpop.xlane.xlu0 %6339
    %6341 = vadd.xlane.f32.xlu0 %v6311
    %v6342 = vpop.xlane.xlu0 %6341
    %6343 = vadd.xlane.f32.xlu0 %v6312
    %v6344 = vpop.xlane.xlu0 %6343
    %v6345 = vadd.f32 %v6244, %v6314
    %v6346 = vadd.f32 %v6247, %v6316
    %v6347 = vadd.f32 %v6250, %v6318
    %v6348 = vadd.f32 %v6253, %v6320
    %v6349 = vadd.f32 %v6256, %v6322
    %v6350 = vadd.f32 %v6259, %v6324
    %v6351 = vadd.f32 %v6262, %v6326
    %v6352 = vadd.f32 %v6265, %v6328
    %v6353 = vadd.f32 %v6268, %v6330
    %v6354 = vadd.f32 %v6271, %v6332
    %v6355 = vadd.f32 %v6274, %v6334
    %v6356 = vadd.f32 %v6277, %v6336
    %v6357 = vadd.f32 %v6280, %v6338
    %v6358 = vadd.f32 %v6283, %v6340
    %v6359 = vadd.f32 %v6286, %v6342
    %v6360 = vadd.f32 %v6289, %v6344
    %v6377 = vlaneseq
    %v6378 = vand.u32 %v6377, 127
    %v6379 = vlaneseq
    %v6380 = vshrl.u32 %v6379, 7
    %v6381 = vsub.s32 %v6378, %v6380
    %v6382 = vrot.slane %v6345, %v6381
    %v6383 = vadd.s32 %v6378, 4294967288
    %v6384 = vlaneseq
    %v6385 = vshrl.u32 %v6384, 7
    %v6386 = vsub.s32 %v6383, %v6385
    %v6387 = vrot.slane %v6346, %v6386
    %vm6388 = vcmask 130112
    %v6389 = vsel %vm6388, %v6387, %v6382
    %v6390 = vadd.s32 %v6378, 4294967280
    %v6391 = vlaneseq
    %v6392 = vshrl.u32 %v6391, 7
    %v6393 = vsub.s32 %v6390, %v6392
    %v6394 = vrot.slane %v6347, %v6393
    %vm6395 = vcmask 195712
    %v6396 = vsel %vm6395, %v6394, %v6389
    %v6397 = vadd.s32 %v6378, 4294967272
    %v6398 = vlaneseq
    %v6399 = vshrl.u32 %v6398, 7
    %v6400 = vsub.s32 %v6397, %v6399
    %v6401 = vrot.slane %v6348, %v6400
    %vm6402 = vcmask 261312
    %v6403 = vsel %vm6402, %v6401, %v6396
    %v6404 = vadd.s32 %v6378, 4294967264
    %v6405 = vlaneseq
    %v6406 = vshrl.u32 %v6405, 7
    %v6407 = vsub.s32 %v6404, %v6406
    %v6408 = vrot.slane %v6349, %v6407
    %vm6409 = vcmask 326912
    %v6410 = vsel %vm6409, %v6408, %v6403
    %v6411 = vadd.s32 %v6378, 4294967256
    %v6412 = vlaneseq
    %v6413 = vshrl.u32 %v6412, 7
    %v6414 = vsub.s32 %v6411, %v6413
    %v6415 = vrot.slane %v6350, %v6414
    %vm6416 = vcmask 392512
    %v6417 = vsel %vm6416, %v6415, %v6410
    %v6418 = vadd.s32 %v6378, 4294967248
    %v6419 = vlaneseq
    %v6420 = vshrl.u32 %v6419, 7
    %v6421 = vsub.s32 %v6418, %v6420
    %v6422 = vrot.slane %v6351, %v6421
    %vm6423 = vcmask 458112
    %v6424 = vsel %vm6423, %v6422, %v6417
    %v6425 = vadd.s32 %v6378, 4294967240
    %v6426 = vlaneseq
    %v6427 = vshrl.u32 %v6426, 7
    %v6428 = vsub.s32 %v6425, %v6427
    %v6429 = vrot.slane %v6352, %v6428
    %vm6430 = vcmask 523712
    %v6431 = vsel %vm6430, %v6429, %v6424
    %v6432 = vadd.s32 %v6378, 4294967232
    %v6433 = vlaneseq
    %v6434 = vshrl.u32 %v6433, 7
    %v6435 = vsub.s32 %v6432, %v6434
    %v6436 = vrot.slane %v6353, %v6435
    %vm6437 = vcmask 589312
    %v6438 = vsel %vm6437, %v6436, %v6431
    %v6439 = vadd.s32 %v6378, 4294967224
    %v6440 = vlaneseq
    %v6441 = vshrl.u32 %v6440, 7
    %v6442 = vsub.s32 %v6439, %v6441
    %v6443 = vrot.slane %v6354, %v6442
    %vm6444 = vcmask 654912
    %v6445 = vsel %vm6444, %v6443, %v6438
    %v6446 = vadd.s32 %v6378, 4294967216
    %v6447 = vlaneseq
    %v6448 = vshrl.u32 %v6447, 7
    %v6449 = vsub.s32 %v6446, %v6448
    %v6450 = vrot.slane %v6355, %v6449
    %vm6451 = vcmask 720512
    %v6452 = vsel %vm6451, %v6450, %v6445
    %v6453 = vadd.s32 %v6378, 4294967208
    %v6454 = vlaneseq
    %v6455 = vshrl.u32 %v6454, 7
    %v6456 = vsub.s32 %v6453, %v6455
    %v6457 = vrot.slane %v6356, %v6456
    %vm6458 = vcmask 786112
    %v6459 = vsel %vm6458, %v6457, %v6452
    %v6460 = vadd.s32 %v6378, 4294967200
    %v6461 = vlaneseq
    %v6462 = vshrl.u32 %v6461, 7
    %v6463 = vsub.s32 %v6460, %v6462
    %v6464 = vrot.slane %v6357, %v6463
    %vm6465 = vcmask 851712
    %v6466 = vsel %vm6465, %v6464, %v6459
    %v6467 = vadd.s32 %v6378, 4294967192
    %v6468 = vlaneseq
    %v6469 = vshrl.u32 %v6468, 7
    %v6470 = vsub.s32 %v6467, %v6469
    %v6471 = vrot.slane %v6358, %v6470
    %vm6472 = vcmask 917312
    %v6473 = vsel %vm6472, %v6471, %v6466
    %v6474 = vadd.s32 %v6378, 4294967184
    %v6475 = vlaneseq
    %v6476 = vshrl.u32 %v6475, 7
    %v6477 = vsub.s32 %v6474, %v6476
    %v6478 = vrot.slane %v6359, %v6477
    %vm6479 = vcmask 982912
    %v6480 = vsel %vm6479, %v6478, %v6473
    %v6481 = vadd.s32 %v6378, 4294967176
    %v6482 = vlaneseq
    %v6483 = vshrl.u32 %v6482, 7
    %v6484 = vsub.s32 %v6481, %v6483
    %v6485 = vrot.slane %v6360, %v6484
    %vm6486 = vcmask 1048512
    %v6487 = vsel %vm6486, %v6485, %v6480
    %6489 = vst [vmem:[#allocation11] sm:$0x1] %v6487
    // Predicated region
    $region58: #{tpu_custom_call.1} parent=1 // pred_check
      _
    $region59: #{tpu_custom_call.1} parent=1 // pred_check_branch
      %6491 = sbr.rel (0) target = $region61
    $region60: #{tpu_custom_call.1} parent=1 // pred_region
      %s6493 = ssub.s32 16, 16
      %6494 = vsyncadd [#allocation4], %s6493
      %s6496 = sshll.u32 [#allocation11], 4
      %s6497 = int_to_ptr.vmem [resolvable:$true] %s6496
      %6499 = dma.vmem_to_hbm [thread:$0]  %s6497, 16, %s9, [#allocation4]
    $region61: #{tpu_custom_call.1} parent=1 // pred_fallthru
      _
    // Predicated region
    $region62: #{tpu_custom_call.1} parent=1 // pred_check
      _
    $region63: #{tpu_custom_call.1} parent=1 // pred_check_branch
      %6501 = sbr.rel (0) target = $region65
    $region64: #{tpu_custom_call.1} parent=1 // pred_region
      %6502 = dma.done [#allocation4], 16
    $region65: #{tpu_custom_call.1} parent=1 // pred_fallthru
      _
    %6503 = vsyncpa [#allocation3], 1
    %6504 = vsyncpa [#allocation6], 1
    %6505 = vsyncpa [#allocation9], 1
    %6506 = vsyncpa [#allocation4], 1

</llo_original>
